<compile_context>
chip_gen: v5e
topology: v5e:2x2
jax: 0.10.0
libtpu: 0.0.40
codegen_flags: <defaults>
</compile_context>

<pallas_src>
import functools
import numpy as np
import jax
import jax.numpy as jnp
from jax.experimental import pallas as pl
from jax.experimental.pallas import tpu as pltpu

EPS = 1e-6  # Norm default eps


# ----------------------------------------------------------------------------
# Shared forward math (used by the kernel and the pure-JAX reference).
# ----------------------------------------------------------------------------
def _qnorm_affine(v, alpha_full, bias_full, eps=EPS):
    """Norm: quaternion-magnitude normalise + affine (alpha/bias pre-tiled to C)."""
    c4 = v.shape[-1] // 4
    r = v[:, 0 * c4:1 * c4]
    i = v[:, 1 * c4:2 * c4]
    j = v[:, 2 * c4:3 * c4]
    k = v[:, 3 * c4:4 * c4]
    inv = jax.lax.rsqrt(r * r + i * i + j * j + k * k + eps)   # one EUP op
    inv4 = jnp.concatenate([inv, inv, inv, inv], axis=-1)
    return v * inv4 * alpha_full + bias_full


def _softmax_lastdim(s, approx_recip):
    m = jnp.max(s, axis=-1, keepdims=True)
    e = jnp.exp(s - m)
    den = jnp.sum(e, axis=-1, keepdims=True)
    if approx_recip:
        return e * pl.reciprocal(den, approx=True)   # EUP, off the VPU divide path
    return e / den


def _gelu(x):
    # TODO(synk): PyTorch F.gelu defaults to the exact erf-GELU; the tanh
    # approximation is used (max abs deviation ~3e-4) to guarantee Mosaic
    # lowering of the transcendental.
    return 0.5 * x * (1.0 + jnp.tanh(0.7978845608028654 *
                                     (x + 0.044715 * x * x * x)))


def _dot_nt(a, b, out_dtype=jnp.float32):
    """a (m, d) @ b(n, d)^T without materialising a transpose."""
    return jax.lax.dot_general(a, b, (((1,), (1,)), ((), ())),
                               preferred_element_type=out_dtype)


def _block_math(x_full, x_tile, alpha1, beta1, w_qkv_exp, w_proj, b_proj,
                alpha2, beta2, w1, bb1, w2, bb2, *, num_heads, compute_dtype,
                approx_recip):
    """Block.forward for the query rows `x_tile`; K/V come from `x_full`.

    w_qkv_exp is the expanded (C, 9C) weight: [Wq*scale | 4 sign-permuted K
    variants | 4 sign-permuted V variants] so the quaternion Hamilton product
    becomes 4 full-depth matmuls per side per head.
    """
    N, C = x_full.shape
    tq = x_tile.shape[0]
    hd = C // num_heads
    cd = compute_dtype
    f32 = jnp.float32

    # ---------------- x = x + attn(norm1(x)) ----------------
    xn_full = _qnorm_affine(x_full, alpha1, beta1).astype(cd)
    xn_tile = _qnorm_affine(x_tile, alpha1, beta1).astype(cd)

    q_all = jnp.dot(xn_tile, w_qkv_exp[:, :C].astype(cd),
                    preferred_element_type=f32)                 # (tq, C), scaled
    kv = jnp.dot(xn_full, w_qkv_exp[:, C:].astype(cd),
                 preferred_element_type=f32)                    # (N, 8C)

    attn = jnp.zeros((tq, C), f32)
    for h in range(num_heads):
        lo = h * hd
        qh = q_all[:, lo:lo + hd].astype(cd)                    # [qr qx qy qz]
        oh = jnp.zeros((tq, hd), f32)
        for c in range(4):   # quaternion components r, i, j, k
            kc = kv[:, c * C + lo: c * C + lo + hd].astype(cd)              # (N, hd)
            vc = kv[:, 4 * C + c * C + lo: 4 * C + c * C + lo + hd].astype(cd)
            s = _dot_nt(qh, kc)                                             # (tq, N)
            a = _softmax_lastdim(s, approx_recip)    # per-component softmax
            oh = oh + jnp.dot(a.astype(cd), vc, preferred_element_type=f32)
        # Accumulate the output projection per head (no lane concat needed).
        attn = attn + jnp.dot(oh.astype(cd), w_proj[lo:lo + hd, :].astype(cd),
                              preferred_element_type=f32)
    x1 = x_tile + attn + b_proj

    # ---------------- x = x + mlp(norm2(x)) ----------------
    xn2 = _qnorm_affine(x1, alpha2, beta2).astype(cd)
    h1 = jnp.dot(xn2, w1.astype(cd), preferred_element_type=f32) + bb1
    h1 = _gelu(h1)   # ComponentActivation(gelu) == elementwise gelu
    h2 = jnp.dot(h1.astype(cd), w2.astype(cd), preferred_element_type=f32) + bb2
    return x1 + h2


# ----------------------------------------------------------------------------
# Wrapper-side weight preparation (fold Hamilton product + scale into weights).
# ----------------------------------------------------------------------------
_K_PERM = (((0, 1.0), (1, -1.0), (2, -1.0), (3, -1.0)),
           ((1, 1.0), (0, 1.0), (3, 1.0), (2, -1.0)),
           ((2, 1.0), (3, -1.0), (0, 1.0), (1, 1.0)),
           ((3, 1.0), (2, 1.0), (1, -1.0), (0, 1.0)))
_V_PERM = (((0, 1.0), (1, 1.0), (2, 1.0), (3, 1.0)),
           ((1, -1.0), (0, 1.0), (3, -1.0), (2, 1.0)),
           ((2, -1.0), (3, 1.0), (0, 1.0), (1, -1.0)),
           ((3, -1.0), (2, -1.0), (1, 1.0), (0, 1.0)))


def prepare_block_params(params, *, num_heads, compute_dtype=jnp.bfloat16):
    a1, b1, w_qkv, w_proj, b_proj, a2, b2, w1, bb1, w2, bb2 = params
    C = w_qkv.shape[0]
    hd = C // num_heads
    hq = hd // 4
    assert C % num_heads == 0 and hd % 4 == 0
    scale = hd ** (-0.5)

    def tile4(p):                           # (1, C//4) -> (1, C)
        return jnp.concatenate([p] * 4, axis=-1).astype(jnp.float32)

    def stack_variants(w, perms):           # (C, C) -> (C, 4C), variant-major
        wc = w.reshape(C, num_heads, 4, hq)
        variants = []
        for perm in perms:
            cols = jnp.concatenate([sgn * wc[:, :, src, :] for src, sgn in perm],
                                   axis=-1)                   # (C, H, hd)
            variants.append(cols.reshape(C, C))
        return jnp.concatenate(variants, axis=-1)

    w_q = w_qkv[:, :C] * scale                      # fold 1/sqrt(hd) into W_q
    w_k4 = stack_variants(w_qkv[:, C:2 * C], _K_PERM)
    w_v4 = stack_variants(w_qkv[:, 2 * C:], _V_PERM)
    w_qkv_exp = jnp.concatenate([w_q, w_k4, w_v4], axis=-1)   # (C, 9C)

    cd = compute_dtype
    return (tile4(a1), tile4(b1), w_qkv_exp.astype(cd), w_proj.astype(cd),
            b_proj.astype(jnp.float32), tile4(a2), tile4(b2), w1.astype(cd),
            bb1.astype(jnp.float32), w2.astype(cd), bb2.astype(jnp.float32))


# ----------------------------------------------------------------------------
# Pallas kernel: one grid step = one (batch element, query tile).
# ----------------------------------------------------------------------------
def _block_kernel(xf_ref, xt_ref, a1_ref, b1_ref, wqkv_ref, wproj_ref,
                  bproj_ref, a2_ref, b2_ref, w1_ref, bb1_ref, w2_ref, bb2_ref,
                  o_ref, *, num_heads, compute_dtype):
    out = _block_math(
        xf_ref[0], xt_ref[0],
        a1_ref[...], b1_ref[...], wqkv_ref[...], wproj_ref[...], bproj_ref[...],
        a2_ref[...], b2_ref[...], w1_ref[...], bb1_ref[...], w2_ref[...],
        bb2_ref[...],
        num_heads=num_heads, compute_dtype=compute_dtype, approx_recip=True)
    o_ref[0] = out.astype(o_ref.dtype)


def _build_pallas_call(B, N, C, tq, kparams, *, num_heads, aggressive):
    n_qt = N // tq
    hid = kparams[7].shape[1]
    compute_dtype = kparams[2].dtype

    # Grid-invariant weights: single-buffer them (no point double-buffering a
    # block whose index never changes) when the jax version supports it.
    wkw = {"pipeline_mode": pl.Buffered(1)} if aggressive else {}

    def wspec(arr):
        nd = arr.ndim
        return pl.BlockSpec(arr.shape, lambda b, q, _n=nd: (0,) * _n, **wkw)

    in_specs = [
        pl.BlockSpec((1, N, C), lambda b, q: (b, 0, 0)),    # x full (for K/V)
        pl.BlockSpec((1, tq, C), lambda b, q: (b, q, 0)),   # x query tile
    ] + [wspec(p) for p in kparams]
    out_specs = pl.BlockSpec((1, tq, C), lambda b, q: (b, q, 0))

    grid_spec = pltpu.PrefetchScalarGridSpec(
        num_scalar_prefetch=0, grid=(B, n_qt),
        in_specs=in_specs, out_specs=out_specs)

    H = num_heads
    flops = B * (2 * n_qt * N * C * 8 * C      # stacked K/V projection (per tile)
                 + 2 * N * C * C               # Q projection
                 + 16 * N * N * C              # QK^T + AV over 4 comps, H heads
                 + 2 * N * C * C               # output projection
                 + 4 * N * C * hid)            # MLP
    transcendentals = B * (4 * H * N * N + N * hid + N * C)
    param_bytes = sum(int(np.prod(p.shape)) * p.dtype.itemsize for p in kparams)
    x_bytes = B * N * C * 4
    cost = pl.CostEstimate(flops=int(flops),
                           transcendentals=int(transcendentals),
                           bytes_accessed=int(3 * x_bytes + param_bytes))

    cp_kwargs = dict(dimension_semantics=("parallel", "parallel"))
    if aggressive:
        # Above the 16/32 MiB scoped defaults, below v7x's 64 MiB physical.
        cp_kwargs["vmem_limit_bytes"] = 48 * 1024 * 1024

    kernel = functools.partial(_block_kernel, num_heads=num_heads,
                               compute_dtype=compute_dtype)
    return pl.pallas_call(
        kernel,
        out_shape=jax.ShapeDtypeStruct((B, N, C), jnp.float32),
        grid_spec=grid_spec,
        cost_estimate=cost,
        compiler_params=pltpu.CompilerParams(**cp_kwargs))


def block_forward(x, kparams, *, num_heads, tq=None):
    B, N, C = x.shape
    if tq is None:
        tq = N if N <= 128 else 128
    assert N % tq == 0 and (tq == N or tq % 8 == 0)
    try:
        fn = _build_pallas_call(B, N, C, tq, kparams, num_heads=num_heads,
                                aggressive=True)
        out = fn(x, x, *kparams)
        return jax.block_until_ready(out)
    except Exception:
        # Fallback for jax versions that reject Buffered(1) / the vmem limit.
        fn = _build_pallas_call(B, N, C, tq, kparams, num_heads=num_heads,
                                aggressive=False)
        return jax.block_until_ready(fn(x, x, *kparams))


# ----------------------------------------------------------------------------
# Original-layout reference (straight transcription of the PyTorch Block),
# used to validate the Hamilton-stacking / weight-folding algebra.
# ----------------------------------------------------------------------------
def _block_math_original(x, a1, b1, w_qkv, w_proj, b_proj, a2, b2, w1, bb1,
                         w2, bb2, *, num_heads):
    _, dim = x.shape
    hd = dim // num_heads
    hq = hd // 4
    scale = hd ** (-0.5)
    f32 = jnp.float32

    def qnorm_affine(v, alpha, bias):
        c4 = v.shape[-1] // 4
        r, i, j, k = (v[:, t * c4:(t + 1) * c4] for t in range(4))
        qn = jnp.sqrt(r * r + i * i + j * j + k * k + EPS)
        return jnp.concatenate([alpha * (r / qn) + bias, alpha * (i / qn) + bias,
                                alpha * (j / qn) + bias, alpha * (k / qn) + bias],
                               axis=-1)

    def softmax(s):
        e = jnp.exp(s - jnp.max(s, -1, keepdims=True))
        return e / jnp.sum(e, -1, keepdims=True)

    mT = lambda a, b: jnp.dot(a, b.T, preferred_element_type=f32)
    mm = lambda a, b: jnp.dot(a, b, preferred_element_type=f32)

    xn = qnorm_affine(x, a1, b1)
    qkv = jnp.dot(xn, w_qkv, preferred_element_type=f32)
    outs = []
    for h in range(num_heads):
        q = qkv[:, h * hd:(h + 1) * hd] * scale
        k = qkv[:, dim + h * hd: dim + (h + 1) * hd]
        v = qkv[:, 2 * dim + h * hd: 2 * dim + (h + 1) * hd]
        qr, qx, qy, qz = (q[:, t * hq:(t + 1) * hq] for t in range(4))
        kr, kx, ky, kz = (k[:, t * hq:(t + 1) * hq] for t in range(4))
        vr, vx, vy, vz = (v[:, t * hq:(t + 1) * hq] for t in range(4))
        ar = softmax(mT(qr, kr) - mT(qx, kx) - mT(qy, ky) - mT(qz, kz))
        ai = softmax(mT(qr, kx) + mT(qx, kr) + mT(qy, kz) - mT(qz, ky))
        aj = softmax(mT(qr, ky) - mT(qx, kz) + mT(qy, kr) + mT(qz, kx))
        ak = softmax(mT(qr, kz) + mT(qx, ky) - mT(qy, kx) + mT(qz, kr))
        o_r = mm(ar, vr) - mm(ai, vx) - mm(aj, vy) - mm(ak, vz)
        o_i = mm(ar, vx) + mm(ai, vr) + mm(aj, vz) - mm(ak, vy)
        o_j = mm(ar, vy) - mm(ai, vz) + mm(aj, vr) + mm(ak, vx)
        o_k = mm(ar, vz) + mm(ai, vy) - mm(aj, vx) + mm(ak, vr)
        outs.append(jnp.concatenate([o_r, o_i, o_j, o_k], axis=-1))
    attn = jnp.dot(jnp.concatenate(outs, axis=-1), w_proj,
                   preferred_element_type=f32) + b_proj
    x1 = x + attn
    xn2 = qnorm_affine(x1, a2, b2)
    h1 = _gelu(jnp.dot(xn2, w1, preferred_element_type=f32) + bb1)
    h2 = jnp.dot(h1, w2, preferred_element_type=f32) + bb2
    return x1 + h2


# ----------------------------------------------------------------------------
# Deterministic parameter construction (QuaternionLinearAutograd equivalent).
# ----------------------------------------------------------------------------
def quaternion_weight(key, in_f, out_f):
    """Dense (in_f, out_f) Hamilton-product weight from 4 real components."""
    i4, o4 = in_f // 4, out_f // 4
    kr, ki, kj, kk = jax.random.split(key, 4)
    s = 1.0 / np.sqrt(in_f)
    wr = jax.random.uniform(kr, (i4, o4), jnp.float32, -s, s)
    wi = jax.random.uniform(ki, (i4, o4), jnp.float32, -s, s)
    wj = jax.random.uniform(kj, (i4, o4), jnp.float32, -s, s)
    wk = jax.random.uniform(kk, (i4, o4), jnp.float32, -s, s)
    return jnp.concatenate([
        jnp.concatenate([wr, wi, wj, wk], axis=1),
        jnp.concatenate([-wi, wr, -wk, wj], axis=1),
        jnp.concatenate([-wj, wk, wr, -wi], axis=1),
        jnp.concatenate([-wk, -wj, wi, wr], axis=1),
    ], axis=0)


if __name__ == "__main__":
    # Small shapes consistent with the module: dim % num_heads == 0 and
    # head_dim % 4 == 0.  dim=128 keeps the channel (lane) axis 128-dense.
    B, N, DIM, HEADS = 2, 16, 128, 2
    HID = int(DIM * 4.0)
    TQ = 8   # two query tiles per batch element -> exercises the 2-D grid

    key = jax.random.PRNGKey(0)
    kx, kq, kp, k1, k2, kb, kn = jax.random.split(key, 7)

    x = jax.random.normal(kx, (B, N, DIM), jnp.float32)

    kn1, kn2, kn3, kn4 = jax.random.split(kn, 4)
    a1 = 1.0 + 0.1 * jax.random.normal(kn1, (1, DIM // 4), jnp.float32)
    b1 = 0.05 * jax.random.normal(kn2, (1, DIM // 4), jnp.float32)
    a2 = 1.0 + 0.1 * jax.random.normal(kn3, (1, DIM // 4), jnp.float32)
    b2 = 0.05 * jax.random.normal(kn4, (1, DIM // 4), jnp.float32)

    w_qkv = quaternion_weight(kq, DIM, 3 * DIM)   # qkv_bias=False -> no bias
    w_proj = quaternion_weight(kp, DIM, DIM)
    w1 = quaternion_weight(k1, DIM, HID)
    w2 = quaternion_weight(k2, HID, DIM)
    kb1, kb2, kb3 = jax.random.split(kb, 3)
    b_proj = 0.02 * jax.random.normal(kb1, (1, DIM), jnp.float32)
    bb1 = 0.02 * jax.random.normal(kb2, (1, HID), jnp.float32)
    bb2 = 0.02 * jax.random.normal(kb3, (1, DIM), jnp.float32)

    raw_params = (a1, b1, w_qkv, w_proj, b_proj, a2, b2, w1, bb1, w2, bb2)

    # 1) Validate the Hamilton-stacked / folded-weight algebra in f32
    #    (use true f32 matmul precision so reordering noise stays tiny).
    with jax.default_matmul_precision("highest"):
        prep32 = prepare_block_params(raw_params, num_heads=HEADS,
                                      compute_dtype=jnp.float32)
        ref_orig = jax.vmap(lambda xb: _block_math_original(
            xb, *raw_params, num_heads=HEADS))(x)
        ref_new = jax.vmap(lambda xb: _block_math(
            xb, xb, *prep32, num_heads=HEADS, compute_dtype=jnp.float32,
            approx_recip=False))(x)
    np.testing.assert_allclose(np.asarray(ref_new), np.asarray(ref_orig),
                               atol=1e-3, rtol=1e-3)

    # 2) Run the Pallas kernel (bf16 matmuls, f32 accumulation) and compare
    #    against the same math in plain JAX with identical bf16 weights.
    prep_bf16 = prepare_block_params(raw_params, num_heads=HEADS,
                                     compute_dtype=jnp.bfloat16)
    out = block_forward(x, prep_bf16, num_heads=HEADS, tq=TQ)
    out = jax.block_until_ready(out)

    ref_kernel = jax.vmap(lambda xb: _block_math(
        xb, xb, *prep_bf16, num_heads=HEADS, compute_dtype=jnp.bfloat16,
        approx_recip=False))(x)
    np.testing.assert_allclose(np.asarray(out), np.asarray(ref_kernel),
                               atol=5e-2, rtol=5e-2)

    print("KERNEL_OK")
</pallas_src>

<mosaic_0001>
module attributes {stable_mosaic.version = 11 : i64} {
  func.func @_block_kernel(%arg0: i32, %arg1: i32, %arg2: memref<1x16x128xf32, #tpu.memory_space<vmem>>, %arg3: memref<1x8x128xf32, #tpu.memory_space<vmem>>, %arg4: memref<1x128xf32, #tpu.memory_space<vmem>>, %arg5: memref<1x128xf32, #tpu.memory_space<vmem>>, %arg6: memref<128x1152xbf16, #tpu.memory_space<vmem>>, %arg7: memref<128x128xbf16, #tpu.memory_space<vmem>>, %arg8: memref<1x128xf32, #tpu.memory_space<vmem>>, %arg9: memref<1x128xf32, #tpu.memory_space<vmem>>, %arg10: memref<1x128xf32, #tpu.memory_space<vmem>>, %arg11: memref<128x512xbf16, #tpu.memory_space<vmem>>, %arg12: memref<1x512xf32, #tpu.memory_space<vmem>>, %arg13: memref<512x128xbf16, #tpu.memory_space<vmem>>, %arg14: memref<1x128xf32, #tpu.memory_space<vmem>>, %arg15: memref<1x8x128xf32, #tpu.memory_space<vmem>>) attributes {dimension_semantics = [#tpu.dimension_semantics<parallel>, #tpu.dimension_semantics<parallel>], iteration_bounds = array<i64: 2, 2>, scalar_prefetch = 0 : i64, scratch_operands = 0 : i64, tpu.core_type = #tpu.core_type<tc>, window_params = [{transform_indices = @transform_0, window_bounds = array<i64: 1, 16, 128>}, {transform_indices = @transform_1, window_bounds = array<i64: 1, 8, 128>}, {pipeline_mode = #tpu.pipeline_mode<synchronous>, transform_indices = @transform_2, window_bounds = array<i64: 1, 128>}, {pipeline_mode = #tpu.pipeline_mode<synchronous>, transform_indices = @transform_3, window_bounds = array<i64: 1, 128>}, {pipeline_mode = #tpu.pipeline_mode<synchronous>, transform_indices = @transform_4, window_bounds = array<i64: 128, 1152>}, {pipeline_mode = #tpu.pipeline_mode<synchronous>, transform_indices = @transform_5, window_bounds = array<i64: 128, 128>}, {pipeline_mode = #tpu.pipeline_mode<synchronous>, transform_indices = @transform_6, window_bounds = array<i64: 1, 128>}, {pipeline_mode = #tpu.pipeline_mode<synchronous>, transform_indices = @transform_7, window_bounds = array<i64: 1, 128>}, {pipeline_mode = #tpu.pipeline_mode<synchronous>, transform_indices = @transform_8, window_bounds = array<i64: 1, 128>}, {pipeline_mode = #tpu.pipeline_mode<synchronous>, transform_indices = @transform_9, window_bounds = array<i64: 128, 512>}, {pipeline_mode = #tpu.pipeline_mode<synchronous>, transform_indices = @transform_10, window_bounds = array<i64: 1, 512>}, {pipeline_mode = #tpu.pipeline_mode<synchronous>, transform_indices = @transform_11, window_bounds = array<i64: 512, 128>}, {pipeline_mode = #tpu.pipeline_mode<synchronous>, transform_indices = @transform_12, window_bounds = array<i64: 1, 128>}, {transform_indices = @transform_13, window_bounds = array<i64: 1, 8, 128>}]} {
    %c0 = arith.constant 0 : index
    %c0_0 = arith.constant 0 : index
    %c0_1 = arith.constant 0 : index
    %0 = vector.load %arg2[%c0, %c0_0, %c0_1] : memref<1x16x128xf32, #tpu.memory_space<vmem>>, vector<1x16x128xf32>
    %1 = vector.shape_cast %0 : vector<1x16x128xf32> to vector<16x128xf32>
    %c0_2 = arith.constant 0 : index
    %c0_3 = arith.constant 0 : index
    %c0_4 = arith.constant 0 : index
    %2 = vector.load %arg3[%c0_2, %c0_3, %c0_4] : memref<1x8x128xf32, #tpu.memory_space<vmem>>, vector<1x8x128xf32>
    %3 = vector.shape_cast %2 : vector<1x8x128xf32> to vector<8x128xf32>
    %c0_5 = arith.constant 0 : index
    %c0_6 = arith.constant 0 : index
    %4 = vector.load %arg4[%c0_5, %c0_6] : memref<1x128xf32, #tpu.memory_space<vmem>>, vector<1x128xf32>
    %c0_7 = arith.constant 0 : index
    %c0_8 = arith.constant 0 : index
    %5 = vector.load %arg5[%c0_7, %c0_8] : memref<1x128xf32, #tpu.memory_space<vmem>>, vector<1x128xf32>
    %c0_9 = arith.constant 0 : index
    %c0_10 = arith.constant 0 : index
    %6 = vector.load %arg6[%c0_9, %c0_10] : memref<128x1152xbf16, #tpu.memory_space<vmem>>, vector<128x1152xbf16>
    %c0_11 = arith.constant 0 : index
    %c0_12 = arith.constant 0 : index
    %7 = vector.load %arg7[%c0_11, %c0_12] : memref<128x128xbf16, #tpu.memory_space<vmem>>, vector<128x128xbf16>
    %c0_13 = arith.constant 0 : index
    %c0_14 = arith.constant 0 : index
    %8 = vector.load %arg8[%c0_13, %c0_14] : memref<1x128xf32, #tpu.memory_space<vmem>>, vector<1x128xf32>
    %c0_15 = arith.constant 0 : index
    %c0_16 = arith.constant 0 : index
    %9 = vector.load %arg9[%c0_15, %c0_16] : memref<1x128xf32, #tpu.memory_space<vmem>>, vector<1x128xf32>
    %c0_17 = arith.constant 0 : index
    %c0_18 = arith.constant 0 : index
    %10 = vector.load %arg10[%c0_17, %c0_18] : memref<1x128xf32, #tpu.memory_space<vmem>>, vector<1x128xf32>
    %c0_19 = arith.constant 0 : index
    %c0_20 = arith.constant 0 : index
    %11 = vector.load %arg11[%c0_19, %c0_20] : memref<128x512xbf16, #tpu.memory_space<vmem>>, vector<128x512xbf16>
    %c0_21 = arith.constant 0 : index
    %c0_22 = arith.constant 0 : index
    %12 = vector.load %arg12[%c0_21, %c0_22] : memref<1x512xf32, #tpu.memory_space<vmem>>, vector<1x512xf32>
    %c0_23 = arith.constant 0 : index
    %c0_24 = arith.constant 0 : index
    %13 = vector.load %arg13[%c0_23, %c0_24] : memref<512x128xbf16, #tpu.memory_space<vmem>>, vector<512x128xbf16>
    %c0_25 = arith.constant 0 : index
    %c0_26 = arith.constant 0 : index
    %14 = vector.load %arg14[%c0_25, %c0_26] : memref<1x128xf32, #tpu.memory_space<vmem>>, vector<1x128xf32>
    %15 = vector.extract_strided_slice %1 {offsets = [0, 0], sizes = [16, 32], strides = [1, 1]} : vector<16x128xf32> to vector<16x32xf32>
    %16 = vector.extract_strided_slice %1 {offsets = [0, 32], sizes = [16, 32], strides = [1, 1]} : vector<16x128xf32> to vector<16x32xf32>
    %17 = vector.extract_strided_slice %1 {offsets = [0, 64], sizes = [16, 32], strides = [1, 1]} : vector<16x128xf32> to vector<16x32xf32>
    %18 = vector.extract_strided_slice %1 {offsets = [0, 96], sizes = [16, 32], strides = [1, 1]} : vector<16x128xf32> to vector<16x32xf32>
    %19 = arith.mulf %15, %15 : vector<16x32xf32>
    %20 = arith.mulf %16, %16 : vector<16x32xf32>
    %21 = arith.addf %19, %20 : vector<16x32xf32>
    %22 = arith.mulf %17, %17 : vector<16x32xf32>
    %23 = arith.addf %21, %22 : vector<16x32xf32>
    %24 = arith.mulf %18, %18 : vector<16x32xf32>
    %25 = arith.addf %23, %24 : vector<16x32xf32>
    %cst = arith.constant 9.99999997E-7 : f32
    %26 = vector.broadcast %cst : f32 to vector<16x32xf32>
    %27 = arith.addf %25, %26 : vector<16x32xf32>
    %28 = math.rsqrt %27 : vector<16x32xf32>
    %29 = tpu.concatenate %28, %28, %28, %28 in 1 : vector<16x32xf32>, vector<16x32xf32>, vector<16x32xf32>, vector<16x32xf32> -> vector<16x128xf32>
    %30 = arith.mulf %1, %29 : vector<16x128xf32>
    %31 = vector.broadcast %4 : vector<1x128xf32> to vector<16x128xf32>
    %32 = arith.mulf %30, %31 : vector<16x128xf32>
    %33 = vector.broadcast %5 : vector<1x128xf32> to vector<16x128xf32>
    %34 = arith.addf %32, %33 : vector<16x128xf32>
    %35 = arith.truncf %34 : vector<16x128xf32> to vector<16x128xbf16>
    %36 = vector.extract_strided_slice %3 {offsets = [0, 0], sizes = [8, 32], strides = [1, 1]} : vector<8x128xf32> to vector<8x32xf32>
    %37 = vector.extract_strided_slice %3 {offsets = [0, 32], sizes = [8, 32], strides = [1, 1]} : vector<8x128xf32> to vector<8x32xf32>
    %38 = vector.extract_strided_slice %3 {offsets = [0, 64], sizes = [8, 32], strides = [1, 1]} : vector<8x128xf32> to vector<8x32xf32>
    %39 = vector.extract_strided_slice %3 {offsets = [0, 96], sizes = [8, 32], strides = [1, 1]} : vector<8x128xf32> to vector<8x32xf32>
    %40 = arith.mulf %36, %36 : vector<8x32xf32>
    %41 = arith.mulf %37, %37 : vector<8x32xf32>
    %42 = arith.addf %40, %41 : vector<8x32xf32>
    %43 = arith.mulf %38, %38 : vector<8x32xf32>
    %44 = arith.addf %42, %43 : vector<8x32xf32>
    %45 = arith.mulf %39, %39 : vector<8x32xf32>
    %46 = arith.addf %44, %45 : vector<8x32xf32>
    %cst_27 = arith.constant 9.99999997E-7 : f32
    %47 = vector.broadcast %cst_27 : f32 to vector<8x32xf32>
    %48 = arith.addf %46, %47 : vector<8x32xf32>
    %49 = math.rsqrt %48 : vector<8x32xf32>
    %50 = tpu.concatenate %49, %49, %49, %49 in 1 : vector<8x32xf32>, vector<8x32xf32>, vector<8x32xf32>, vector<8x32xf32> -> vector<8x128xf32>
    %51 = arith.mulf %3, %50 : vector<8x128xf32>
    %52 = vector.broadcast %4 : vector<1x128xf32> to vector<8x128xf32>
    %53 = arith.mulf %51, %52 : vector<8x128xf32>
    %54 = vector.broadcast %5 : vector<1x128xf32> to vector<8x128xf32>
    %55 = arith.addf %53, %54 : vector<8x128xf32>
    %56 = arith.truncf %55 : vector<8x128xf32> to vector<8x128xbf16>
    %57 = vector.extract_strided_slice %6 {offsets = [0, 0], sizes = [128, 128], strides = [1, 1]} : vector<128x1152xbf16> to vector<128x128xbf16>
    %cst_28 = arith.constant dense<0.000000e+00> : vector<8x128xf32>
    %58 = tpu.matmul %56, %57, %cst_28 {dimension_numbers = #tpu.dot_dimension_numbers<[1], [0], [0], [1], [0, 0, 1, 1], [], []>} : vector<8x128xbf16>, vector<128x128xbf16>, vector<8x128xf32> -> vector<8x128xf32>
    %59 = vector.extract_strided_slice %6 {offsets = [0, 128], sizes = [128, 1024], strides = [1, 1]} : vector<128x1152xbf16> to vector<128x1024xbf16>
    %cst_29 = arith.constant dense<0.000000e+00> : vector<16x1024xf32>
    %60 = tpu.matmul %35, %59, %cst_29 {dimension_numbers = #tpu.dot_dimension_numbers<[1], [0], [0], [1], [0, 0, 1, 1], [], []>} : vector<16x128xbf16>, vector<128x1024xbf16>, vector<16x1024xf32> -> vector<16x1024xf32>
    %cst_30 = arith.constant 0.000000e+00 : f32
    %61 = vector.broadcast %cst_30 : f32 to vector<8x128xf32>
    %62 = vector.extract_strided_slice %58 {offsets = [0, 0], sizes = [8, 64], strides = [1, 1]} : vector<8x128xf32> to vector<8x64xf32>
    %63 = arith.truncf %62 : vector<8x64xf32> to vector<8x64xbf16>
    %cst_31 = arith.constant 0.000000e+00 : f32
    %64 = vector.broadcast %cst_31 : f32 to vector<8x64xf32>
    %65 = vector.extract_strided_slice %60 {offsets = [0, 0], sizes = [16, 64], strides = [1, 1]} : vector<16x1024xf32> to vector<16x64xf32>
    %66 = arith.truncf %65 : vector<16x64xf32> to vector<16x64xbf16>
    %67 = vector.extract_strided_slice %60 {offsets = [0, 512], sizes = [16, 64], strides = [1, 1]} : vector<16x1024xf32> to vector<16x64xf32>
    %68 = arith.truncf %67 : vector<16x64xf32> to vector<16x64xbf16>
    %cst_32 = arith.constant dense<0.000000e+00> : vector<8x16xf32>
    %69 = tpu.matmul %63, %66, %cst_32 {dimension_numbers = #tpu.dot_dimension_numbers<[1], [1], [0], [0], [0, 0, 1, 0], [], []>} : vector<8x64xbf16>, vector<16x64xbf16>, vector<8x16xf32> -> vector<8x16xf32>
    %cst_33 = arith.constant dense<0xFF800000> : vector<8xf32>
    %70 = vector.multi_reduction <maximumf>, %69, %cst_33 [1] : vector<8x16xf32> to vector<8xf32>
    %71 = vector.shape_cast %70 : vector<8xf32> to vector<8x1xf32>
    %72 = vector.broadcast %71 : vector<8x1xf32> to vector<8x16xf32>
    %73 = arith.subf %69, %72 : vector<8x16xf32>
    %74 = math.exp %73 : vector<8x16xf32>
    %cst_34 = arith.constant dense<0.000000e+00> : vector<8xf32>
    %75 = vector.multi_reduction <add>, %74, %cst_34 [1] : vector<8x16xf32> to vector<8xf32>
    %76 = vector.shape_cast %75 : vector<8xf32> to vector<8x1xf32>
    %77 = tpu.reciprocal %76 {approx = true} : vector<8x1xf32> -> vector<8x1xf32>
    %78 = vector.broadcast %77 : vector<8x1xf32> to vector<8x16xf32>
    %79 = arith.mulf %74, %78 : vector<8x16xf32>
    %80 = arith.truncf %79 : vector<8x16xf32> to vector<8x16xbf16>
    %cst_35 = arith.constant dense<0.000000e+00> : vector<8x64xf32>
    %81 = tpu.matmul %80, %68, %cst_35 {dimension_numbers = #tpu.dot_dimension_numbers<[1], [0], [0], [1], [0, 0, 1, 1], [], []>} : vector<8x16xbf16>, vector<16x64xbf16>, vector<8x64xf32> -> vector<8x64xf32>
    %82 = arith.addf %64, %81 : vector<8x64xf32>
    %83 = vector.extract_strided_slice %60 {offsets = [0, 128], sizes = [16, 64], strides = [1, 1]} : vector<16x1024xf32> to vector<16x64xf32>
    %84 = arith.truncf %83 : vector<16x64xf32> to vector<16x64xbf16>
    %85 = vector.extract_strided_slice %60 {offsets = [0, 640], sizes = [16, 64], strides = [1, 1]} : vector<16x1024xf32> to vector<16x64xf32>
    %86 = arith.truncf %85 : vector<16x64xf32> to vector<16x64xbf16>
    %cst_36 = arith.constant dense<0.000000e+00> : vector<8x16xf32>
    %87 = tpu.matmul %63, %84, %cst_36 {dimension_numbers = #tpu.dot_dimension_numbers<[1], [1], [0], [0], [0, 0, 1, 0], [], []>} : vector<8x64xbf16>, vector<16x64xbf16>, vector<8x16xf32> -> vector<8x16xf32>
    %cst_37 = arith.constant dense<0xFF800000> : vector<8xf32>
    %88 = vector.multi_reduction <maximumf>, %87, %cst_37 [1] : vector<8x16xf32> to vector<8xf32>
    %89 = vector.shape_cast %88 : vector<8xf32> to vector<8x1xf32>
    %90 = vector.broadcast %89 : vector<8x1xf32> to vector<8x16xf32>
    %91 = arith.subf %87, %90 : vector<8x16xf32>
    %92 = math.exp %91 : vector<8x16xf32>
    %cst_38 = arith.constant dense<0.000000e+00> : vector<8xf32>
    %93 = vector.multi_reduction <add>, %92, %cst_38 [1] : vector<8x16xf32> to vector<8xf32>
    %94 = vector.shape_cast %93 : vector<8xf32> to vector<8x1xf32>
    %95 = tpu.reciprocal %94 {approx = true} : vector<8x1xf32> -> vector<8x1xf32>
    %96 = vector.broadcast %95 : vector<8x1xf32> to vector<8x16xf32>
    %97 = arith.mulf %92, %96 : vector<8x16xf32>
    %98 = arith.truncf %97 : vector<8x16xf32> to vector<8x16xbf16>
    %cst_39 = arith.constant dense<0.000000e+00> : vector<8x64xf32>
    %99 = tpu.matmul %98, %86, %cst_39 {dimension_numbers = #tpu.dot_dimension_numbers<[1], [0], [0], [1], [0, 0, 1, 1], [], []>} : vector<8x16xbf16>, vector<16x64xbf16>, vector<8x64xf32> -> vector<8x64xf32>
    %100 = arith.addf %82, %99 : vector<8x64xf32>
    %101 = vector.extract_strided_slice %60 {offsets = [0, 256], sizes = [16, 64], strides = [1, 1]} : vector<16x1024xf32> to vector<16x64xf32>
    %102 = arith.truncf %101 : vector<16x64xf32> to vector<16x64xbf16>
    %103 = vector.extract_strided_slice %60 {offsets = [0, 768], sizes = [16, 64], strides = [1, 1]} : vector<16x1024xf32> to vector<16x64xf32>
    %104 = arith.truncf %103 : vector<16x64xf32> to vector<16x64xbf16>
    %cst_40 = arith.constant dense<0.000000e+00> : vector<8x16xf32>
    %105 = tpu.matmul %63, %102, %cst_40 {dimension_numbers = #tpu.dot_dimension_numbers<[1], [1], [0], [0], [0, 0, 1, 0], [], []>} : vector<8x64xbf16>, vector<16x64xbf16>, vector<8x16xf32> -> vector<8x16xf32>
    %cst_41 = arith.constant dense<0xFF800000> : vector<8xf32>
    %106 = vector.multi_reduction <maximumf>, %105, %cst_41 [1] : vector<8x16xf32> to vector<8xf32>
    %107 = vector.shape_cast %106 : vector<8xf32> to vector<8x1xf32>
    %108 = vector.broadcast %107 : vector<8x1xf32> to vector<8x16xf32>
    %109 = arith.subf %105, %108 : vector<8x16xf32>
    %110 = math.exp %109 : vector<8x16xf32>
    %cst_42 = arith.constant dense<0.000000e+00> : vector<8xf32>
    %111 = vector.multi_reduction <add>, %110, %cst_42 [1] : vector<8x16xf32> to vector<8xf32>
    %112 = vector.shape_cast %111 : vector<8xf32> to vector<8x1xf32>
    %113 = tpu.reciprocal %112 {approx = true} : vector<8x1xf32> -> vector<8x1xf32>
    %114 = vector.broadcast %113 : vector<8x1xf32> to vector<8x16xf32>
    %115 = arith.mulf %110, %114 : vector<8x16xf32>
    %116 = arith.truncf %115 : vector<8x16xf32> to vector<8x16xbf16>
    %cst_43 = arith.constant dense<0.000000e+00> : vector<8x64xf32>
    %117 = tpu.matmul %116, %104, %cst_43 {dimension_numbers = #tpu.dot_dimension_numbers<[1], [0], [0], [1], [0, 0, 1, 1], [], []>} : vector<8x16xbf16>, vector<16x64xbf16>, vector<8x64xf32> -> vector<8x64xf32>
    %118 = arith.addf %100, %117 : vector<8x64xf32>
    %119 = vector.extract_strided_slice %60 {offsets = [0, 384], sizes = [16, 64], strides = [1, 1]} : vector<16x1024xf32> to vector<16x64xf32>
    %120 = arith.truncf %119 : vector<16x64xf32> to vector<16x64xbf16>
    %121 = vector.extract_strided_slice %60 {offsets = [0, 896], sizes = [16, 64], strides = [1, 1]} : vector<16x1024xf32> to vector<16x64xf32>
    %122 = arith.truncf %121 : vector<16x64xf32> to vector<16x64xbf16>
    %cst_44 = arith.constant dense<0.000000e+00> : vector<8x16xf32>
    %123 = tpu.matmul %63, %120, %cst_44 {dimension_numbers = #tpu.dot_dimension_numbers<[1], [1], [0], [0], [0, 0, 1, 0], [], []>} : vector<8x64xbf16>, vector<16x64xbf16>, vector<8x16xf32> -> vector<8x16xf32>
    %cst_45 = arith.constant dense<0xFF800000> : vector<8xf32>
    %124 = vector.multi_reduction <maximumf>, %123, %cst_45 [1] : vector<8x16xf32> to vector<8xf32>
    %125 = vector.shape_cast %124 : vector<8xf32> to vector<8x1xf32>
    %126 = vector.broadcast %125 : vector<8x1xf32> to vector<8x16xf32>
    %127 = arith.subf %123, %126 : vector<8x16xf32>
    %128 = math.exp %127 : vector<8x16xf32>
    %cst_46 = arith.constant dense<0.000000e+00> : vector<8xf32>
    %129 = vector.multi_reduction <add>, %128, %cst_46 [1] : vector<8x16xf32> to vector<8xf32>
    %130 = vector.shape_cast %129 : vector<8xf32> to vector<8x1xf32>
    %131 = tpu.reciprocal %130 {approx = true} : vector<8x1xf32> -> vector<8x1xf32>
    %132 = vector.broadcast %131 : vector<8x1xf32> to vector<8x16xf32>
    %133 = arith.mulf %128, %132 : vector<8x16xf32>
    %134 = arith.truncf %133 : vector<8x16xf32> to vector<8x16xbf16>
    %cst_47 = arith.constant dense<0.000000e+00> : vector<8x64xf32>
    %135 = tpu.matmul %134, %122, %cst_47 {dimension_numbers = #tpu.dot_dimension_numbers<[1], [0], [0], [1], [0, 0, 1, 1], [], []>} : vector<8x16xbf16>, vector<16x64xbf16>, vector<8x64xf32> -> vector<8x64xf32>
    %136 = arith.addf %118, %135 : vector<8x64xf32>
    %137 = arith.truncf %136 : vector<8x64xf32> to vector<8x64xbf16>
    %138 = vector.extract_strided_slice %7 {offsets = [0, 0], sizes = [64, 128], strides = [1, 1]} : vector<128x128xbf16> to vector<64x128xbf16>
    %cst_48 = arith.constant dense<0.000000e+00> : vector<8x128xf32>
    %139 = tpu.matmul %137, %138, %cst_48 {dimension_numbers = #tpu.dot_dimension_numbers<[1], [0], [0], [1], [0, 0, 1, 1], [], []>} : vector<8x64xbf16>, vector<64x128xbf16>, vector<8x128xf32> -> vector<8x128xf32>
    %140 = arith.addf %61, %139 : vector<8x128xf32>
    %141 = vector.extract_strided_slice %58 {offsets = [0, 64], sizes = [8, 64], strides = [1, 1]} : vector<8x128xf32> to vector<8x64xf32>
    %142 = arith.truncf %141 : vector<8x64xf32> to vector<8x64xbf16>
    %cst_49 = arith.constant 0.000000e+00 : f32
    %143 = vector.broadcast %cst_49 : f32 to vector<8x64xf32>
    %144 = vector.extract_strided_slice %60 {offsets = [0, 64], sizes = [16, 64], strides = [1, 1]} : vector<16x1024xf32> to vector<16x64xf32>
    %145 = arith.truncf %144 : vector<16x64xf32> to vector<16x64xbf16>
    %146 = vector.extract_strided_slice %60 {offsets = [0, 576], sizes = [16, 64], strides = [1, 1]} : vector<16x1024xf32> to vector<16x64xf32>
    %147 = arith.truncf %146 : vector<16x64xf32> to vector<16x64xbf16>
    %cst_50 = arith.constant dense<0.000000e+00> : vector<8x16xf32>
    %148 = tpu.matmul %142, %145, %cst_50 {dimension_numbers = #tpu.dot_dimension_numbers<[1], [1], [0], [0], [0, 0, 1, 0], [], []>} : vector<8x64xbf16>, vector<16x64xbf16>, vector<8x16xf32> -> vector<8x16xf32>
    %cst_51 = arith.constant dense<0xFF800000> : vector<8xf32>
    %149 = vector.multi_reduction <maximumf>, %148, %cst_51 [1] : vector<8x16xf32> to vector<8xf32>
    %150 = vector.shape_cast %149 : vector<8xf32> to vector<8x1xf32>
    %151 = vector.broadcast %150 : vector<8x1xf32> to vector<8x16xf32>
    %152 = arith.subf %148, %151 : vector<8x16xf32>
    %153 = math.exp %152 : vector<8x16xf32>
    %cst_52 = arith.constant dense<0.000000e+00> : vector<8xf32>
    %154 = vector.multi_reduction <add>, %153, %cst_52 [1] : vector<8x16xf32> to vector<8xf32>
    %155 = vector.shape_cast %154 : vector<8xf32> to vector<8x1xf32>
    %156 = tpu.reciprocal %155 {approx = true} : vector<8x1xf32> -> vector<8x1xf32>
    %157 = vector.broadcast %156 : vector<8x1xf32> to vector<8x16xf32>
    %158 = arith.mulf %153, %157 : vector<8x16xf32>
    %159 = arith.truncf %158 : vector<8x16xf32> to vector<8x16xbf16>
    %cst_53 = arith.constant dense<0.000000e+00> : vector<8x64xf32>
    %160 = tpu.matmul %159, %147, %cst_53 {dimension_numbers = #tpu.dot_dimension_numbers<[1], [0], [0], [1], [0, 0, 1, 1], [], []>} : vector<8x16xbf16>, vector<16x64xbf16>, vector<8x64xf32> -> vector<8x64xf32>
    %161 = arith.addf %143, %160 : vector<8x64xf32>
    %162 = vector.extract_strided_slice %60 {offsets = [0, 192], sizes = [16, 64], strides = [1, 1]} : vector<16x1024xf32> to vector<16x64xf32>
    %163 = arith.truncf %162 : vector<16x64xf32> to vector<16x64xbf16>
    %164 = vector.extract_strided_slice %60 {offsets = [0, 704], sizes = [16, 64], strides = [1, 1]} : vector<16x1024xf32> to vector<16x64xf32>
    %165 = arith.truncf %164 : vector<16x64xf32> to vector<16x64xbf16>
    %cst_54 = arith.constant dense<0.000000e+00> : vector<8x16xf32>
    %166 = tpu.matmul %142, %163, %cst_54 {dimension_numbers = #tpu.dot_dimension_numbers<[1], [1], [0], [0], [0, 0, 1, 0], [], []>} : vector<8x64xbf16>, vector<16x64xbf16>, vector<8x16xf32> -> vector<8x16xf32>
    %cst_55 = arith.constant dense<0xFF800000> : vector<8xf32>
    %167 = vector.multi_reduction <maximumf>, %166, %cst_55 [1] : vector<8x16xf32> to vector<8xf32>
    %168 = vector.shape_cast %167 : vector<8xf32> to vector<8x1xf32>
    %169 = vector.broadcast %168 : vector<8x1xf32> to vector<8x16xf32>
    %170 = arith.subf %166, %169 : vector<8x16xf32>
    %171 = math.exp %170 : vector<8x16xf32>
    %cst_56 = arith.constant dense<0.000000e+00> : vector<8xf32>
    %172 = vector.multi_reduction <add>, %171, %cst_56 [1] : vector<8x16xf32> to vector<8xf32>
    %173 = vector.shape_cast %172 : vector<8xf32> to vector<8x1xf32>
    %174 = tpu.reciprocal %173 {approx = true} : vector<8x1xf32> -> vector<8x1xf32>
    %175 = vector.broadcast %174 : vector<8x1xf32> to vector<8x16xf32>
    %176 = arith.mulf %171, %175 : vector<8x16xf32>
    %177 = arith.truncf %176 : vector<8x16xf32> to vector<8x16xbf16>
    %cst_57 = arith.constant dense<0.000000e+00> : vector<8x64xf32>
    %178 = tpu.matmul %177, %165, %cst_57 {dimension_numbers = #tpu.dot_dimension_numbers<[1], [0], [0], [1], [0, 0, 1, 1], [], []>} : vector<8x16xbf16>, vector<16x64xbf16>, vector<8x64xf32> -> vector<8x64xf32>
    %179 = arith.addf %161, %178 : vector<8x64xf32>
    %180 = vector.extract_strided_slice %60 {offsets = [0, 320], sizes = [16, 64], strides = [1, 1]} : vector<16x1024xf32> to vector<16x64xf32>
    %181 = arith.truncf %180 : vector<16x64xf32> to vector<16x64xbf16>
    %182 = vector.extract_strided_slice %60 {offsets = [0, 832], sizes = [16, 64], strides = [1, 1]} : vector<16x1024xf32> to vector<16x64xf32>
    %183 = arith.truncf %182 : vector<16x64xf32> to vector<16x64xbf16>
    %cst_58 = arith.constant dense<0.000000e+00> : vector<8x16xf32>
    %184 = tpu.matmul %142, %181, %cst_58 {dimension_numbers = #tpu.dot_dimension_numbers<[1], [1], [0], [0], [0, 0, 1, 0], [], []>} : vector<8x64xbf16>, vector<16x64xbf16>, vector<8x16xf32> -> vector<8x16xf32>
    %cst_59 = arith.constant dense<0xFF800000> : vector<8xf32>
    %185 = vector.multi_reduction <maximumf>, %184, %cst_59 [1] : vector<8x16xf32> to vector<8xf32>
    %186 = vector.shape_cast %185 : vector<8xf32> to vector<8x1xf32>
    %187 = vector.broadcast %186 : vector<8x1xf32> to vector<8x16xf32>
    %188 = arith.subf %184, %187 : vector<8x16xf32>
    %189 = math.exp %188 : vector<8x16xf32>
    %cst_60 = arith.constant dense<0.000000e+00> : vector<8xf32>
    %190 = vector.multi_reduction <add>, %189, %cst_60 [1] : vector<8x16xf32> to vector<8xf32>
    %191 = vector.shape_cast %190 : vector<8xf32> to vector<8x1xf32>
    %192 = tpu.reciprocal %191 {approx = true} : vector<8x1xf32> -> vector<8x1xf32>
    %193 = vector.broadcast %192 : vector<8x1xf32> to vector<8x16xf32>
    %194 = arith.mulf %189, %193 : vector<8x16xf32>
    %195 = arith.truncf %194 : vector<8x16xf32> to vector<8x16xbf16>
    %cst_61 = arith.constant dense<0.000000e+00> : vector<8x64xf32>
    %196 = tpu.matmul %195, %183, %cst_61 {dimension_numbers = #tpu.dot_dimension_numbers<[1], [0], [0], [1], [0, 0, 1, 1], [], []>} : vector<8x16xbf16>, vector<16x64xbf16>, vector<8x64xf32> -> vector<8x64xf32>
    %197 = arith.addf %179, %196 : vector<8x64xf32>
    %198 = vector.extract_strided_slice %60 {offsets = [0, 448], sizes = [16, 64], strides = [1, 1]} : vector<16x1024xf32> to vector<16x64xf32>
    %199 = arith.truncf %198 : vector<16x64xf32> to vector<16x64xbf16>
    %200 = vector.extract_strided_slice %60 {offsets = [0, 960], sizes = [16, 64], strides = [1, 1]} : vector<16x1024xf32> to vector<16x64xf32>
    %201 = arith.truncf %200 : vector<16x64xf32> to vector<16x64xbf16>
    %cst_62 = arith.constant dense<0.000000e+00> : vector<8x16xf32>
    %202 = tpu.matmul %142, %199, %cst_62 {dimension_numbers = #tpu.dot_dimension_numbers<[1], [1], [0], [0], [0, 0, 1, 0], [], []>} : vector<8x64xbf16>, vector<16x64xbf16>, vector<8x16xf32> -> vector<8x16xf32>
    %cst_63 = arith.constant dense<0xFF800000> : vector<8xf32>
    %203 = vector.multi_reduction <maximumf>, %202, %cst_63 [1] : vector<8x16xf32> to vector<8xf32>
    %204 = vector.shape_cast %203 : vector<8xf32> to vector<8x1xf32>
    %205 = vector.broadcast %204 : vector<8x1xf32> to vector<8x16xf32>
    %206 = arith.subf %202, %205 : vector<8x16xf32>
    %207 = math.exp %206 : vector<8x16xf32>
    %cst_64 = arith.constant dense<0.000000e+00> : vector<8xf32>
    %208 = vector.multi_reduction <add>, %207, %cst_64 [1] : vector<8x16xf32> to vector<8xf32>
    %209 = vector.shape_cast %208 : vector<8xf32> to vector<8x1xf32>
    %210 = tpu.reciprocal %209 {approx = true} : vector<8x1xf32> -> vector<8x1xf32>
    %211 = vector.broadcast %210 : vector<8x1xf32> to vector<8x16xf32>
    %212 = arith.mulf %207, %211 : vector<8x16xf32>
    %213 = arith.truncf %212 : vector<8x16xf32> to vector<8x16xbf16>
    %cst_65 = arith.constant dense<0.000000e+00> : vector<8x64xf32>
    %214 = tpu.matmul %213, %201, %cst_65 {dimension_numbers = #tpu.dot_dimension_numbers<[1], [0], [0], [1], [0, 0, 1, 1], [], []>} : vector<8x16xbf16>, vector<16x64xbf16>, vector<8x64xf32> -> vector<8x64xf32>
    %215 = arith.addf %197, %214 : vector<8x64xf32>
    %216 = arith.truncf %215 : vector<8x64xf32> to vector<8x64xbf16>
    %217 = vector.extract_strided_slice %7 {offsets = [64, 0], sizes = [64, 128], strides = [1, 1]} : vector<128x128xbf16> to vector<64x128xbf16>
    %cst_66 = arith.constant dense<0.000000e+00> : vector<8x128xf32>
    %218 = tpu.matmul %216, %217, %cst_66 {dimension_numbers = #tpu.dot_dimension_numbers<[1], [0], [0], [1], [0, 0, 1, 1], [], []>} : vector<8x64xbf16>, vector<64x128xbf16>, vector<8x128xf32> -> vector<8x128xf32>
    %219 = arith.addf %140, %218 : vector<8x128xf32>
    %220 = arith.addf %3, %219 : vector<8x128xf32>
    %221 = vector.broadcast %8 : vector<1x128xf32> to vector<8x128xf32>
    %222 = arith.addf %220, %221 : vector<8x128xf32>
    %223 = vector.extract_strided_slice %222 {offsets = [0, 0], sizes = [8, 32], strides = [1, 1]} : vector<8x128xf32> to vector<8x32xf32>
    %224 = vector.extract_strided_slice %222 {offsets = [0, 32], sizes = [8, 32], strides = [1, 1]} : vector<8x128xf32> to vector<8x32xf32>
    %225 = vector.extract_strided_slice %222 {offsets = [0, 64], sizes = [8, 32], strides = [1, 1]} : vector<8x128xf32> to vector<8x32xf32>
    %226 = vector.extract_strided_slice %222 {offsets = [0, 96], sizes = [8, 32], strides = [1, 1]} : vector<8x128xf32> to vector<8x32xf32>
    %227 = arith.mulf %223, %223 : vector<8x32xf32>
    %228 = arith.mulf %224, %224 : vector<8x32xf32>
    %229 = arith.addf %227, %228 : vector<8x32xf32>
    %230 = arith.mulf %225, %225 : vector<8x32xf32>
    %231 = arith.addf %229, %230 : vector<8x32xf32>
    %232 = arith.mulf %226, %226 : vector<8x32xf32>
    %233 = arith.addf %231, %232 : vector<8x32xf32>
    %cst_67 = arith.constant 9.99999997E-7 : f32
    %234 = vector.broadcast %cst_67 : f32 to vector<8x32xf32>
    %235 = arith.addf %233, %234 : vector<8x32xf32>
    %236 = math.rsqrt %235 : vector<8x32xf32>
    %237 = tpu.concatenate %236, %236, %236, %236 in 1 : vector<8x32xf32>, vector<8x32xf32>, vector<8x32xf32>, vector<8x32xf32> -> vector<8x128xf32>
    %238 = arith.mulf %222, %237 : vector<8x128xf32>
    %239 = vector.broadcast %9 : vector<1x128xf32> to vector<8x128xf32>
    %240 = arith.mulf %238, %239 : vector<8x128xf32>
    %241 = vector.broadcast %10 : vector<1x128xf32> to vector<8x128xf32>
    %242 = arith.addf %240, %241 : vector<8x128xf32>
    %243 = arith.truncf %242 : vector<8x128xf32> to vector<8x128xbf16>
    %cst_68 = arith.constant dense<0.000000e+00> : vector<8x512xf32>
    %244 = tpu.matmul %243, %11, %cst_68 {dimension_numbers = #tpu.dot_dimension_numbers<[1], [0], [0], [1], [0, 0, 1, 1], [], []>} : vector<8x128xbf16>, vector<128x512xbf16>, vector<8x512xf32> -> vector<8x512xf32>
    %245 = vector.broadcast %12 : vector<1x512xf32> to vector<8x512xf32>
    %246 = arith.addf %244, %245 : vector<8x512xf32>
    %cst_69 = arith.constant 5.000000e-01 : f32
    %247 = vector.broadcast %cst_69 : f32 to vector<8x512xf32>
    %248 = arith.mulf %247, %246 : vector<8x512xf32>
    %cst_70 = arith.constant 4.471500e-02 : f32
    %249 = vector.broadcast %cst_70 : f32 to vector<8x512xf32>
    %250 = arith.mulf %249, %246 : vector<8x512xf32>
    %251 = arith.mulf %250, %246 : vector<8x512xf32>
    %252 = arith.mulf %251, %246 : vector<8x512xf32>
    %253 = arith.addf %246, %252 : vector<8x512xf32>
    %cst_71 = arith.constant 0.797884583 : f32
    %254 = vector.broadcast %cst_71 : f32 to vector<8x512xf32>
    %255 = arith.mulf %254, %253 : vector<8x512xf32>
    %256 = math.tanh %255 : vector<8x512xf32>
    %cst_72 = arith.constant 1.000000e+00 : f32
    %257 = vector.broadcast %cst_72 : f32 to vector<8x512xf32>
    %258 = arith.addf %257, %256 : vector<8x512xf32>
    %259 = arith.mulf %248, %258 : vector<8x512xf32>
    %260 = arith.truncf %259 : vector<8x512xf32> to vector<8x512xbf16>
    %cst_73 = arith.constant dense<0.000000e+00> : vector<8x128xf32>
    %261 = tpu.matmul %260, %13, %cst_73 {dimension_numbers = #tpu.dot_dimension_numbers<[1], [0], [0], [1], [0, 0, 1, 1], [], []>} : vector<8x512xbf16>, vector<512x128xbf16>, vector<8x128xf32> -> vector<8x128xf32>
    %262 = vector.broadcast %14 : vector<1x128xf32> to vector<8x128xf32>
    %263 = arith.addf %261, %262 : vector<8x128xf32>
    %264 = arith.addf %222, %263 : vector<8x128xf32>
    %c0_74 = arith.constant 0 : index
    %c0_75 = arith.constant 0 : index
    %c0_76 = arith.constant 0 : index
    %265 = vector.load %arg15[%c0_74, %c0_75, %c0_76] : memref<1x8x128xf32, #tpu.memory_space<vmem>>, vector<1x8x128xf32>
    %266 = vector.shape_cast %265 : vector<1x8x128xf32> to vector<8x128xf32>
    %267 = vector.shape_cast %264 : vector<8x128xf32> to vector<1x8x128xf32>
    tpu.vector_store %arg15[%c0_74, %c0_75, %c0_76], %267 {strides = array<i32>} : memref<1x8x128xf32, #tpu.memory_space<vmem>>, vector<1x8x128xf32>,
    return
  }
  func.func @transform_0(%arg0: i32, %arg1: i32) -> (i32, i32, i32) {
    %c0_i32 = arith.constant 0 : i32
    %c0_i32_0 = arith.constant 0 : i32
    %c0_i32_1 = arith.constant 0 : i32
    return %arg0, %c0_i32, %c0_i32_0 : i32, i32, i32
  }
  func.func @transform_1(%arg0: i32, %arg1: i32) -> (i32, i32, i32) {
    %c0_i32 = arith.constant 0 : i32
    %c0_i32_0 = arith.constant 0 : i32
    return %arg0, %arg1, %c0_i32 : i32, i32, i32
  }
  func.func @transform_2(%arg0: i32, %arg1: i32) -> (i32, i32) {
    %c0_i32 = arith.constant 0 : i32
    %c0_i32_0 = arith.constant 0 : i32
    %c0_i32_1 = arith.constant 0 : i32
    return %c0_i32, %c0_i32_0 : i32, i32
  }
  func.func @transform_3(%arg0: i32, %arg1: i32) -> (i32, i32) {
    %c0_i32 = arith.constant 0 : i32
    %c0_i32_0 = arith.constant 0 : i32
    %c0_i32_1 = arith.constant 0 : i32
    return %c0_i32, %c0_i32_0 : i32, i32
  }
  func.func @transform_4(%arg0: i32, %arg1: i32) -> (i32, i32) {
    %c0_i32 = arith.constant 0 : i32
    %c0_i32_0 = arith.constant 0 : i32
    %c0_i32_1 = arith.constant 0 : i32
    return %c0_i32, %c0_i32_0 : i32, i32
  }
  func.func @transform_5(%arg0: i32, %arg1: i32) -> (i32, i32) {
    %c0_i32 = arith.constant 0 : i32
    %c0_i32_0 = arith.constant 0 : i32
    %c0_i32_1 = arith.constant 0 : i32
    return %c0_i32, %c0_i32_0 : i32, i32
  }
  func.func @transform_6(%arg0: i32, %arg1: i32) -> (i32, i32) {
    %c0_i32 = arith.constant 0 : i32
    %c0_i32_0 = arith.constant 0 : i32
    %c0_i32_1 = arith.constant 0 : i32
    return %c0_i32, %c0_i32_0 : i32, i32
  }
  func.func @transform_7(%arg0: i32, %arg1: i32) -> (i32, i32) {
    %c0_i32 = arith.constant 0 : i32
    %c0_i32_0 = arith.constant 0 : i32
    %c0_i32_1 = arith.constant 0 : i32
    return %c0_i32, %c0_i32_0 : i32, i32
  }
  func.func @transform_8(%arg0: i32, %arg1: i32) -> (i32, i32) {
    %c0_i32 = arith.constant 0 : i32
    %c0_i32_0 = arith.constant 0 : i32
    %c0_i32_1 = arith.constant 0 : i32
    return %c0_i32, %c0_i32_0 : i32, i32
  }
  func.func @transform_9(%arg0: i32, %arg1: i32) -> (i32, i32) {
    %c0_i32 = arith.constant 0 : i32
    %c0_i32_0 = arith.constant 0 : i32
    %c0_i32_1 = arith.constant 0 : i32
    return %c0_i32, %c0_i32_0 : i32, i32
  }
  func.func @transform_10(%arg0: i32, %arg1: i32) -> (i32, i32) {
    %c0_i32 = arith.constant 0 : i32
    %c0_i32_0 = arith.constant 0 : i32
    %c0_i32_1 = arith.constant 0 : i32
    return %c0_i32, %c0_i32_0 : i32, i32
  }
  func.func @transform_11(%arg0: i32, %arg1: i32) -> (i32, i32) {
    %c0_i32 = arith.constant 0 : i32
    %c0_i32_0 = arith.constant 0 : i32
    %c0_i32_1 = arith.constant 0 : i32
    return %c0_i32, %c0_i32_0 : i32, i32
  }
  func.func @transform_12(%arg0: i32, %arg1: i32) -> (i32, i32) {
    %c0_i32 = arith.constant 0 : i32
    %c0_i32_0 = arith.constant 0 : i32
    %c0_i32_1 = arith.constant 0 : i32
    return %c0_i32, %c0_i32_0 : i32, i32
  }
  func.func @transform_13(%arg0: i32, %arg1: i32) -> (i32, i32, i32) {
    %c0_i32 = arith.constant 0 : i32
    %c0_i32_0 = arith.constant 0 : i32
    return %arg0, %arg1, %c0_i32 : i32, i32, i32
  }
}

module attributes {stable_mosaic.version = 11 : i64} {
  func.func @_block_kernel(%arg0: i32, %arg1: i32, %arg2: memref<1x16x128xf32, #tpu.memory_space<vmem>>, %arg3: memref<1x8x128xf32, #tpu.memory_space<vmem>>, %arg4: memref<1x128xf32, #tpu.memory_space<vmem>>, %arg5: memref<1x128xf32, #tpu.memory_space<vmem>>, %arg6: memref<128x1152xbf16, #tpu.memory_space<vmem>>, %arg7: memref<128x128xbf16, #tpu.memory_space<vmem>>, %arg8: memref<1x128xf32, #tpu.memory_space<vmem>>, %arg9: memref<1x128xf32, #tpu.memory_space<vmem>>, %arg10: memref<1x128xf32, #tpu.memory_space<vmem>>, %arg11: memref<128x512xbf16, #tpu.memory_space<vmem>>, %arg12: memref<1x512xf32, #tpu.memory_space<vmem>>, %arg13: memref<512x128xbf16, #tpu.memory_space<vmem>>, %arg14: memref<1x128xf32, #tpu.memory_space<vmem>>, %arg15: memref<1x8x128xf32, #tpu.memory_space<vmem>>) attributes {dimension_semantics = [#tpu.dimension_semantics<parallel>, #tpu.dimension_semantics<parallel>], iteration_bounds = array<i64: 2, 2>, scalar_prefetch = 0 : i64, scratch_operands = 0 : i64, tpu.core_type = #tpu.core_type<tc>, window_params = [{transform_indices = @transform_0, window_bounds = array<i64: 1, 16, 128>}, {transform_indices = @transform_1, window_bounds = array<i64: 1, 8, 128>}, {pipeline_mode = #tpu.pipeline_mode<synchronous>, transform_indices = @transform_2, window_bounds = array<i64: 1, 128>}, {pipeline_mode = #tpu.pipeline_mode<synchronous>, transform_indices = @transform_3, window_bounds = array<i64: 1, 128>}, {pipeline_mode = #tpu.pipeline_mode<synchronous>, transform_indices = @transform_4, window_bounds = array<i64: 128, 1152>}, {pipeline_mode = #tpu.pipeline_mode<synchronous>, transform_indices = @transform_5, window_bounds = array<i64: 128, 128>}, {pipeline_mode = #tpu.pipeline_mode<synchronous>, transform_indices = @transform_6, window_bounds = array<i64: 1, 128>}, {pipeline_mode = #tpu.pipeline_mode<synchronous>, transform_indices = @transform_7, window_bounds = array<i64: 1, 128>}, {pipeline_mode = #tpu.pipeline_mode<synchronous>, transform_indices = @transform_8, window_bounds = array<i64: 1, 128>}, {pipeline_mode = #tpu.pipeline_mode<synchronous>, transform_indices = @transform_9, window_bounds = array<i64: 128, 512>}, {pipeline_mode = #tpu.pipeline_mode<synchronous>, transform_indices = @transform_10, window_bounds = array<i64: 1, 512>}, {pipeline_mode = #tpu.pipeline_mode<synchronous>, transform_indices = @transform_11, window_bounds = array<i64: 512, 128>}, {pipeline_mode = #tpu.pipeline_mode<synchronous>, transform_indices = @transform_12, window_bounds = array<i64: 1, 128>}, {transform_indices = @transform_13, window_bounds = array<i64: 1, 8, 128>}]} {
    %c0 = arith.constant 0 : index
    %c0_0 = arith.constant 0 : index
    %c0_1 = arith.constant 0 : index
    %0 = vector.load %arg2[%c0, %c0_0, %c0_1] : memref<1x16x128xf32, #tpu.memory_space<vmem>>, vector<1x16x128xf32>
    %1 = vector.shape_cast %0 : vector<1x16x128xf32> to vector<16x128xf32>
    %c0_2 = arith.constant 0 : index
    %c0_3 = arith.constant 0 : index
    %c0_4 = arith.constant 0 : index
    %2 = vector.load %arg3[%c0_2, %c0_3, %c0_4] : memref<1x8x128xf32, #tpu.memory_space<vmem>>, vector<1x8x128xf32>
    %3 = vector.shape_cast %2 : vector<1x8x128xf32> to vector<8x128xf32>
    %c0_5 = arith.constant 0 : index
    %c0_6 = arith.constant 0 : index
    %4 = vector.load %arg4[%c0_5, %c0_6] : memref<1x128xf32, #tpu.memory_space<vmem>>, vector<1x128xf32>
    %c0_7 = arith.constant 0 : index
    %c0_8 = arith.constant 0 : index
    %5 = vector.load %arg5[%c0_7, %c0_8] : memref<1x128xf32, #tpu.memory_space<vmem>>, vector<1x128xf32>
    %c0_9 = arith.constant 0 : index
    %c0_10 = arith.constant 0 : index
    %6 = vector.load %arg6[%c0_9, %c0_10] : memref<128x1152xbf16, #tpu.memory_space<vmem>>, vector<128x1152xbf16>
    %c0_11 = arith.constant 0 : index
    %c0_12 = arith.constant 0 : index
    %7 = vector.load %arg7[%c0_11, %c0_12] : memref<128x128xbf16, #tpu.memory_space<vmem>>, vector<128x128xbf16>
    %c0_13 = arith.constant 0 : index
    %c0_14 = arith.constant 0 : index
    %8 = vector.load %arg8[%c0_13, %c0_14] : memref<1x128xf32, #tpu.memory_space<vmem>>, vector<1x128xf32>
    %c0_15 = arith.constant 0 : index
    %c0_16 = arith.constant 0 : index
    %9 = vector.load %arg9[%c0_15, %c0_16] : memref<1x128xf32, #tpu.memory_space<vmem>>, vector<1x128xf32>
    %c0_17 = arith.constant 0 : index
    %c0_18 = arith.constant 0 : index
    %10 = vector.load %arg10[%c0_17, %c0_18] : memref<1x128xf32, #tpu.memory_space<vmem>>, vector<1x128xf32>
    %c0_19 = arith.constant 0 : index
    %c0_20 = arith.constant 0 : index
    %11 = vector.load %arg11[%c0_19, %c0_20] : memref<128x512xbf16, #tpu.memory_space<vmem>>, vector<128x512xbf16>
    %c0_21 = arith.constant 0 : index
    %c0_22 = arith.constant 0 : index
    %12 = vector.load %arg12[%c0_21, %c0_22] : memref<1x512xf32, #tpu.memory_space<vmem>>, vector<1x512xf32>
    %c0_23 = arith.constant 0 : index
    %c0_24 = arith.constant 0 : index
    %13 = vector.load %arg13[%c0_23, %c0_24] : memref<512x128xbf16, #tpu.memory_space<vmem>>, vector<512x128xbf16>
    %c0_25 = arith.constant 0 : index
    %c0_26 = arith.constant 0 : index
    %14 = vector.load %arg14[%c0_25, %c0_26] : memref<1x128xf32, #tpu.memory_space<vmem>>, vector<1x128xf32>
    %15 = vector.extract_strided_slice %1 {offsets = [0, 0], sizes = [16, 32], strides = [1, 1]} : vector<16x128xf32> to vector<16x32xf32>
    %16 = vector.extract_strided_slice %1 {offsets = [0, 32], sizes = [16, 32], strides = [1, 1]} : vector<16x128xf32> to vector<16x32xf32>
    %17 = vector.extract_strided_slice %1 {offsets = [0, 64], sizes = [16, 32], strides = [1, 1]} : vector<16x128xf32> to vector<16x32xf32>
    %18 = vector.extract_strided_slice %1 {offsets = [0, 96], sizes = [16, 32], strides = [1, 1]} : vector<16x128xf32> to vector<16x32xf32>
    %19 = arith.mulf %15, %15 : vector<16x32xf32>
    %20 = arith.mulf %16, %16 : vector<16x32xf32>
    %21 = arith.addf %19, %20 : vector<16x32xf32>
    %22 = arith.mulf %17, %17 : vector<16x32xf32>
    %23 = arith.addf %21, %22 : vector<16x32xf32>
    %24 = arith.mulf %18, %18 : vector<16x32xf32>
    %25 = arith.addf %23, %24 : vector<16x32xf32>
    %cst = arith.constant 9.99999997E-7 : f32
    %26 = vector.broadcast %cst : f32 to vector<16x32xf32>
    %27 = arith.addf %25, %26 : vector<16x32xf32>
    %28 = math.rsqrt %27 : vector<16x32xf32>
    %29 = tpu.concatenate %28, %28, %28, %28 in 1 : vector<16x32xf32>, vector<16x32xf32>, vector<16x32xf32>, vector<16x32xf32> -> vector<16x128xf32>
    %30 = arith.mulf %1, %29 : vector<16x128xf32>
    %31 = vector.broadcast %4 : vector<1x128xf32> to vector<16x128xf32>
    %32 = arith.mulf %30, %31 : vector<16x128xf32>
    %33 = vector.broadcast %5 : vector<1x128xf32> to vector<16x128xf32>
    %34 = arith.addf %32, %33 : vector<16x128xf32>
    %35 = arith.truncf %34 : vector<16x128xf32> to vector<16x128xbf16>
    %36 = vector.extract_strided_slice %3 {offsets = [0, 0], sizes = [8, 32], strides = [1, 1]} : vector<8x128xf32> to vector<8x32xf32>
    %37 = vector.extract_strided_slice %3 {offsets = [0, 32], sizes = [8, 32], strides = [1, 1]} : vector<8x128xf32> to vector<8x32xf32>
    %38 = vector.extract_strided_slice %3 {offsets = [0, 64], sizes = [8, 32], strides = [1, 1]} : vector<8x128xf32> to vector<8x32xf32>
    %39 = vector.extract_strided_slice %3 {offsets = [0, 96], sizes = [8, 32], strides = [1, 1]} : vector<8x128xf32> to vector<8x32xf32>
    %40 = arith.mulf %36, %36 : vector<8x32xf32>
    %41 = arith.mulf %37, %37 : vector<8x32xf32>
    %42 = arith.addf %40, %41 : vector<8x32xf32>
    %43 = arith.mulf %38, %38 : vector<8x32xf32>
    %44 = arith.addf %42, %43 : vector<8x32xf32>
    %45 = arith.mulf %39, %39 : vector<8x32xf32>
    %46 = arith.addf %44, %45 : vector<8x32xf32>
    %cst_27 = arith.constant 9.99999997E-7 : f32
    %47 = vector.broadcast %cst_27 : f32 to vector<8x32xf32>
    %48 = arith.addf %46, %47 : vector<8x32xf32>
    %49 = math.rsqrt %48 : vector<8x32xf32>
    %50 = tpu.concatenate %49, %49, %49, %49 in 1 : vector<8x32xf32>, vector<8x32xf32>, vector<8x32xf32>, vector<8x32xf32> -> vector<8x128xf32>
    %51 = arith.mulf %3, %50 : vector<8x128xf32>
    %52 = vector.broadcast %4 : vector<1x128xf32> to vector<8x128xf32>
    %53 = arith.mulf %51, %52 : vector<8x128xf32>
    %54 = vector.broadcast %5 : vector<1x128xf32> to vector<8x128xf32>
    %55 = arith.addf %53, %54 : vector<8x128xf32>
    %56 = arith.truncf %55 : vector<8x128xf32> to vector<8x128xbf16>
    %57 = vector.extract_strided_slice %6 {offsets = [0, 0], sizes = [128, 128], strides = [1, 1]} : vector<128x1152xbf16> to vector<128x128xbf16>
    %cst_28 = arith.constant dense<0.000000e+00> : vector<8x128xf32>
    %58 = tpu.matmul %56, %57, %cst_28 {dimension_numbers = #tpu.dot_dimension_numbers<[1], [0], [0], [1], [0, 0, 1, 1], [], []>} : vector<8x128xbf16>, vector<128x128xbf16>, vector<8x128xf32> -> vector<8x128xf32>
    %59 = vector.extract_strided_slice %6 {offsets = [0, 128], sizes = [128, 1024], strides = [1, 1]} : vector<128x1152xbf16> to vector<128x1024xbf16>
    %cst_29 = arith.constant dense<0.000000e+00> : vector<16x1024xf32>
    %60 = tpu.matmul %35, %59, %cst_29 {dimension_numbers = #tpu.dot_dimension_numbers<[1], [0], [0], [1], [0, 0, 1, 1], [], []>} : vector<16x128xbf16>, vector<128x1024xbf16>, vector<16x1024xf32> -> vector<16x1024xf32>
    %cst_30 = arith.constant 0.000000e+00 : f32
    %61 = vector.broadcast %cst_30 : f32 to vector<8x128xf32>
    %62 = vector.extract_strided_slice %58 {offsets = [0, 0], sizes = [8, 64], strides = [1, 1]} : vector<8x128xf32> to vector<8x64xf32>
    %63 = arith.truncf %62 : vector<8x64xf32> to vector<8x64xbf16>
    %cst_31 = arith.constant 0.000000e+00 : f32
    %64 = vector.broadcast %cst_31 : f32 to vector<8x64xf32>
    %65 = vector.extract_strided_slice %60 {offsets = [0, 0], sizes = [16, 64], strides = [1, 1]} : vector<16x1024xf32> to vector<16x64xf32>
    %66 = arith.truncf %65 : vector<16x64xf32> to vector<16x64xbf16>
    %67 = vector.extract_strided_slice %60 {offsets = [0, 512], sizes = [16, 64], strides = [1, 1]} : vector<16x1024xf32> to vector<16x64xf32>
    %68 = arith.truncf %67 : vector<16x64xf32> to vector<16x64xbf16>
    %cst_32 = arith.constant dense<0.000000e+00> : vector<8x16xf32>
    %69 = tpu.matmul %63, %66, %cst_32 {dimension_numbers = #tpu.dot_dimension_numbers<[1], [1], [0], [0], [0, 0, 1, 0], [], []>} : vector<8x64xbf16>, vector<16x64xbf16>, vector<8x16xf32> -> vector<8x16xf32>
    %cst_33 = arith.constant dense<0xFF800000> : vector<8xf32>
    %70 = vector.multi_reduction <maximumf>, %69, %cst_33 [1] : vector<8x16xf32> to vector<8xf32>
    %71 = vector.shape_cast %70 : vector<8xf32> to vector<8x1xf32>
    %72 = vector.broadcast %71 : vector<8x1xf32> to vector<8x16xf32>
    %73 = arith.subf %69, %72 : vector<8x16xf32>
    %74 = math.exp %73 : vector<8x16xf32>
    %cst_34 = arith.constant dense<0.000000e+00> : vector<8xf32>
    %75 = vector.multi_reduction <add>, %74, %cst_34 [1] : vector<8x16xf32> to vector<8xf32>
    %76 = vector.shape_cast %75 : vector<8xf32> to vector<8x1xf32>
    %77 = tpu.reciprocal %76 {approx = true} : vector<8x1xf32> -> vector<8x1xf32>
    %78 = vector.broadcast %77 : vector<8x1xf32> to vector<8x16xf32>
    %79 = arith.mulf %74, %78 : vector<8x16xf32>
    %80 = arith.truncf %79 : vector<8x16xf32> to vector<8x16xbf16>
    %cst_35 = arith.constant dense<0.000000e+00> : vector<8x64xf32>
    %81 = tpu.matmul %80, %68, %cst_35 {dimension_numbers = #tpu.dot_dimension_numbers<[1], [0], [0], [1], [0, 0, 1, 1], [], []>} : vector<8x16xbf16>, vector<16x64xbf16>, vector<8x64xf32> -> vector<8x64xf32>
    %82 = arith.addf %64, %81 : vector<8x64xf32>
    %83 = vector.extract_strided_slice %60 {offsets = [0, 128], sizes = [16, 64], strides = [1, 1]} : vector<16x1024xf32> to vector<16x64xf32>
    %84 = arith.truncf %83 : vector<16x64xf32> to vector<16x64xbf16>
    %85 = vector.extract_strided_slice %60 {offsets = [0, 640], sizes = [16, 64], strides = [1, 1]} : vector<16x1024xf32> to vector<16x64xf32>
    %86 = arith.truncf %85 : vector<16x64xf32> to vector<16x64xbf16>
    %cst_36 = arith.constant dense<0.000000e+00> : vector<8x16xf32>
    %87 = tpu.matmul %63, %84, %cst_36 {dimension_numbers = #tpu.dot_dimension_numbers<[1], [1], [0], [0], [0, 0, 1, 0], [], []>} : vector<8x64xbf16>, vector<16x64xbf16>, vector<8x16xf32> -> vector<8x16xf32>
    %cst_37 = arith.constant dense<0xFF800000> : vector<8xf32>
    %88 = vector.multi_reduction <maximumf>, %87, %cst_37 [1] : vector<8x16xf32> to vector<8xf32>
    %89 = vector.shape_cast %88 : vector<8xf32> to vector<8x1xf32>
    %90 = vector.broadcast %89 : vector<8x1xf32> to vector<8x16xf32>
    %91 = arith.subf %87, %90 : vector<8x16xf32>
    %92 = math.exp %91 : vector<8x16xf32>
    %cst_38 = arith.constant dense<0.000000e+00> : vector<8xf32>
    %93 = vector.multi_reduction <add>, %92, %cst_38 [1] : vector<8x16xf32> to vector<8xf32>
    %94 = vector.shape_cast %93 : vector<8xf32> to vector<8x1xf32>
    %95 = tpu.reciprocal %94 {approx = true} : vector<8x1xf32> -> vector<8x1xf32>
    %96 = vector.broadcast %95 : vector<8x1xf32> to vector<8x16xf32>
    %97 = arith.mulf %92, %96 : vector<8x16xf32>
    %98 = arith.truncf %97 : vector<8x16xf32> to vector<8x16xbf16>
    %cst_39 = arith.constant dense<0.000000e+00> : vector<8x64xf32>
    %99 = tpu.matmul %98, %86, %cst_39 {dimension_numbers = #tpu.dot_dimension_numbers<[1], [0], [0], [1], [0, 0, 1, 1], [], []>} : vector<8x16xbf16>, vector<16x64xbf16>, vector<8x64xf32> -> vector<8x64xf32>
    %100 = arith.addf %82, %99 : vector<8x64xf32>
    %101 = vector.extract_strided_slice %60 {offsets = [0, 256], sizes = [16, 64], strides = [1, 1]} : vector<16x1024xf32> to vector<16x64xf32>
    %102 = arith.truncf %101 : vector<16x64xf32> to vector<16x64xbf16>
    %103 = vector.extract_strided_slice %60 {offsets = [0, 768], sizes = [16, 64], strides = [1, 1]} : vector<16x1024xf32> to vector<16x64xf32>
    %104 = arith.truncf %103 : vector<16x64xf32> to vector<16x64xbf16>
    %cst_40 = arith.constant dense<0.000000e+00> : vector<8x16xf32>
    %105 = tpu.matmul %63, %102, %cst_40 {dimension_numbers = #tpu.dot_dimension_numbers<[1], [1], [0], [0], [0, 0, 1, 0], [], []>} : vector<8x64xbf16>, vector<16x64xbf16>, vector<8x16xf32> -> vector<8x16xf32>
    %cst_41 = arith.constant dense<0xFF800000> : vector<8xf32>
    %106 = vector.multi_reduction <maximumf>, %105, %cst_41 [1] : vector<8x16xf32> to vector<8xf32>
    %107 = vector.shape_cast %106 : vector<8xf32> to vector<8x1xf32>
    %108 = vector.broadcast %107 : vector<8x1xf32> to vector<8x16xf32>
    %109 = arith.subf %105, %108 : vector<8x16xf32>
    %110 = math.exp %109 : vector<8x16xf32>
    %cst_42 = arith.constant dense<0.000000e+00> : vector<8xf32>
    %111 = vector.multi_reduction <add>, %110, %cst_42 [1] : vector<8x16xf32> to vector<8xf32>
    %112 = vector.shape_cast %111 : vector<8xf32> to vector<8x1xf32>
    %113 = tpu.reciprocal %112 {approx = true} : vector<8x1xf32> -> vector<8x1xf32>
    %114 = vector.broadcast %113 : vector<8x1xf32> to vector<8x16xf32>
    %115 = arith.mulf %110, %114 : vector<8x16xf32>
    %116 = arith.truncf %115 : vector<8x16xf32> to vector<8x16xbf16>
    %cst_43 = arith.constant dense<0.000000e+00> : vector<8x64xf32>
    %117 = tpu.matmul %116, %104, %cst_43 {dimension_numbers = #tpu.dot_dimension_numbers<[1], [0], [0], [1], [0, 0, 1, 1], [], []>} : vector<8x16xbf16>, vector<16x64xbf16>, vector<8x64xf32> -> vector<8x64xf32>
    %118 = arith.addf %100, %117 : vector<8x64xf32>
    %119 = vector.extract_strided_slice %60 {offsets = [0, 384], sizes = [16, 64], strides = [1, 1]} : vector<16x1024xf32> to vector<16x64xf32>
    %120 = arith.truncf %119 : vector<16x64xf32> to vector<16x64xbf16>
    %121 = vector.extract_strided_slice %60 {offsets = [0, 896], sizes = [16, 64], strides = [1, 1]} : vector<16x1024xf32> to vector<16x64xf32>
    %122 = arith.truncf %121 : vector<16x64xf32> to vector<16x64xbf16>
    %cst_44 = arith.constant dense<0.000000e+00> : vector<8x16xf32>
    %123 = tpu.matmul %63, %120, %cst_44 {dimension_numbers = #tpu.dot_dimension_numbers<[1], [1], [0], [0], [0, 0, 1, 0], [], []>} : vector<8x64xbf16>, vector<16x64xbf16>, vector<8x16xf32> -> vector<8x16xf32>
    %cst_45 = arith.constant dense<0xFF800000> : vector<8xf32>
    %124 = vector.multi_reduction <maximumf>, %123, %cst_45 [1] : vector<8x16xf32> to vector<8xf32>
    %125 = vector.shape_cast %124 : vector<8xf32> to vector<8x1xf32>
    %126 = vector.broadcast %125 : vector<8x1xf32> to vector<8x16xf32>
    %127 = arith.subf %123, %126 : vector<8x16xf32>
    %128 = math.exp %127 : vector<8x16xf32>
    %cst_46 = arith.constant dense<0.000000e+00> : vector<8xf32>
    %129 = vector.multi_reduction <add>, %128, %cst_46 [1] : vector<8x16xf32> to vector<8xf32>
    %130 = vector.shape_cast %129 : vector<8xf32> to vector<8x1xf32>
    %131 = tpu.reciprocal %130 {approx = true} : vector<8x1xf32> -> vector<8x1xf32>
    %132 = vector.broadcast %131 : vector<8x1xf32> to vector<8x16xf32>
    %133 = arith.mulf %128, %132 : vector<8x16xf32>
    %134 = arith.truncf %133 : vector<8x16xf32> to vector<8x16xbf16>
    %cst_47 = arith.constant dense<0.000000e+00> : vector<8x64xf32>
    %135 = tpu.matmul %134, %122, %cst_47 {dimension_numbers = #tpu.dot_dimension_numbers<[1], [0], [0], [1], [0, 0, 1, 1], [], []>} : vector<8x16xbf16>, vector<16x64xbf16>, vector<8x64xf32> -> vector<8x64xf32>
    %136 = arith.addf %118, %135 : vector<8x64xf32>
    %137 = arith.truncf %136 : vector<8x64xf32> to vector<8x64xbf16>
    %138 = vector.extract_strided_slice %7 {offsets = [0, 0], sizes = [64, 128], strides = [1, 1]} : vector<128x128xbf16> to vector<64x128xbf16>
    %cst_48 = arith.constant dense<0.000000e+00> : vector<8x128xf32>
    %139 = tpu.matmul %137, %138, %cst_48 {dimension_numbers = #tpu.dot_dimension_numbers<[1], [0], [0], [1], [0, 0, 1, 1], [], []>} : vector<8x64xbf16>, vector<64x128xbf16>, vector<8x128xf32> -> vector<8x128xf32>
    %140 = arith.addf %61, %139 : vector<8x128xf32>
    %141 = vector.extract_strided_slice %58 {offsets = [0, 64], sizes = [8, 64], strides = [1, 1]} : vector<8x128xf32> to vector<8x64xf32>
    %142 = arith.truncf %141 : vector<8x64xf32> to vector<8x64xbf16>
    %cst_49 = arith.constant 0.000000e+00 : f32
    %143 = vector.broadcast %cst_49 : f32 to vector<8x64xf32>
    %144 = vector.extract_strided_slice %60 {offsets = [0, 64], sizes = [16, 64], strides = [1, 1]} : vector<16x1024xf32> to vector<16x64xf32>
    %145 = arith.truncf %144 : vector<16x64xf32> to vector<16x64xbf16>
    %146 = vector.extract_strided_slice %60 {offsets = [0, 576], sizes = [16, 64], strides = [1, 1]} : vector<16x1024xf32> to vector<16x64xf32>
    %147 = arith.truncf %146 : vector<16x64xf32> to vector<16x64xbf16>
    %cst_50 = arith.constant dense<0.000000e+00> : vector<8x16xf32>
    %148 = tpu.matmul %142, %145, %cst_50 {dimension_numbers = #tpu.dot_dimension_numbers<[1], [1], [0], [0], [0, 0, 1, 0], [], []>} : vector<8x64xbf16>, vector<16x64xbf16>, vector<8x16xf32> -> vector<8x16xf32>
    %cst_51 = arith.constant dense<0xFF800000> : vector<8xf32>
    %149 = vector.multi_reduction <maximumf>, %148, %cst_51 [1] : vector<8x16xf32> to vector<8xf32>
    %150 = vector.shape_cast %149 : vector<8xf32> to vector<8x1xf32>
    %151 = vector.broadcast %150 : vector<8x1xf32> to vector<8x16xf32>
    %152 = arith.subf %148, %151 : vector<8x16xf32>
    %153 = math.exp %152 : vector<8x16xf32>
    %cst_52 = arith.constant dense<0.000000e+00> : vector<8xf32>
    %154 = vector.multi_reduction <add>, %153, %cst_52 [1] : vector<8x16xf32> to vector<8xf32>
    %155 = vector.shape_cast %154 : vector<8xf32> to vector<8x1xf32>
    %156 = tpu.reciprocal %155 {approx = true} : vector<8x1xf32> -> vector<8x1xf32>
    %157 = vector.broadcast %156 : vector<8x1xf32> to vector<8x16xf32>
    %158 = arith.mulf %153, %157 : vector<8x16xf32>
    %159 = arith.truncf %158 : vector<8x16xf32> to vector<8x16xbf16>
    %cst_53 = arith.constant dense<0.000000e+00> : vector<8x64xf32>
    %160 = tpu.matmul %159, %147, %cst_53 {dimension_numbers = #tpu.dot_dimension_numbers<[1], [0], [0], [1], [0, 0, 1, 1], [], []>} : vector<8x16xbf16>, vector<16x64xbf16>, vector<8x64xf32> -> vector<8x64xf32>
    %161 = arith.addf %143, %160 : vector<8x64xf32>
    %162 = vector.extract_strided_slice %60 {offsets = [0, 192], sizes = [16, 64], strides = [1, 1]} : vector<16x1024xf32> to vector<16x64xf32>
    %163 = arith.truncf %162 : vector<16x64xf32> to vector<16x64xbf16>
    %164 = vector.extract_strided_slice %60 {offsets = [0, 704], sizes = [16, 64], strides = [1, 1]} : vector<16x1024xf32> to vector<16x64xf32>
    %165 = arith.truncf %164 : vector<16x64xf32> to vector<16x64xbf16>
    %cst_54 = arith.constant dense<0.000000e+00> : vector<8x16xf32>
    %166 = tpu.matmul %142, %163, %cst_54 {dimension_numbers = #tpu.dot_dimension_numbers<[1], [1], [0], [0], [0, 0, 1, 0], [], []>} : vector<8x64xbf16>, vector<16x64xbf16>, vector<8x16xf32> -> vector<8x16xf32>
    %cst_55 = arith.constant dense<0xFF800000> : vector<8xf32>
    %167 = vector.multi_reduction <maximumf>, %166, %cst_55 [1] : vector<8x16xf32> to vector<8xf32>
    %168 = vector.shape_cast %167 : vector<8xf32> to vector<8x1xf32>
    %169 = vector.broadcast %168 : vector<8x1xf32> to vector<8x16xf32>
    %170 = arith.subf %166, %169 : vector<8x16xf32>
    %171 = math.exp %170 : vector<8x16xf32>
    %cst_56 = arith.constant dense<0.000000e+00> : vector<8xf32>
    %172 = vector.multi_reduction <add>, %171, %cst_56 [1] : vector<8x16xf32> to vector<8xf32>
    %173 = vector.shape_cast %172 : vector<8xf32> to vector<8x1xf32>
    %174 = tpu.reciprocal %173 {approx = true} : vector<8x1xf32> -> vector<8x1xf32>
    %175 = vector.broadcast %174 : vector<8x1xf32> to vector<8x16xf32>
    %176 = arith.mulf %171, %175 : vector<8x16xf32>
    %177 = arith.truncf %176 : vector<8x16xf32> to vector<8x16xbf16>
    %cst_57 = arith.constant dense<0.000000e+00> : vector<8x64xf32>
    %178 = tpu.matmul %177, %165, %cst_57 {dimension_numbers = #tpu.dot_dimension_numbers<[1], [0], [0], [1], [0, 0, 1, 1], [], []>} : vector<8x16xbf16>, vector<16x64xbf16>, vector<8x64xf32> -> vector<8x64xf32>
    %179 = arith.addf %161, %178 : vector<8x64xf32>
    %180 = vector.extract_strided_slice %60 {offsets = [0, 320], sizes = [16, 64], strides = [1, 1]} : vector<16x1024xf32> to vector<16x64xf32>
    %181 = arith.truncf %180 : vector<16x64xf32> to vector<16x64xbf16>
    %182 = vector.extract_strided_slice %60 {offsets = [0, 832], sizes = [16, 64], strides = [1, 1]} : vector<16x1024xf32> to vector<16x64xf32>
    %183 = arith.truncf %182 : vector<16x64xf32> to vector<16x64xbf16>
    %cst_58 = arith.constant dense<0.000000e+00> : vector<8x16xf32>
    %184 = tpu.matmul %142, %181, %cst_58 {dimension_numbers = #tpu.dot_dimension_numbers<[1], [1], [0], [0], [0, 0, 1, 0], [], []>} : vector<8x64xbf16>, vector<16x64xbf16>, vector<8x16xf32> -> vector<8x16xf32>
    %cst_59 = arith.constant dense<0xFF800000> : vector<8xf32>
    %185 = vector.multi_reduction <maximumf>, %184, %cst_59 [1] : vector<8x16xf32> to vector<8xf32>
    %186 = vector.shape_cast %185 : vector<8xf32> to vector<8x1xf32>
    %187 = vector.broadcast %186 : vector<8x1xf32> to vector<8x16xf32>
    %188 = arith.subf %184, %187 : vector<8x16xf32>
    %189 = math.exp %188 : vector<8x16xf32>
    %cst_60 = arith.constant dense<0.000000e+00> : vector<8xf32>
    %190 = vector.multi_reduction <add>, %189, %cst_60 [1] : vector<8x16xf32> to vector<8xf32>
    %191 = vector.shape_cast %190 : vector<8xf32> to vector<8x1xf32>
    %192 = tpu.reciprocal %191 {approx = true} : vector<8x1xf32> -> vector<8x1xf32>
    %193 = vector.broadcast %192 : vector<8x1xf32> to vector<8x16xf32>
    %194 = arith.mulf %189, %193 : vector<8x16xf32>
    %195 = arith.truncf %194 : vector<8x16xf32> to vector<8x16xbf16>
    %cst_61 = arith.constant dense<0.000000e+00> : vector<8x64xf32>
    %196 = tpu.matmul %195, %183, %cst_61 {dimension_numbers = #tpu.dot_dimension_numbers<[1], [0], [0], [1], [0, 0, 1, 1], [], []>} : vector<8x16xbf16>, vector<16x64xbf16>, vector<8x64xf32> -> vector<8x64xf32>
    %197 = arith.addf %179, %196 : vector<8x64xf32>
    %198 = vector.extract_strided_slice %60 {offsets = [0, 448], sizes = [16, 64], strides = [1, 1]} : vector<16x1024xf32> to vector<16x64xf32>
    %199 = arith.truncf %198 : vector<16x64xf32> to vector<16x64xbf16>
    %200 = vector.extract_strided_slice %60 {offsets = [0, 960], sizes = [16, 64], strides = [1, 1]} : vector<16x1024xf32> to vector<16x64xf32>
    %201 = arith.truncf %200 : vector<16x64xf32> to vector<16x64xbf16>
    %cst_62 = arith.constant dense<0.000000e+00> : vector<8x16xf32>
    %202 = tpu.matmul %142, %199, %cst_62 {dimension_numbers = #tpu.dot_dimension_numbers<[1], [1], [0], [0], [0, 0, 1, 0], [], []>} : vector<8x64xbf16>, vector<16x64xbf16>, vector<8x16xf32> -> vector<8x16xf32>
    %cst_63 = arith.constant dense<0xFF800000> : vector<8xf32>
    %203 = vector.multi_reduction <maximumf>, %202, %cst_63 [1] : vector<8x16xf32> to vector<8xf32>
    %204 = vector.shape_cast %203 : vector<8xf32> to vector<8x1xf32>
    %205 = vector.broadcast %204 : vector<8x1xf32> to vector<8x16xf32>
    %206 = arith.subf %202, %205 : vector<8x16xf32>
    %207 = math.exp %206 : vector<8x16xf32>
    %cst_64 = arith.constant dense<0.000000e+00> : vector<8xf32>
    %208 = vector.multi_reduction <add>, %207, %cst_64 [1] : vector<8x16xf32> to vector<8xf32>
    %209 = vector.shape_cast %208 : vector<8xf32> to vector<8x1xf32>
    %210 = tpu.reciprocal %209 {approx = true} : vector<8x1xf32> -> vector<8x1xf32>
    %211 = vector.broadcast %210 : vector<8x1xf32> to vector<8x16xf32>
    %212 = arith.mulf %207, %211 : vector<8x16xf32>
    %213 = arith.truncf %212 : vector<8x16xf32> to vector<8x16xbf16>
    %cst_65 = arith.constant dense<0.000000e+00> : vector<8x64xf32>
    %214 = tpu.matmul %213, %201, %cst_65 {dimension_numbers = #tpu.dot_dimension_numbers<[1], [0], [0], [1], [0, 0, 1, 1], [], []>} : vector<8x16xbf16>, vector<16x64xbf16>, vector<8x64xf32> -> vector<8x64xf32>
    %215 = arith.addf %197, %214 : vector<8x64xf32>
    %216 = arith.truncf %215 : vector<8x64xf32> to vector<8x64xbf16>
    %217 = vector.extract_strided_slice %7 {offsets = [64, 0], sizes = [64, 128], strides = [1, 1]} : vector<128x128xbf16> to vector<64x128xbf16>
    %cst_66 = arith.constant dense<0.000000e+00> : vector<8x128xf32>
    %218 = tpu.matmul %216, %217, %cst_66 {dimension_numbers = #tpu.dot_dimension_numbers<[1], [0], [0], [1], [0, 0, 1, 1], [], []>} : vector<8x64xbf16>, vector<64x128xbf16>, vector<8x128xf32> -> vector<8x128xf32>
    %219 = arith.addf %140, %218 : vector<8x128xf32>
    %220 = arith.addf %3, %219 : vector<8x128xf32>
    %221 = vector.broadcast %8 : vector<1x128xf32> to vector<8x128xf32>
    %222 = arith.addf %220, %221 : vector<8x128xf32>
    %223 = vector.extract_strided_slice %222 {offsets = [0, 0], sizes = [8, 32], strides = [1, 1]} : vector<8x128xf32> to vector<8x32xf32>
    %224 = vector.extract_strided_slice %222 {offsets = [0, 32], sizes = [8, 32], strides = [1, 1]} : vector<8x128xf32> to vector<8x32xf32>
    %225 = vector.extract_strided_slice %222 {offsets = [0, 64], sizes = [8, 32], strides = [1, 1]} : vector<8x128xf32> to vector<8x32xf32>
    %226 = vector.extract_strided_slice %222 {offsets = [0, 96], sizes = [8, 32], strides = [1, 1]} : vector<8x128xf32> to vector<8x32xf32>
    %227 = arith.mulf %223, %223 : vector<8x32xf32>
    %228 = arith.mulf %224, %224 : vector<8x32xf32>
    %229 = arith.addf %227, %228 : vector<8x32xf32>
    %230 = arith.mulf %225, %225 : vector<8x32xf32>
    %231 = arith.addf %229, %230 : vector<8x32xf32>
    %232 = arith.mulf %226, %226 : vector<8x32xf32>
    %233 = arith.addf %231, %232 : vector<8x32xf32>
    %cst_67 = arith.constant 9.99999997E-7 : f32
    %234 = vector.broadcast %cst_67 : f32 to vector<8x32xf32>
    %235 = arith.addf %233, %234 : vector<8x32xf32>
    %236 = math.rsqrt %235 : vector<8x32xf32>
    %237 = tpu.concatenate %236, %236, %236, %236 in 1 : vector<8x32xf32>, vector<8x32xf32>, vector<8x32xf32>, vector<8x32xf32> -> vector<8x128xf32>
    %238 = arith.mulf %222, %237 : vector<8x128xf32>
    %239 = vector.broadcast %9 : vector<1x128xf32> to vector<8x128xf32>
    %240 = arith.mulf %238, %239 : vector<8x128xf32>
    %241 = vector.broadcast %10 : vector<1x128xf32> to vector<8x128xf32>
    %242 = arith.addf %240, %241 : vector<8x128xf32>
    %243 = arith.truncf %242 : vector<8x128xf32> to vector<8x128xbf16>
    %cst_68 = arith.constant dense<0.000000e+00> : vector<8x512xf32>
    %244 = tpu.matmul %243, %11, %cst_68 {dimension_numbers = #tpu.dot_dimension_numbers<[1], [0], [0], [1], [0, 0, 1, 1], [], []>} : vector<8x128xbf16>, vector<128x512xbf16>, vector<8x512xf32> -> vector<8x512xf32>
    %245 = vector.broadcast %12 : vector<1x512xf32> to vector<8x512xf32>
    %246 = arith.addf %244, %245 : vector<8x512xf32>
    %cst_69 = arith.constant 5.000000e-01 : f32
    %247 = vector.broadcast %cst_69 : f32 to vector<8x512xf32>
    %248 = arith.mulf %247, %246 : vector<8x512xf32>
    %cst_70 = arith.constant 4.471500e-02 : f32
    %249 = vector.broadcast %cst_70 : f32 to vector<8x512xf32>
    %250 = arith.mulf %249, %246 : vector<8x512xf32>
    %251 = arith.mulf %250, %246 : vector<8x512xf32>
    %252 = arith.mulf %251, %246 : vector<8x512xf32>
    %253 = arith.addf %246, %252 : vector<8x512xf32>
    %cst_71 = arith.constant 0.797884583 : f32
    %254 = vector.broadcast %cst_71 : f32 to vector<8x512xf32>
    %255 = arith.mulf %254, %253 : vector<8x512xf32>
    %256 = math.tanh %255 : vector<8x512xf32>
    %cst_72 = arith.constant 1.000000e+00 : f32
    %257 = vector.broadcast %cst_72 : f32 to vector<8x512xf32>
    %258 = arith.addf %257, %256 : vector<8x512xf32>
    %259 = arith.mulf %248, %258 : vector<8x512xf32>
    %260 = arith.truncf %259 : vector<8x512xf32> to vector<8x512xbf16>
    %cst_73 = arith.constant dense<0.000000e+00> : vector<8x128xf32>
    %261 = tpu.matmul %260, %13, %cst_73 {dimension_numbers = #tpu.dot_dimension_numbers<[1], [0], [0], [1], [0, 0, 1, 1], [], []>} : vector<8x512xbf16>, vector<512x128xbf16>, vector<8x128xf32> -> vector<8x128xf32>
    %262 = vector.broadcast %14 : vector<1x128xf32> to vector<8x128xf32>
    %263 = arith.addf %261, %262 : vector<8x128xf32>
    %264 = arith.addf %222, %263 : vector<8x128xf32>
    %c0_74 = arith.constant 0 : index
    %c0_75 = arith.constant 0 : index
    %c0_76 = arith.constant 0 : index
    %265 = vector.load %arg15[%c0_74, %c0_75, %c0_76] : memref<1x8x128xf32, #tpu.memory_space<vmem>>, vector<1x8x128xf32>
    %266 = vector.shape_cast %265 : vector<1x8x128xf32> to vector<8x128xf32>
    %267 = vector.shape_cast %264 : vector<8x128xf32> to vector<1x8x128xf32>
    tpu.vector_store %arg15[%c0_74, %c0_75, %c0_76], %267 {strides = array<i32>} : memref<1x8x128xf32, #tpu.memory_space<vmem>>, vector<1x8x128xf32>,
    return
  }
  func.func @transform_0(%arg0: i32, %arg1: i32) -> (i32, i32, i32) {
    %c0_i32 = arith.constant 0 : i32
    %c0_i32_0 = arith.constant 0 : i32
    %c0_i32_1 = arith.constant 0 : i32
    return %arg0, %c0_i32, %c0_i32_0 : i32, i32, i32
  }
  func.func @transform_1(%arg0: i32, %arg1: i32) -> (i32, i32, i32) {
    %c0_i32 = arith.constant 0 : i32
    %c0_i32_0 = arith.constant 0 : i32
    return %arg0, %arg1, %c0_i32 : i32, i32, i32
  }
  func.func @transform_2(%arg0: i32, %arg1: i32) -> (i32, i32) {
    %c0_i32 = arith.constant 0 : i32
    %c0_i32_0 = arith.constant 0 : i32
    %c0_i32_1 = arith.constant 0 : i32
    return %c0_i32, %c0_i32_0 : i32, i32
  }
  func.func @transform_3(%arg0: i32, %arg1: i32) -> (i32, i32) {
    %c0_i32 = arith.constant 0 : i32
    %c0_i32_0 = arith.constant 0 : i32
    %c0_i32_1 = arith.constant 0 : i32
    return %c0_i32, %c0_i32_0 : i32, i32
  }
  func.func @transform_4(%arg0: i32, %arg1: i32) -> (i32, i32) {
    %c0_i32 = arith.constant 0 : i32
    %c0_i32_0 = arith.constant 0 : i32
    %c0_i32_1 = arith.constant 0 : i32
    return %c0_i32, %c0_i32_0 : i32, i32
  }
  func.func @transform_5(%arg0: i32, %arg1: i32) -> (i32, i32) {
    %c0_i32 = arith.constant 0 : i32
    %c0_i32_0 = arith.constant 0 : i32
    %c0_i32_1 = arith.constant 0 : i32
    return %c0_i32, %c0_i32_0 : i32, i32
  }
  func.func @transform_6(%arg0: i32, %arg1: i32) -> (i32, i32) {
    %c0_i32 = arith.constant 0 : i32
    %c0_i32_0 = arith.constant 0 : i32
    %c0_i32_1 = arith.constant 0 : i32
    return %c0_i32, %c0_i32_0 : i32, i32
  }
  func.func @transform_7(%arg0: i32, %arg1: i32) -> (i32, i32) {
    %c0_i32 = arith.constant 0 : i32
    %c0_i32_0 = arith.constant 0 : i32
    %c0_i32_1 = arith.constant 0 : i32
    return %c0_i32, %c0_i32_0 : i32, i32
  }
  func.func @transform_8(%arg0: i32, %arg1: i32) -> (i32, i32) {
    %c0_i32 = arith.constant 0 : i32
    %c0_i32_0 = arith.constant 0 : i32
    %c0_i32_1 = arith.constant 0 : i32
    return %c0_i32, %c0_i32_0 : i32, i32
  }
  func.func @transform_9(%arg0: i32, %arg1: i32) -> (i32, i32) {
    %c0_i32 = arith.constant 0 : i32
    %c0_i32_0 = arith.constant 0 : i32
    %c0_i32_1 = arith.constant 0 : i32
    return %c0_i32, %c0_i32_0 : i32, i32
  }
  func.func @transform_10(%arg0: i32, %arg1: i32) -> (i32, i32) {
    %c0_i32 = arith.constant 0 : i32
    %c0_i32_0 = arith.constant 0 : i32
    %c0_i32_1 = arith.constant 0 : i32
    return %c0_i32, %c0_i32_0 : i32, i32
  }
  func.func @transform_11(%arg0: i32, %arg1: i32) -> (i32, i32) {
    %c0_i32 = arith.constant 0 : i32
    %c0_i32_0 = arith.constant 0 : i32
    %c0_i32_1 = arith.constant 0 : i32
    return %c0_i32, %c0_i32_0 : i32, i32
  }
  func.func @transform_12(%arg0: i32, %arg1: i32) -> (i32, i32) {
    %c0_i32 = arith.constant 0 : i32
    %c0_i32_0 = arith.constant 0 : i32
    %c0_i32_1 = arith.constant 0 : i32
    return %c0_i32, %c0_i32_0 : i32, i32
  }
  func.func @transform_13(%arg0: i32, %arg1: i32) -> (i32, i32, i32) {
    %c0_i32 = arith.constant 0 : i32
    %c0_i32_0 = arith.constant 0 : i32
    return %arg0, %arg1, %c0_i32 : i32, i32, i32
  }
}

</mosaic_0001>

<llo_original>
// kernel: tpu_custom_call.1
$region0: #{tpu_custom_call.1}
  #allocation0 [shape = 'u32[]', space=smem, size = 0x4, offset = 0x4, fixed_abs, tag = 'smem constant byte address 0x4 - core index']
  #allocation1 [shape = 'u32[72,128]{1,0:T(1,128)}', space=vmem, size = 0x9000, scoped, tag = 'internal scratch']
  %s0 = inlined_call_operand.hbm [shape: f32[2,16,128], index: 0, kind: input, shape index: {}]
  %s1 = inlined_call_operand.hbm [shape: f32[2,16,128], index: 1, kind: input, shape index: {}]
  %s2 = inlined_call_operand.vmem [shape: f32[1,128], index: 2, kind: input, shape index: {}]
  %s3 = inlined_call_operand.vmem [shape: f32[1,128], index: 3, kind: input, shape index: {}]
  %s4 = inlined_call_operand.hbm [shape: bf16[128,1152], index: 4, kind: input, shape index: {}]
  %s5 = inlined_call_operand.hbm [shape: bf16[128,128], index: 5, kind: input, shape index: {}]
  %s6 = inlined_call_operand.vmem [shape: f32[1,128], index: 6, kind: input, shape index: {}]
  %s7 = inlined_call_operand.hbm [shape: f32[1,128], index: 7, kind: input, shape index: {}]
  %s8 = inlined_call_operand.hbm [shape: f32[1,128], index: 8, kind: input, shape index: {}]
  %s9 = inlined_call_operand.hbm [shape: bf16[128,512], index: 9, kind: input, shape index: {}]
  %s10 = inlined_call_operand.vmem [shape: f32[1,512], index: 10, kind: input, shape index: {}]
  %s11 = inlined_call_operand.hbm [shape: bf16[512,128], index: 11, kind: input, shape index: {}]
  %s12 = inlined_call_operand.vmem [shape: f32[1,128], index: 12, kind: input, shape index: {}]
  %s13 = inlined_call_operand.hbm [shape: f32[2,16,128], index: 13, kind: output, shape index: {}]
  %s14 = sld [smem:[#allocation0]]
  $region117: #{tpu_custom_call.1} parent=0
    _
  %s16 = ssub.s32 1, %s14
  %s17 = scalar_select 0, %s16, %s14
  $region1: #{tpu_custom_call.1} parent=0
    #allocation2 [shape = 'u8[16384]{0}', space=vmem, size = 0x4000, scoped, tag = 'input window, operand 0']
    #allocation3 [shape = 's32[2]{0}', space=sflag, size = 0x8, scoped, tag = 'scoped memory for tpu_custom_call.1']
    #allocation4 [shape = 's32[2]{0}', space=sflag, size = 0x8, scoped, tag = 'scoped memory for tpu_custom_call.1']
    #allocation5 [shape = 'u8[8192]{0}', space=vmem, size = 0x2000, scoped, tag = 'input window, operand 1']
    #allocation6 [shape = 's32[2]{0}', space=sflag, size = 0x8, scoped, tag = 'scoped memory for tpu_custom_call.1']
    #allocation7 [shape = 'u8[294912]{0}', space=vmem, size = 0x48000, scoped, tag = 'input window, operand 4, single buffered']
    #allocation8 [shape = 'u8[32768]{0}', space=vmem, size = 0x8000, scoped, tag = 'input window, operand 5, single buffered']
    #allocation9 [shape = 's32[1]{0}', space=sflag, size = 0x4, scoped, tag = 'scoped memory for tpu_custom_call.1']
    #allocation10 [shape = 'u8[512]{0}', space=vmem, size = 0x400, scoped, tag = 'input window, operand 7, single buffered']
    #allocation11 [shape = 'u8[512]{0}', space=vmem, size = 0x400, scoped, tag = 'input window, operand 8, single buffered']
    #allocation12 [shape = 's32[1]{0}', space=sflag, size = 0x4, scoped, tag = 'scoped memory for tpu_custom_call.1']
    #allocation13 [shape = 'u8[131072]{0}', space=vmem, size = 0x20000, scoped, tag = 'input window, operand 9, single buffered']
    #allocation14 [shape = 'u8[131072]{0}', space=vmem, size = 0x20000, scoped, tag = 'input window, operand 11, single buffered']
    #allocation15 [shape = 's32[1]{0}', space=sflag, size = 0x4, scoped, tag = 'scoped memory for tpu_custom_call.1']
    #allocation16 [shape = 'u8[8192]{0}', space=vmem, size = 0x2000, scoped, tag = 'output window, operand 0']
    %18 = vsyncpa [#allocation3], 0
    %s19 = scalar_lea.sflag [#allocation3], 1
    %20 = vsyncpa %s19, 0
    %21 = vsyncpa [#allocation6], 0
    %s22 = scalar_lea.sflag [#allocation6], 1
    %23 = vsyncpa %s22, 0
    %24 = vsyncpa [#allocation9], 0
    %25 = vsyncpa [#allocation12], 0
    %26 = vsyncpa [#allocation15], 0
    %27 = vsyncpa [#allocation4], 0
    %s28 = scalar_lea.sflag [#allocation4], 1
    %29 = vsyncpa %s28, 0
    loop: start=0, step=1, limit=6
    $region2: #{tpu_custom_call.1} parent=1 // loop_pre_header
      _
    $region3: #{tpu_custom_call.1} parent=1 // loop_header
      %s31 = sphi 0, %s35
      %p32 = scmp.ge.s32.totalorder %s31, 6
      %s38 = sphi 0, %s50
      %s39 = sphi 0, %s46
      %s40 = sphi 0, %s38
      %s41 = sphi 0, %s39
      %s42 = sphi 0, %s40
      %s43 = sphi 0, %s41
      %s53 = sphi 0, %s55
      %s56 = sphi 0, %s53
      %s57 = sphi 0, %s56
      %s73 = sphi 0, %s57
      %s81 = sphi 0, %s83
      %s84 = sphi 0, %s81
      %s85 = sphi 0, %s84
      %s101 = sphi 0, %s85
      %s105 = sphi 0, %s105
      %s107 = sphi 0, %s105
      %s108 = sphi 0, %s107
      %s122 = sphi 0, %s108
      %s126 = sphi 0, %s126
      %s128 = sphi 0, %s126
      %s129 = sphi 0, %s128
      %s143 = sphi 0, %s129
      %s147 = sphi 0, %s147
      %s149 = sphi 0, %s147
      %s150 = sphi 0, %s149
      %s164 = sphi 0, %s150
      %s168 = sphi 0, %s168
      %s170 = sphi 0, %s168
      %s171 = sphi 0, %s170
      %s185 = sphi 0, %s171
      %s189 = sphi 0, %s189
      %s191 = sphi 0, %s189
      %s192 = sphi 0, %s191
      %s206 = sphi 0, %s192
      %s210 = sphi 0, %s210
      %s212 = sphi 0, %s210
      %s213 = sphi 0, %s212
      %s227 = sphi 0, %s213
      %s231 = sphi 0, %s231
      %s233 = sphi 0, %s231
      %s234 = sphi 0, %s233
      %s248 = sphi 0, %s234
      %s252 = sphi 0, %s252
      %s254 = sphi 0, %s252
      %s255 = sphi 0, %s254
      %s269 = sphi 0, %s255
      %s273 = sphi 0, %s273
      %s275 = sphi 0, %s273
      %s276 = sphi 0, %s275
      %s290 = sphi 0, %s276
      %s294 = sphi 0, %s294
      %s296 = sphi 0, %s294
      %s297 = sphi 0, %s296
      %s311 = sphi 0, %s297
      %s315 = sphi 0, %s315
      %s317 = sphi 0, %s315
      %s318 = sphi 0, %s317
      %s332 = sphi 0, %s318
      %s340 = sphi 0, %s342
      %s343 = sphi 0, %s340
      %s344 = sphi 0, %s343
      %s360 = sphi 0, %s344
    $region4: #{tpu_custom_call.1} parent=1 // loop_header_branch
      %34 = sbr.rel (%p32) target = $region8
    $region5: #{tpu_custom_call.1} parent=1 // loop_body
      %s36 = ssub.s32 %s31, 1
      %s37 = ssub.s32 %s31, 2
      %s44 = sadd.s32 1, %s39
      %p45 = scmp.ge.s32.totalorder %s44, 2
      %s46 = scalar_select %p45, 0, %s44
      %s47 = sadd.s32 1, %s38
      %s48 = scalar_select %p45, %s47, %s38
      %p49 = scmp.ge.s32.totalorder %s48, 2
      %s50 = scalar_select %p49, 0, %s48
      %s51 = ssub.s32 %s38, %s50
      %p52 = scmp.eq.s32.totalorder %s51, 0
      %s54 = sadd.s32 %s53, 1
      %s55 = scalar_select %p52, %s53, %s54
      %p58 = pneg %p52
      %p59 = scmp.eq.s32.totalorder %s31, 3
      %p60 = por %p58, %p59
      %p61 = scmp.ne.s32.totalorder %s53, %s56
      %p62 = scmp.eq.s32.totalorder %s31, 0
      %p63 = por %p61, %p62
      %p64 = scmp.ne.s32.totalorder %s53, %s56
      %p65 = scmp.eq.s32.totalorder %s36, 3
      %p66 = por %p64, %p65
      %p67 = scmp.ne.s32.totalorder %s56, %s57
      %p68 = scmp.eq.s32.totalorder %s36, 0
      %p69 = por %p67, %p68
      %p70 = scmp.ne.s32.totalorder %s56, %s57
      %p71 = scmp.eq.s32.totalorder %s37, 3
      %p72 = por %p70, %p71
      %p74 = scmp.ne.s32.totalorder %s57, %s73
      %p75 = scmp.eq.s32.totalorder %s37, 0
      %p76 = por %p74, %p75
      %s77 = ssub.s32 %s38, %s50
      %s78 = ssub.s32 %s39, %s46
      %s79 = sor.u32 %s77, %s78
      %p80 = scmp.eq.s32.totalorder %s79, 0
      %s82 = sadd.s32 %s81, 1
      %s83 = scalar_select %p80, %s81, %s82
      %p86 = pneg %p80
      %p87 = scmp.eq.s32.totalorder %s31, 3
      %p88 = por %p86, %p87
      %p89 = scmp.ne.s32.totalorder %s81, %s84
      %p90 = scmp.eq.s32.totalorder %s31, 0
      %p91 = por %p89, %p90
      %p92 = scmp.ne.s32.totalorder %s81, %s84
      %p93 = scmp.eq.s32.totalorder %s36, 3
      %p94 = por %p92, %p93
      %p95 = scmp.ne.s32.totalorder %s84, %s85
      %p96 = scmp.eq.s32.totalorder %s36, 0
      %p97 = por %p95, %p96
      %p98 = scmp.ne.s32.totalorder %s84, %s85
      %p99 = scmp.eq.s32.totalorder %s37, 3
      %p100 = por %p98, %p99
      %p102 = scmp.ne.s32.totalorder %s85, %s101
      %p103 = scmp.eq.s32.totalorder %s37, 0
      %p104 = por %p102, %p103
      %s106 = sadd.s32 %s105, 1
      %p109 = scmp.eq.s32.totalorder %s31, 3
      %p110 = scmp.ne.s32.totalorder %s105, %s107
      %p111 = scmp.eq.s32.totalorder %s31, 0
      %p112 = por %p110, %p111
      %p113 = scmp.ne.s32.totalorder %s105, %s107
      %p114 = scmp.eq.s32.totalorder %s36, 3
      %p115 = por %p113, %p114
      %p116 = scmp.ne.s32.totalorder %s107, %s108
      %p117 = scmp.eq.s32.totalorder %s36, 0
      %p118 = por %p116, %p117
      %p119 = scmp.ne.s32.totalorder %s107, %s108
      %p120 = scmp.eq.s32.totalorder %s37, 3
      %p121 = por %p119, %p120
      %p123 = scmp.ne.s32.totalorder %s108, %s122
      %p124 = scmp.eq.s32.totalorder %s37, 0
      %p125 = por %p123, %p124
      %s127 = sadd.s32 %s126, 1
      %p130 = scmp.eq.s32.totalorder %s31, 3
      %p131 = scmp.ne.s32.totalorder %s126, %s128
      %p132 = scmp.eq.s32.totalorder %s31, 0
      %p133 = por %p131, %p132
      %p134 = scmp.ne.s32.totalorder %s126, %s128
      %p135 = scmp.eq.s32.totalorder %s36, 3
      %p136 = por %p134, %p135
      %p137 = scmp.ne.s32.totalorder %s128, %s129
      %p138 = scmp.eq.s32.totalorder %s36, 0
      %p139 = por %p137, %p138
      %p140 = scmp.ne.s32.totalorder %s128, %s129
      %p141 = scmp.eq.s32.totalorder %s37, 3
      %p142 = por %p140, %p141
      %p144 = scmp.ne.s32.totalorder %s129, %s143
      %p145 = scmp.eq.s32.totalorder %s37, 0
      %p146 = por %p144, %p145
      %s148 = sadd.s32 %s147, 1
      %p151 = scmp.eq.s32.totalorder %s31, 3
      %p152 = scmp.ne.s32.totalorder %s147, %s149
      %p153 = scmp.eq.s32.totalorder %s31, 0
      %p154 = por %p152, %p153
      %p155 = scmp.ne.s32.totalorder %s147, %s149
      %p156 = scmp.eq.s32.totalorder %s36, 3
      %p157 = por %p155, %p156
      %p158 = scmp.ne.s32.totalorder %s149, %s150
      %p159 = scmp.eq.s32.totalorder %s36, 0
      %p160 = por %p158, %p159
      %p161 = scmp.ne.s32.totalorder %s149, %s150
      %p162 = scmp.eq.s32.totalorder %s37, 3
      %p163 = por %p161, %p162
      %p165 = scmp.ne.s32.totalorder %s150, %s164
      %p166 = scmp.eq.s32.totalorder %s37, 0
      %p167 = por %p165, %p166
      %s169 = sadd.s32 %s168, 1
      %p172 = scmp.eq.s32.totalorder %s31, 3
      %p173 = scmp.ne.s32.totalorder %s168, %s170
      %p174 = scmp.eq.s32.totalorder %s31, 0
      %p175 = por %p173, %p174
      %p176 = scmp.ne.s32.totalorder %s168, %s170
      %p177 = scmp.eq.s32.totalorder %s36, 3
      %p178 = por %p176, %p177
      %p179 = scmp.ne.s32.totalorder %s170, %s171
      %p180 = scmp.eq.s32.totalorder %s36, 0
      %p181 = por %p179, %p180
      %p182 = scmp.ne.s32.totalorder %s170, %s171
      %p183 = scmp.eq.s32.totalorder %s37, 3
      %p184 = por %p182, %p183
      %p186 = scmp.ne.s32.totalorder %s171, %s185
      %p187 = scmp.eq.s32.totalorder %s37, 0
      %p188 = por %p186, %p187
      %s190 = sadd.s32 %s189, 1
      %p193 = scmp.eq.s32.totalorder %s31, 3
      %p194 = scmp.ne.s32.totalorder %s189, %s191
      %p195 = scmp.eq.s32.totalorder %s31, 0
      %p196 = por %p194, %p195
      %p197 = scmp.ne.s32.totalorder %s189, %s191
      %p198 = scmp.eq.s32.totalorder %s36, 3
      %p199 = por %p197, %p198
      %p200 = scmp.ne.s32.totalorder %s191, %s192
      %p201 = scmp.eq.s32.totalorder %s36, 0
      %p202 = por %p200, %p201
      %p203 = scmp.ne.s32.totalorder %s191, %s192
      %p204 = scmp.eq.s32.totalorder %s37, 3
      %p205 = por %p203, %p204
      %p207 = scmp.ne.s32.totalorder %s192, %s206
      %p208 = scmp.eq.s32.totalorder %s37, 0
      %p209 = por %p207, %p208
      %s211 = sadd.s32 %s210, 1
      %p214 = scmp.eq.s32.totalorder %s31, 3
      %p215 = scmp.ne.s32.totalorder %s210, %s212
      %p216 = scmp.eq.s32.totalorder %s31, 0
      %p217 = por %p215, %p216
      %p218 = scmp.ne.s32.totalorder %s210, %s212
      %p219 = scmp.eq.s32.totalorder %s36, 3
      %p220 = por %p218, %p219
      %p221 = scmp.ne.s32.totalorder %s212, %s213
      %p222 = scmp.eq.s32.totalorder %s36, 0
      %p223 = por %p221, %p222
      %p224 = scmp.ne.s32.totalorder %s212, %s213
      %p225 = scmp.eq.s32.totalorder %s37, 3
      %p226 = por %p224, %p225
      %p228 = scmp.ne.s32.totalorder %s213, %s227
      %p229 = scmp.eq.s32.totalorder %s37, 0
      %p230 = por %p228, %p229
      %s232 = sadd.s32 %s231, 1
      %p235 = scmp.eq.s32.totalorder %s31, 3
      %p236 = scmp.ne.s32.totalorder %s231, %s233
      %p237 = scmp.eq.s32.totalorder %s31, 0
      %p238 = por %p236, %p237
      %p239 = scmp.ne.s32.totalorder %s231, %s233
      %p240 = scmp.eq.s32.totalorder %s36, 3
      %p241 = por %p239, %p240
      %p242 = scmp.ne.s32.totalorder %s233, %s234
      %p243 = scmp.eq.s32.totalorder %s36, 0
      %p244 = por %p242, %p243
      %p245 = scmp.ne.s32.totalorder %s233, %s234
      %p246 = scmp.eq.s32.totalorder %s37, 3
      %p247 = por %p245, %p246
      %p249 = scmp.ne.s32.totalorder %s234, %s248
      %p250 = scmp.eq.s32.totalorder %s37, 0
      %p251 = por %p249, %p250
      %s253 = sadd.s32 %s252, 1
      %p256 = scmp.eq.s32.totalorder %s31, 3
      %p257 = scmp.ne.s32.totalorder %s252, %s254
      %p258 = scmp.eq.s32.totalorder %s31, 0
      %p259 = por %p257, %p258
      %p260 = scmp.ne.s32.totalorder %s252, %s254
      %p261 = scmp.eq.s32.totalorder %s36, 3
      %p262 = por %p260, %p261
      %p263 = scmp.ne.s32.totalorder %s254, %s255
      %p264 = scmp.eq.s32.totalorder %s36, 0
      %p265 = por %p263, %p264
      %p266 = scmp.ne.s32.totalorder %s254, %s255
      %p267 = scmp.eq.s32.totalorder %s37, 3
      %p268 = por %p266, %p267
      %p270 = scmp.ne.s32.totalorder %s255, %s269
      %p271 = scmp.eq.s32.totalorder %s37, 0
      %p272 = por %p270, %p271
      %s274 = sadd.s32 %s273, 1
      %p277 = scmp.eq.s32.totalorder %s31, 3
      %p278 = scmp.ne.s32.totalorder %s273, %s275
      %p279 = scmp.eq.s32.totalorder %s31, 0
      %p280 = por %p278, %p279
      %p281 = scmp.ne.s32.totalorder %s273, %s275
      %p282 = scmp.eq.s32.totalorder %s36, 3
      %p283 = por %p281, %p282
      %p284 = scmp.ne.s32.totalorder %s275, %s276
      %p285 = scmp.eq.s32.totalorder %s36, 0
      %p286 = por %p284, %p285
      %p287 = scmp.ne.s32.totalorder %s275, %s276
      %p288 = scmp.eq.s32.totalorder %s37, 3
      %p289 = por %p287, %p288
      %p291 = scmp.ne.s32.totalorder %s276, %s290
      %p292 = scmp.eq.s32.totalorder %s37, 0
      %p293 = por %p291, %p292
      %s295 = sadd.s32 %s294, 1
      %p298 = scmp.eq.s32.totalorder %s31, 3
      %p299 = scmp.ne.s32.totalorder %s294, %s296
      %p300 = scmp.eq.s32.totalorder %s31, 0
      %p301 = por %p299, %p300
      %p302 = scmp.ne.s32.totalorder %s294, %s296
      %p303 = scmp.eq.s32.totalorder %s36, 3
      %p304 = por %p302, %p303
      %p305 = scmp.ne.s32.totalorder %s296, %s297
      %p306 = scmp.eq.s32.totalorder %s36, 0
      %p307 = por %p305, %p306
      %p308 = scmp.ne.s32.totalorder %s296, %s297
      %p309 = scmp.eq.s32.totalorder %s37, 3
      %p310 = por %p308, %p309
      %p312 = scmp.ne.s32.totalorder %s297, %s311
      %p313 = scmp.eq.s32.totalorder %s37, 0
      %p314 = por %p312, %p313
      %s316 = sadd.s32 %s315, 1
      %p319 = scmp.eq.s32.totalorder %s31, 3
      %p320 = scmp.ne.s32.totalorder %s315, %s317
      %p321 = scmp.eq.s32.totalorder %s31, 0
      %p322 = por %p320, %p321
      %p323 = scmp.ne.s32.totalorder %s315, %s317
      %p324 = scmp.eq.s32.totalorder %s36, 3
      %p325 = por %p323, %p324
      %p326 = scmp.ne.s32.totalorder %s317, %s318
      %p327 = scmp.eq.s32.totalorder %s36, 0
      %p328 = por %p326, %p327
      %p329 = scmp.ne.s32.totalorder %s317, %s318
      %p330 = scmp.eq.s32.totalorder %s37, 3
      %p331 = por %p329, %p330
      %p333 = scmp.ne.s32.totalorder %s318, %s332
      %p334 = scmp.eq.s32.totalorder %s37, 0
      %p335 = por %p333, %p334
      %s336 = ssub.s32 %s38, %s50
      %s337 = ssub.s32 %s39, %s46
      %s338 = sor.u32 %s336, %s337
      %p339 = scmp.eq.s32.totalorder %s338, 0
      %s341 = sadd.s32 %s340, 1
      %s342 = scalar_select %p339, %s340, %s341
      %p345 = pneg %p339
      %p346 = scmp.eq.s32.totalorder %s31, 3
      %p347 = por %p345, %p346
      %p348 = scmp.ne.s32.totalorder %s340, %s343
      %p349 = scmp.eq.s32.totalorder %s31, 0
      %p350 = por %p348, %p349
      %p351 = scmp.ne.s32.totalorder %s340, %s343
      %p352 = scmp.eq.s32.totalorder %s36, 3
      %p353 = por %p351, %p352
      %p354 = scmp.ne.s32.totalorder %s343, %s344
      %p355 = scmp.eq.s32.totalorder %s36, 0
      %p356 = por %p354, %p355
      %p357 = scmp.ne.s32.totalorder %s343, %s344
      %p358 = scmp.eq.s32.totalorder %s37, 3
      %p359 = por %p357, %p358
      %p361 = scmp.ne.s32.totalorder %s344, %s360
      %p362 = scmp.eq.s32.totalorder %s37, 0
      %p363 = por %p361, %p362
      %p364 = scmp.le.s32.totalorder 1, %s31
      %p365 = scmp.lt.s32.totalorder %s31, 5
      %p366 = pnand %p364, %p365
      %p367 = pneg %p366
      // Predicated region
      $region9: #{tpu_custom_call.1} parent=5 // pred_check
        _
      $region10: #{tpu_custom_call.1} parent=5 // pred_check_branch
        %369 = sbr.rel (%p366) target = $region12
      $region11: #{tpu_custom_call.1} parent=5 // pred_region
        %s370 = ssub.s32 %s31, 1
        // Predicated region
        $region13: #{tpu_custom_call.1} parent=11 // pred_check
          %p371 = pneg %p118
        $region14: #{tpu_custom_call.1} parent=11 // pred_check_branch
          %373 = sbr.rel (%p371) target = $region16
        $region15: #{tpu_custom_call.1} parent=11 // pred_region
          _
        $region16: #{tpu_custom_call.1} parent=11 // pred_fallthru
          _
        // Predicated region
        $region17: #{tpu_custom_call.1} parent=11 // pred_check
          %p374 = pneg %p139
        $region18: #{tpu_custom_call.1} parent=11 // pred_check_branch
          %376 = sbr.rel (%p374) target = $region20
        $region19: #{tpu_custom_call.1} parent=11 // pred_region
          _
        $region20: #{tpu_custom_call.1} parent=11 // pred_fallthru
          _
        // Predicated region
        $region21: #{tpu_custom_call.1} parent=11 // pred_check
          %p377 = pneg %p160
        $region22: #{tpu_custom_call.1} parent=11 // pred_check_branch
          %379 = sbr.rel (%p377) target = $region24
        $region23: #{tpu_custom_call.1} parent=11 // pred_region
          %381 = vsyncadd [#allocation6], 0
          %s382 = sshll.u32 %s4, 4
          %s383 = int_to_ptr.hbm [resolvable:$true] %s382
          %s384 = sshll.u32 [#allocation7], 4
          %s385 = int_to_ptr.vmem [resolvable:$true] %s384
          %390 = dma.hbm_to_vmem [thread:$0]  %s383, 9216, %s385, [#allocation6], 576, 576, 36
        $region24: #{tpu_custom_call.1} parent=11 // pred_fallthru
          _
        // Predicated region
        $region25: #{tpu_custom_call.1} parent=11 // pred_check
          %p391 = pneg %p181
        $region26: #{tpu_custom_call.1} parent=11 // pred_check_branch
          %393 = sbr.rel (%p391) target = $region28
        $region27: #{tpu_custom_call.1} parent=11 // pred_region
          %395 = vsyncadd [#allocation9], 0
          %s396 = sshll.u32 %s5, 4
          %s397 = int_to_ptr.hbm [resolvable:$true] %s396
          %s398 = sshll.u32 [#allocation8], 4
          %s399 = int_to_ptr.vmem [resolvable:$true] %s398
          %404 = dma.hbm_to_vmem [thread:$0]  %s397, 1024, %s399, [#allocation9], 64, 64, 4
        $region28: #{tpu_custom_call.1} parent=11 // pred_fallthru
          _
        // Predicated region
        $region29: #{tpu_custom_call.1} parent=11 // pred_check
          %p405 = pneg %p202
        $region30: #{tpu_custom_call.1} parent=11 // pred_check_branch
          %407 = sbr.rel (%p405) target = $region32
        $region31: #{tpu_custom_call.1} parent=11 // pred_region
          _
        $region32: #{tpu_custom_call.1} parent=11 // pred_fallthru
          _
        // Predicated region
        $region33: #{tpu_custom_call.1} parent=11 // pred_check
          %p408 = pneg %p223
        $region34: #{tpu_custom_call.1} parent=11 // pred_check_branch
          %410 = sbr.rel (%p408) target = $region36
        $region35: #{tpu_custom_call.1} parent=11 // pred_region
          %412 = vsyncadd [#allocation9], 0
          %s414 = sshll.u32 %s7, 4
          %s415 = int_to_ptr.hbm [resolvable:$true] %s414
          %s416 = sshll.u32 [#allocation10], 4
          %s417 = int_to_ptr.vmem [resolvable:$true] %s416
          %419 = dma.hbm_to_vmem [thread:$0]  %s415, 16, %s417, [#allocation9]
        $region36: #{tpu_custom_call.1} parent=11 // pred_fallthru
          _
        // Predicated region
        $region37: #{tpu_custom_call.1} parent=11 // pred_check
          %p420 = pneg %p244
        $region38: #{tpu_custom_call.1} parent=11 // pred_check_branch
          %422 = sbr.rel (%p420) target = $region40
        $region39: #{tpu_custom_call.1} parent=11 // pred_region
          %424 = vsyncadd [#allocation12], 0
          %s426 = sshll.u32 %s8, 4
          %s427 = int_to_ptr.hbm [resolvable:$true] %s426
          %s428 = sshll.u32 [#allocation11], 4
          %s429 = int_to_ptr.vmem [resolvable:$true] %s428
          %431 = dma.hbm_to_vmem [thread:$0]  %s427, 16, %s429, [#allocation12]
        $region40: #{tpu_custom_call.1} parent=11 // pred_fallthru
          _
        // Predicated region
        $region41: #{tpu_custom_call.1} parent=11 // pred_check
          %p432 = pneg %p265
        $region42: #{tpu_custom_call.1} parent=11 // pred_check_branch
          %434 = sbr.rel (%p432) target = $region44
        $region43: #{tpu_custom_call.1} parent=11 // pred_region
          %436 = vsyncadd [#allocation12], 0
          %s437 = sshll.u32 %s9, 4
          %s438 = int_to_ptr.hbm [resolvable:$true] %s437
          %s439 = sshll.u32 [#allocation13], 4
          %s440 = int_to_ptr.vmem [resolvable:$true] %s439
          %445 = dma.hbm_to_vmem [thread:$0]  %s438, 4096, %s440, [#allocation12], 256, 256, 16
        $region44: #{tpu_custom_call.1} parent=11 // pred_fallthru
          _
        // Predicated region
        $region45: #{tpu_custom_call.1} parent=11 // pred_check
          %p446 = pneg %p286
        $region46: #{tpu_custom_call.1} parent=11 // pred_check_branch
          %448 = sbr.rel (%p446) target = $region48
        $region47: #{tpu_custom_call.1} parent=11 // pred_region
          _
        $region48: #{tpu_custom_call.1} parent=11 // pred_fallthru
          _
        // Predicated region
        $region49: #{tpu_custom_call.1} parent=11 // pred_check
          %p449 = pneg %p307
        $region50: #{tpu_custom_call.1} parent=11 // pred_check_branch
          %451 = sbr.rel (%p449) target = $region52
        $region51: #{tpu_custom_call.1} parent=11 // pred_region
          %453 = vsyncadd [#allocation15], 0
          %s454 = sshll.u32 %s11, 4
          %s455 = int_to_ptr.hbm [resolvable:$true] %s454
          %s456 = sshll.u32 [#allocation14], 4
          %s457 = int_to_ptr.vmem [resolvable:$true] %s456
          %462 = dma.hbm_to_vmem [thread:$0]  %s455, 4096, %s457, [#allocation15], 64, 64, 4
        $region52: #{tpu_custom_call.1} parent=11 // pred_fallthru
          _
        // Predicated region
        $region53: #{tpu_custom_call.1} parent=11 // pred_check
          %p463 = pneg %p328
        $region54: #{tpu_custom_call.1} parent=11 // pred_check_branch
          %465 = sbr.rel (%p463) target = $region56
        $region55: #{tpu_custom_call.1} parent=11 // pred_region
          _
        $region56: #{tpu_custom_call.1} parent=11 // pred_fallthru
          _
      $region12: #{tpu_custom_call.1} parent=5 // pred_fallthru
        _
      %p466 = scmp.lt.s32.totalorder %s31, 4
      // Predicated region
      $region57: #{tpu_custom_call.1} parent=5 // pred_check
        %p467 = pneg %p466
      $region58: #{tpu_custom_call.1} parent=5 // pred_check_branch
        %469 = sbr.rel (%p467) target = $region60
      $region59: #{tpu_custom_call.1} parent=5 // pred_region
        // Predicated region
        $region61: #{tpu_custom_call.1} parent=59 // pred_check
          %p470 = pneg %p63
        $region62: #{tpu_custom_call.1} parent=59 // pred_check_branch
          %472 = sbr.rel (%p470) target = $region64
        $region63: #{tpu_custom_call.1} parent=59 // pred_region
          %s473 = sand.u32 %s53, 1
          %s474 = scalar_lea.sflag [#allocation3], %s473
          %s475 = sand.u32 %s53, 1
          %s476 = smul.addr %s475, 16
          %s477 = scalar_lea.vmem [#allocation2], %s476
          %479 = vsyncadd %s474, 0
          %s480 = smul.addr %s38, 2
          %s481 = smul.addr %s480, 8
          %s482 = scalar_lea.hbm %s0, %s481
          %s483 = sshll.u32 %s482, 4
          %s484 = int_to_ptr.hbm [resolvable:$true] %s483
          %s485 = sshll.u32 %s477, 4
          %s486 = int_to_ptr.vmem [resolvable:$true] %s485
          %491 = dma.hbm_to_vmem [thread:$0]  %s484, 256, %s486, %s474, 128, 128, 8
        $region64: #{tpu_custom_call.1} parent=59 // pred_fallthru
          _
        // Predicated region
        $region65: #{tpu_custom_call.1} parent=59 // pred_check
          %p492 = pneg %p91
        $region66: #{tpu_custom_call.1} parent=59 // pred_check_branch
          %494 = sbr.rel (%p492) target = $region68
        $region67: #{tpu_custom_call.1} parent=59 // pred_region
          %s495 = sand.u32 %s31, 1
          %s496 = scalar_lea.sflag [#allocation6], %s495
          %s497 = sand.u32 %s81, 1
          %s498 = smul.addr %s497, 8
          %s499 = scalar_lea.vmem [#allocation5], %s498
          %501 = vsyncadd %s496, 0
          %s502 = smul.addr %s38, 2
          %s503 = sadd.s32 %s39, %s502
          %s504 = smul.addr %s503, 8
          %s505 = scalar_lea.hbm %s1, %s504
          %s507 = sshll.u32 %s505, 4
          %s508 = int_to_ptr.hbm [resolvable:$true] %s507
          %s509 = sshll.u32 %s499, 4
          %s510 = int_to_ptr.vmem [resolvable:$true] %s509
          %512 = dma.hbm_to_vmem [thread:$0]  %s508, 128, %s510, %s496
        $region68: #{tpu_custom_call.1} parent=59 // pred_fallthru
          _
      $region60: #{tpu_custom_call.1} parent=5 // pred_fallthru
        _
      %p513 = scmp.le.s32.totalorder 1, %s31
      %p514 = scmp.lt.s32.totalorder %s31, 5
      %p515 = pnand %p513, %p514
      %p516 = pneg %p515
      // Predicated region
      $region69: #{tpu_custom_call.1} parent=5 // pred_check
        _
      $region70: #{tpu_custom_call.1} parent=5 // pred_check_branch
        %518 = sbr.rel (%p515) target = $region72
      $region71: #{tpu_custom_call.1} parent=5 // pred_region
        %s519 = ssub.s32 %s31, 1
        %s520 = sand.u32 %s56, 1
        %s521 = scalar_lea.sflag [#allocation3], %s520
        %s522 = sand.u32 %s56, 1
        %s523 = smul.addr %s522, 16
        %s524 = scalar_lea.vmem [#allocation2], %s523
        // Predicated region
        $region73: #{tpu_custom_call.1} parent=71 // pred_check
          %p525 = pneg %p69
        $region74: #{tpu_custom_call.1} parent=71 // pred_check_branch
          %527 = sbr.rel (%p525) target = $region76
        $region75: #{tpu_custom_call.1} parent=71 // pred_region
          %529 = dma.done %s521, 256
        $region76: #{tpu_custom_call.1} parent=71 // pred_fallthru
          _
        %s530 = sand.u32 %s36, 1
        %s531 = scalar_lea.sflag [#allocation6], %s530
        %s532 = sand.u32 %s84, 1
        %s533 = smul.addr %s532, 8
        %s534 = scalar_lea.vmem [#allocation5], %s533
        // Predicated region
        $region77: #{tpu_custom_call.1} parent=71 // pred_check
          %p535 = pneg %p97
        $region78: #{tpu_custom_call.1} parent=71 // pred_check_branch
          %537 = sbr.rel (%p535) target = $region80
        $region79: #{tpu_custom_call.1} parent=71 // pred_region
          %539 = dma.done %s531, 128
        $region80: #{tpu_custom_call.1} parent=71 // pred_fallthru
          _
        // Predicated region
        $region81: #{tpu_custom_call.1} parent=71 // pred_check
          %p540 = pneg %p160
        $region82: #{tpu_custom_call.1} parent=71 // pred_check_branch
          %542 = sbr.rel (%p540) target = $region84
        $region83: #{tpu_custom_call.1} parent=71 // pred_region
          %544 = dma.done [#allocation6], 9216
        $region84: #{tpu_custom_call.1} parent=71 // pred_fallthru
          _
        // Predicated region
        $region85: #{tpu_custom_call.1} parent=71 // pred_check
          %p545 = pneg %p181
        $region86: #{tpu_custom_call.1} parent=71 // pred_check_branch
          %547 = sbr.rel (%p545) target = $region88
        $region87: #{tpu_custom_call.1} parent=71 // pred_region
          %549 = dma.done [#allocation9], 1024
        $region88: #{tpu_custom_call.1} parent=71 // pred_fallthru
          _
        // Predicated region
        $region89: #{tpu_custom_call.1} parent=71 // pred_check
          %p550 = pneg %p223
        $region90: #{tpu_custom_call.1} parent=71 // pred_check_branch
          %552 = sbr.rel (%p550) target = $region92
        $region91: #{tpu_custom_call.1} parent=71 // pred_region
          %554 = dma.done [#allocation9], 16
        $region92: #{tpu_custom_call.1} parent=71 // pred_fallthru
          _
        // Predicated region
        $region93: #{tpu_custom_call.1} parent=71 // pred_check
          %p555 = pneg %p244
        $region94: #{tpu_custom_call.1} parent=71 // pred_check_branch
          %557 = sbr.rel (%p555) target = $region96
        $region95: #{tpu_custom_call.1} parent=71 // pred_region
          %559 = dma.done [#allocation12], 16
        $region96: #{tpu_custom_call.1} parent=71 // pred_fallthru
          _
        // Predicated region
        $region97: #{tpu_custom_call.1} parent=71 // pred_check
          %p560 = pneg %p265
        $region98: #{tpu_custom_call.1} parent=71 // pred_check_branch
          %562 = sbr.rel (%p560) target = $region100
        $region99: #{tpu_custom_call.1} parent=71 // pred_region
          %564 = dma.done [#allocation12], 4096
        $region100: #{tpu_custom_call.1} parent=71 // pred_fallthru
          _
        // Predicated region
        $region101: #{tpu_custom_call.1} parent=71 // pred_check
          %p565 = pneg %p307
        $region102: #{tpu_custom_call.1} parent=71 // pred_check_branch
          %567 = sbr.rel (%p565) target = $region104
        $region103: #{tpu_custom_call.1} parent=71 // pred_region
          %569 = dma.done [#allocation15], 4096
        $region104: #{tpu_custom_call.1} parent=71 // pred_fallthru
          _
        %s570 = sand.u32 %s56, 1
        %s571 = scalar_lea.sflag [#allocation3], %s570
        %s572 = sand.u32 %s56, 1
        %s573 = smul.addr %s572, 16
        %s574 = scalar_lea.vmem [#allocation2], %s573
        %p575 = pneg %p69
        %p576 = pneg %p66
        %s577 = sand.u32 %s36, 1
        %s578 = scalar_lea.sflag [#allocation6], %s577
        %s579 = sand.u32 %s84, 1
        %s580 = smul.addr %s579, 8
        %s581 = scalar_lea.vmem [#allocation5], %s580
        %p582 = pneg %p97
        %p583 = pneg %p94
        %p584 = pneg %p118
        %p585 = pneg %p115
        %p586 = pneg %p139
        %p587 = pneg %p136
        %p588 = pneg %p160
        %p589 = pneg %p157
        %p590 = pneg %p181
        %p591 = pneg %p178
        %p592 = pneg %p202
        %p593 = pneg %p199
        %p594 = pneg %p223
        %p595 = pneg %p220
        %p596 = pneg %p244
        %p597 = pneg %p241
        %p598 = pneg %p265
        %p599 = pneg %p262
        %p600 = pneg %p286
        %p601 = pneg %p283
        %p602 = pneg %p307
        %p603 = pneg %p304
        %p604 = pneg %p328
        %p605 = pneg %p325
        %p606 = pneg %p356
        %p607 = pneg %p353
        %s608 = sand.u32 %s343, 1
        %s609 = scalar_lea.sflag [#allocation4], %s608
        %s610 = sand.u32 %s343, 1
        %s611 = smul.addr %s610, 8
        %s612 = scalar_lea.vmem [#allocation16], %s611
        %v614 = vld [vmem:[%s524] sm:$0xff]
        %v615 = vld [vmem:[%s524 + $0x8] sm:$0xff]
        %v616 = vld [vmem:[%s534] sm:$0xff]
        %v617 = vld [vmem:[%s2] sm:$0x1]
        %v618 = vld [vmem:[%s3] sm:$0x1]
        %v619 = vld [vmem:[#allocation7] sm:$0xff]
        %v620 = vld [vmem:[#allocation7 + $0x8] sm:$0xff]
        %v621 = vld [vmem:[#allocation7 + $0x10] sm:$0xff]
        %v622 = vld [vmem:[#allocation7 + $0x18] sm:$0xff]
        %v623 = vld [vmem:[#allocation7 + $0x20] sm:$0xf]
        %v624 = vld [vmem:[#allocation7 + $0x24] sm:$0xff]
        %v625 = vld [vmem:[#allocation7 + $0x2c] sm:$0xff]
        %v626 = vld [vmem:[#allocation7 + $0x34] sm:$0xff]
        %v627 = vld [vmem:[#allocation7 + $0x3c] sm:$0xff]
        %v628 = vld [vmem:[#allocation7 + $0x44] sm:$0xf]
        %v629 = vld [vmem:[#allocation7 + $0x48] sm:$0xff]
        %v630 = vld [vmem:[#allocation7 + $0x50] sm:$0xff]
        %v631 = vld [vmem:[#allocation7 + $0x58] sm:$0xff]
        %v632 = vld [vmem:[#allocation7 + $0x60] sm:$0xff]
        %v633 = vld [vmem:[#allocation7 + $0x68] sm:$0xf]
        %v634 = vld [vmem:[#allocation7 + $0x6c] sm:$0xff]
        %v635 = vld [vmem:[#allocation7 + $0x74] sm:$0xff]
        %v636 = vld [vmem:[#allocation7 + $0x7c] sm:$0xff]
        %v637 = vld [vmem:[#allocation7 + $0x84] sm:$0xff]
        %v638 = vld [vmem:[#allocation7 + $0x8c] sm:$0xf]
        %v639 = vld [vmem:[#allocation7 + $0x90] sm:$0xff]
        %v640 = vld [vmem:[#allocation7 + $0x98] sm:$0xff]
        %v641 = vld [vmem:[#allocation7 + $0xa0] sm:$0xff]
        %v642 = vld [vmem:[#allocation7 + $0xa8] sm:$0xff]
        %v643 = vld [vmem:[#allocation7 + $0xb0] sm:$0xf]
        %v644 = vld [vmem:[#allocation7 + $0xb4] sm:$0xff]
        %v645 = vld [vmem:[#allocation7 + $0xbc] sm:$0xff]
        %v646 = vld [vmem:[#allocation7 + $0xc4] sm:$0xff]
        %v647 = vld [vmem:[#allocation7 + $0xcc] sm:$0xff]
        %v648 = vld [vmem:[#allocation7 + $0xd4] sm:$0xf]
        %v649 = vld [vmem:[#allocation7 + $0xd8] sm:$0xff]
        %v650 = vld [vmem:[#allocation7 + $0xe0] sm:$0xff]
        %v651 = vld [vmem:[#allocation7 + $0xe8] sm:$0xff]
        %v652 = vld [vmem:[#allocation7 + $0xf0] sm:$0xff]
        %v653 = vld [vmem:[#allocation7 + $0xf8] sm:$0xf]
        %v654 = vld [vmem:[#allocation7 + $0xfc] sm:$0xff]
        %v655 = vld [vmem:[#allocation7 + $0x104] sm:$0xff]
        %v656 = vld [vmem:[#allocation7 + $0x10c] sm:$0xff]
        %v657 = vld [vmem:[#allocation7 + $0x114] sm:$0xff]
        %v658 = vld [vmem:[#allocation7 + $0x11c] sm:$0xf]
        %v659 = vld [vmem:[#allocation7 + $0x120] sm:$0xff]
        %v660 = vld [vmem:[#allocation7 + $0x128] sm:$0xff]
        %v661 = vld [vmem:[#allocation7 + $0x130] sm:$0xff]
        %v662 = vld [vmem:[#allocation7 + $0x138] sm:$0xff]
        %v663 = vld [vmem:[#allocation7 + $0x140] sm:$0xf]
        %v664 = vld [vmem:[#allocation7 + $0x144] sm:$0xff]
        %v665 = vld [vmem:[#allocation7 + $0x14c] sm:$0xff]
        %v666 = vld [vmem:[#allocation7 + $0x154] sm:$0xff]
        %v667 = vld [vmem:[#allocation7 + $0x15c] sm:$0xff]
        %v668 = vld [vmem:[#allocation7 + $0x164] sm:$0xf]
        %v669 = vld [vmem:[#allocation7 + $0x168] sm:$0xff]
        %v670 = vld [vmem:[#allocation7 + $0x170] sm:$0xff]
        %v671 = vld [vmem:[#allocation7 + $0x178] sm:$0xff]
        %v672 = vld [vmem:[#allocation7 + $0x180] sm:$0xff]
        %v673 = vld [vmem:[#allocation7 + $0x188] sm:$0xf]
        %v674 = vld [vmem:[#allocation7 + $0x18c] sm:$0xff]
        %v675 = vld [vmem:[#allocation7 + $0x194] sm:$0xff]
        %v676 = vld [vmem:[#allocation7 + $0x19c] sm:$0xff]
        %v677 = vld [vmem:[#allocation7 + $0x1a4] sm:$0xff]
        %v678 = vld [vmem:[#allocation7 + $0x1ac] sm:$0xf]
        %v679 = vld [vmem:[#allocation7 + $0x1b0] sm:$0xff]
        %v680 = vld [vmem:[#allocation7 + $0x1b8] sm:$0xff]
        %v681 = vld [vmem:[#allocation7 + $0x1c0] sm:$0xff]
        %v682 = vld [vmem:[#allocation7 + $0x1c8] sm:$0xff]
        %v683 = vld [vmem:[#allocation7 + $0x1d0] sm:$0xf]
        %v684 = vld [vmem:[#allocation7 + $0x1d4] sm:$0xff]
        %v685 = vld [vmem:[#allocation7 + $0x1dc] sm:$0xff]
        %v686 = vld [vmem:[#allocation7 + $0x1e4] sm:$0xff]
        %v687 = vld [vmem:[#allocation7 + $0x1ec] sm:$0xff]
        %v688 = vld [vmem:[#allocation7 + $0x1f4] sm:$0xf]
        %v689 = vld [vmem:[#allocation7 + $0x1f8] sm:$0xff]
        %v690 = vld [vmem:[#allocation7 + $0x200] sm:$0xff]
        %v691 = vld [vmem:[#allocation7 + $0x208] sm:$0xff]
        %v692 = vld [vmem:[#allocation7 + $0x210] sm:$0xff]
        %v693 = vld [vmem:[#allocation7 + $0x218] sm:$0xf]
        %v694 = vld [vmem:[#allocation7 + $0x21c] sm:$0xff]
        %v695 = vld [vmem:[#allocation7 + $0x224] sm:$0xff]
        %v696 = vld [vmem:[#allocation7 + $0x22c] sm:$0xff]
        %v697 = vld [vmem:[#allocation7 + $0x234] sm:$0xff]
        %v698 = vld [vmem:[#allocation7 + $0x23c] sm:$0xf]
        %v699 = vld [vmem:[#allocation8] sm:$0xf]
        %v700 = vld [vmem:[#allocation8 + $0x4] sm:$0xf]
        %v701 = vld [vmem:[#allocation8 + $0x8] sm:$0xf]
        %v702 = vld [vmem:[#allocation8 + $0xc] sm:$0xf]
        %v703 = vld [vmem:[#allocation8 + $0x10] sm:$0xf]
        %v704 = vld [vmem:[#allocation8 + $0x14] sm:$0xf]
        %v705 = vld [vmem:[#allocation8 + $0x18] sm:$0xf]
        %v706 = vld [vmem:[#allocation8 + $0x1c] sm:$0xf]
        %v707 = vld [vmem:[#allocation8 + $0x20] sm:$0xf]
        %v708 = vld [vmem:[#allocation8 + $0x24] sm:$0xf]
        %v709 = vld [vmem:[#allocation8 + $0x28] sm:$0xf]
        %v710 = vld [vmem:[#allocation8 + $0x2c] sm:$0xf]
        %v711 = vld [vmem:[#allocation8 + $0x30] sm:$0xf]
        %v712 = vld [vmem:[#allocation8 + $0x34] sm:$0xf]
        %v713 = vld [vmem:[#allocation8 + $0x38] sm:$0xf]
        %v714 = vld [vmem:[#allocation8 + $0x3c] sm:$0xf]
        %v715 = vld [vmem:[%s6] sm:$0x1]
        %v716 = vld [vmem:[#allocation10] sm:$0x1]
        %v717 = vld [vmem:[#allocation11] sm:$0x1]
        %v718 = vld [vmem:[#allocation13] sm:$0xff]
        %v719 = vld [vmem:[#allocation13 + $0x8] sm:$0xff]
        %v720 = vld [vmem:[#allocation13 + $0x10] sm:$0xff]
        %v721 = vld [vmem:[#allocation13 + $0x18] sm:$0xff]
        %v722 = vld [vmem:[#allocation13 + $0x20] sm:$0xff]
        %v723 = vld [vmem:[#allocation13 + $0x28] sm:$0xff]
        %v724 = vld [vmem:[#allocation13 + $0x30] sm:$0xff]
        %v725 = vld [vmem:[#allocation13 + $0x38] sm:$0xff]
        %v726 = vld [vmem:[#allocation13 + $0x40] sm:$0xff]
        %v727 = vld [vmem:[#allocation13 + $0x48] sm:$0xff]
        %v728 = vld [vmem:[#allocation13 + $0x50] sm:$0xff]
        %v729 = vld [vmem:[#allocation13 + $0x58] sm:$0xff]
        %v730 = vld [vmem:[#allocation13 + $0x60] sm:$0xff]
        %v731 = vld [vmem:[#allocation13 + $0x68] sm:$0xff]
        %v732 = vld [vmem:[#allocation13 + $0x70] sm:$0xff]
        %v733 = vld [vmem:[#allocation13 + $0x78] sm:$0xff]
        %v734 = vld [vmem:[#allocation13 + $0x80] sm:$0xff]
        %v735 = vld [vmem:[#allocation13 + $0x88] sm:$0xff]
        %v736 = vld [vmem:[#allocation13 + $0x90] sm:$0xff]
        %v737 = vld [vmem:[#allocation13 + $0x98] sm:$0xff]
        %v738 = vld [vmem:[#allocation13 + $0xa0] sm:$0xff]
        %v739 = vld [vmem:[#allocation13 + $0xa8] sm:$0xff]
        %v740 = vld [vmem:[#allocation13 + $0xb0] sm:$0xff]
        %v741 = vld [vmem:[#allocation13 + $0xb8] sm:$0xff]
        %v742 = vld [vmem:[#allocation13 + $0xc0] sm:$0xff]
        %v743 = vld [vmem:[#allocation13 + $0xc8] sm:$0xff]
        %v744 = vld [vmem:[#allocation13 + $0xd0] sm:$0xff]
        %v745 = vld [vmem:[#allocation13 + $0xd8] sm:$0xff]
        %v746 = vld [vmem:[#allocation13 + $0xe0] sm:$0xff]
        %v747 = vld [vmem:[#allocation13 + $0xe8] sm:$0xff]
        %v748 = vld [vmem:[#allocation13 + $0xf0] sm:$0xff]
        %v749 = vld [vmem:[#allocation13 + $0xf8] sm:$0xff]
        %v750 = vld [vmem:[%s10] sm:$0xf]
        %v751 = vld [vmem:[#allocation14] sm:$0xf]
        %v752 = vld [vmem:[#allocation14 + $0x4] sm:$0xf]
        %v753 = vld [vmem:[#allocation14 + $0x8] sm:$0xf]
        %v754 = vld [vmem:[#allocation14 + $0xc] sm:$0xf]
        %v755 = vld [vmem:[#allocation14 + $0x10] sm:$0xf]
        %v756 = vld [vmem:[#allocation14 + $0x14] sm:$0xf]
        %v757 = vld [vmem:[#allocation14 + $0x18] sm:$0xf]
        %v758 = vld [vmem:[#allocation14 + $0x1c] sm:$0xf]
        %v759 = vld [vmem:[#allocation14 + $0x20] sm:$0xf]
        %v760 = vld [vmem:[#allocation14 + $0x24] sm:$0xf]
        %v761 = vld [vmem:[#allocation14 + $0x28] sm:$0xf]
        %v762 = vld [vmem:[#allocation14 + $0x2c] sm:$0xf]
        %v763 = vld [vmem:[#allocation14 + $0x30] sm:$0xf]
        %v764 = vld [vmem:[#allocation14 + $0x34] sm:$0xf]
        %v765 = vld [vmem:[#allocation14 + $0x38] sm:$0xf]
        %v766 = vld [vmem:[#allocation14 + $0x3c] sm:$0xf]
        %v767 = vld [vmem:[#allocation14 + $0x40] sm:$0xf]
        %v768 = vld [vmem:[#allocation14 + $0x44] sm:$0xf]
        %v769 = vld [vmem:[#allocation14 + $0x48] sm:$0xf]
        %v770 = vld [vmem:[#allocation14 + $0x4c] sm:$0xf]
        %v771 = vld [vmem:[#allocation14 + $0x50] sm:$0xf]
        %v772 = vld [vmem:[#allocation14 + $0x54] sm:$0xf]
        %v773 = vld [vmem:[#allocation14 + $0x58] sm:$0xf]
        %v774 = vld [vmem:[#allocation14 + $0x5c] sm:$0xf]
        %v775 = vld [vmem:[#allocation14 + $0x60] sm:$0xf]
        %v776 = vld [vmem:[#allocation14 + $0x64] sm:$0xf]
        %v777 = vld [vmem:[#allocation14 + $0x68] sm:$0xf]
        %v778 = vld [vmem:[#allocation14 + $0x6c] sm:$0xf]
        %v779 = vld [vmem:[#allocation14 + $0x70] sm:$0xf]
        %v780 = vld [vmem:[#allocation14 + $0x74] sm:$0xf]
        %v781 = vld [vmem:[#allocation14 + $0x78] sm:$0xf]
        %v782 = vld [vmem:[#allocation14 + $0x7c] sm:$0xf]
        %v783 = vld [vmem:[#allocation14 + $0x80] sm:$0xf]
        %v784 = vld [vmem:[#allocation14 + $0x84] sm:$0xf]
        %v785 = vld [vmem:[#allocation14 + $0x88] sm:$0xf]
        %v786 = vld [vmem:[#allocation14 + $0x8c] sm:$0xf]
        %v787 = vld [vmem:[#allocation14 + $0x90] sm:$0xf]
        %v788 = vld [vmem:[#allocation14 + $0x94] sm:$0xf]
        %v789 = vld [vmem:[#allocation14 + $0x98] sm:$0xf]
        %v790 = vld [vmem:[#allocation14 + $0x9c] sm:$0xf]
        %v791 = vld [vmem:[#allocation14 + $0xa0] sm:$0xf]
        %v792 = vld [vmem:[#allocation14 + $0xa4] sm:$0xf]
        %v793 = vld [vmem:[#allocation14 + $0xa8] sm:$0xf]
        %v794 = vld [vmem:[#allocation14 + $0xac] sm:$0xf]
        %v795 = vld [vmem:[#allocation14 + $0xb0] sm:$0xf]
        %v796 = vld [vmem:[#allocation14 + $0xb4] sm:$0xf]
        %v797 = vld [vmem:[#allocation14 + $0xb8] sm:$0xf]
        %v798 = vld [vmem:[#allocation14 + $0xbc] sm:$0xf]
        %v799 = vld [vmem:[#allocation14 + $0xc0] sm:$0xf]
        %v800 = vld [vmem:[#allocation14 + $0xc4] sm:$0xf]
        %v801 = vld [vmem:[#allocation14 + $0xc8] sm:$0xf]
        %v802 = vld [vmem:[#allocation14 + $0xcc] sm:$0xf]
        %v803 = vld [vmem:[#allocation14 + $0xd0] sm:$0xf]
        %v804 = vld [vmem:[#allocation14 + $0xd4] sm:$0xf]
        %v805 = vld [vmem:[#allocation14 + $0xd8] sm:$0xf]
        %v806 = vld [vmem:[#allocation14 + $0xdc] sm:$0xf]
        %v807 = vld [vmem:[#allocation14 + $0xe0] sm:$0xf]
        %v808 = vld [vmem:[#allocation14 + $0xe4] sm:$0xf]
        %v809 = vld [vmem:[#allocation14 + $0xe8] sm:$0xf]
        %v810 = vld [vmem:[#allocation14 + $0xec] sm:$0xf]
        %v811 = vld [vmem:[#allocation14 + $0xf0] sm:$0xf]
        %v812 = vld [vmem:[#allocation14 + $0xf4] sm:$0xf]
        %v813 = vld [vmem:[#allocation14 + $0xf8] sm:$0xf]
        %v814 = vld [vmem:[#allocation14 + $0xfc] sm:$0xf]
        %v815 = vld [vmem:[%s12] sm:$0x1]
        %v816 = vmul.f32 %v614, %v614
        %v817 = vmul.f32 %v615, %v615
        %820 = vrot.lane.b32.xlu0 %v816, 96
        %v821 = vpop.permute.xlu0 %820
        %822 = vrot.lane.b32.xlu0 %v817, 96
        %v823 = vpop.permute.xlu0 %822
        %v826 = vadd.f32 %v816, %v821
        %v827 = vadd.f32 %v817, %v823
        %828 = vrot.lane.b32.xlu0 %v816, 64
        %v829 = vpop.permute.xlu0 %828
        %830 = vrot.lane.b32.xlu0 %v817, 64
        %v831 = vpop.permute.xlu0 %830
        %v834 = vadd.f32 %v826, %v829
        %v835 = vadd.f32 %v827, %v831
        %836 = vrot.lane.b32.xlu0 %v816, 32
        %v837 = vpop.permute.xlu0 %836
        %838 = vrot.lane.b32.xlu0 %v817, 32
        %v839 = vpop.permute.xlu0 %838
        %v842 = vadd.f32 %v834, %v837
        %v843 = vadd.f32 %v835, %v839
        %v844 = vadd.f32 %v842, 1e-06
        %v845 = vadd.f32 %v843, 1e-06
        %v846 = vrsqrt.pop %v844
        %v847 = vmul.f32 %v846, %v844
        %v848 = vmul.f32 %v847, %v846
        %v849 = vmul.f32 0.5, %v848
        %v850 = vsub.f32 1.5, %v849
        %v851 = vmul.f32 %v846, %v850
        %vm852 = vweird.f32 %v844
        %vm853 = vweird.f32 %v846
        %vm854 = vmor %vm852, %vm853
        %v855 = vsel %vm854, %v846, %v851
        %v856 = vrsqrt.pop %v845
        %v857 = vmul.f32 %v856, %v845
        %v858 = vmul.f32 %v857, %v856
        %v859 = vmul.f32 0.5, %v858
        %v860 = vsub.f32 1.5, %v859
        %v861 = vmul.f32 %v856, %v860
        %vm862 = vweird.f32 %v845
        %vm863 = vweird.f32 %v856
        %vm864 = vmor %vm862, %vm863
        %v865 = vsel %vm864, %v856, %v861
        %868 = vrot.lane.b32.xlu0 %v855, 32
        %v869 = vpop.permute.xlu0 %868
        %870 = vrot.lane.b32.xlu0 %v865, 32
        %v871 = vpop.permute.xlu0 %870
        %874 = vrot.lane.b32.xlu0 %v855, 64
        %v875 = vpop.permute.xlu0 %874
        %876 = vrot.lane.b32.xlu0 %v865, 64
        %v877 = vpop.permute.xlu0 %876
        %880 = vrot.lane.b32.xlu0 %v855, 96
        %v881 = vpop.permute.xlu0 %880
        %882 = vrot.lane.b32.xlu0 %v865, 96
        %v883 = vpop.permute.xlu0 %882
        %vm886 = vcmask 261120
        %v887 = vsel %vm886, %v855, %v869
        %v888 = vsel %vm886, %v865, %v871
        %vm889 = vcmask 523264
        %v890 = vsel %vm889, %v887, %v875
        %v891 = vsel %vm889, %v888, %v877
        %vm892 = vcmask 785408
        %v893 = vsel %vm892, %v890, %v881
        %v894 = vsel %vm892, %v891, %v883
        %v895 = vmul.f32 %v614, %v893
        %v896 = vmul.f32 %v615, %v894
        %v898 = vperm.slane %v617, 0
        %v900 = vmul.f32 %v895, %v898
        %v901 = vmul.f32 %v896, %v898
        %v903 = vperm.slane %v618, 0
        %v905 = vadd.f32 %v900, %v903
        %v906 = vadd.f32 %v901, %v903
        %v907 = vpack.c.bf16 %v906, %v905
        %v908 = vmul.f32 %v616, %v616
        %910 = vrot.lane.b32.xlu0 %v908, 96
        %v911 = vpop.permute.xlu0 %910
        %v913 = vadd.f32 %v908, %v911
        %914 = vrot.lane.b32.xlu0 %v908, 64
        %v915 = vpop.permute.xlu0 %914
        %v917 = vadd.f32 %v913, %v915
        %918 = vrot.lane.b32.xlu0 %v908, 32
        %v919 = vpop.permute.xlu0 %918
        %v921 = vadd.f32 %v917, %v919
        %v922 = vadd.f32 %v921, 1e-06
        %v923 = vrsqrt.pop %v922
        %v924 = vmul.f32 %v923, %v922
        %v925 = vmul.f32 %v924, %v923
        %v926 = vmul.f32 0.5, %v925
        %v927 = vsub.f32 1.5, %v926
        %v928 = vmul.f32 %v923, %v927
        %vm929 = vweird.f32 %v922
        %vm930 = vweird.f32 %v923
        %vm931 = vmor %vm929, %vm930
        %v932 = vsel %vm931, %v923, %v928
        %934 = vrot.lane.b32.xlu0 %v932, 32
        %v935 = vpop.permute.xlu0 %934
        %937 = vrot.lane.b32.xlu0 %v932, 64
        %v938 = vpop.permute.xlu0 %937
        %940 = vrot.lane.b32.xlu0 %v932, 96
        %v941 = vpop.permute.xlu0 %940
        %v943 = vsel %vm886, %v932, %v935
        %v944 = vsel %vm889, %v943, %v938
        %v945 = vsel %vm892, %v944, %v941
        %v946 = vmul.f32 %v616, %v945
        %v947 = vmul.f32 %v946, %v898
        %v948 = vadd.f32 %v947, %v903
        %v949 = vpack.c.bf16 %v948, %v948
        %v966 = vunpack.c.l.b16 %v619
        %v967 = vunpack.c.l.b16 %v624
        %v968 = vunpack.c.l.b16 %v629
        %v969 = vunpack.c.l.b16 %v634
        %v970 = vunpack.c.l.b16 %v639
        %v971 = vunpack.c.l.b16 %v644
        %v972 = vunpack.c.l.b16 %v649
        %v973 = vunpack.c.l.b16 %v654
        %v974 = vunpack.c.l.b16 %v659
        %v975 = vunpack.c.l.b16 %v664
        %v976 = vunpack.c.l.b16 %v669
        %v977 = vunpack.c.l.b16 %v674
        %v978 = vunpack.c.l.b16 %v679
        %v979 = vunpack.c.l.b16 %v684
        %v980 = vunpack.c.l.b16 %v689
        %v981 = vunpack.c.l.b16 %v694
        %v982 = vpack.c.b16 %v967, %v966
        %v983 = vpack.c.b16 %v969, %v968
        %v984 = vpack.c.b16 %v971, %v970
        %v985 = vpack.c.b16 %v973, %v972
        %v986 = vpack.c.b16 %v975, %v974
        %v987 = vpack.c.b16 %v977, %v976
        %v988 = vpack.c.b16 %v979, %v978
        %v989 = vpack.c.b16 %v981, %v980
        %998 = vmatpush.bf16.msra.mxu0 %v989
        %999 = vmatpush.bf16.msra.mxu0 %v988
        %1000 = vmatpush.bf16.msra.mxu0 %v987
        %1001 = vmatpush.bf16.msra.mxu0 %v986
        %1002 = vmatpush.bf16.msra.mxu0 %v985
        %1003 = vmatpush.bf16.msra.mxu0 %v984
        %1004 = vmatpush.bf16.msra.mxu0 %v983
        %1005 = vmatpush.bf16.msra.mxu0 %v982
        %1006 = vmatmul.bf16.gmra.mxu0 %v949
        %v1007 = vpop.f32.mrf.mxu0
        %v1008 = vadd.f32 0.0, %v1007
        %v1009 = vpop.f32.mrf.mxu0
        %1010 = vdwg.mxu0
        %v1075 = vunpack.c.h.b16 %v619
        %v1076 = vunpack.c.l.b16 %v620
        %v1077 = vunpack.c.h.b16 %v620
        %v1078 = vunpack.c.l.b16 %v621
        %v1079 = vunpack.c.h.b16 %v621
        %v1080 = vunpack.c.l.b16 %v622
        %v1081 = vunpack.c.h.b16 %v622
        %v1082 = vunpack.c.l.b16 %v623
        %v1083 = vunpack.c.h.b16 %v624
        %v1084 = vunpack.c.l.b16 %v625
        %v1085 = vunpack.c.h.b16 %v625
        %v1086 = vunpack.c.l.b16 %v626
        %v1087 = vunpack.c.h.b16 %v626
        %v1088 = vunpack.c.l.b16 %v627
        %v1089 = vunpack.c.h.b16 %v627
        %v1090 = vunpack.c.l.b16 %v628
        %v1091 = vunpack.c.h.b16 %v629
        %v1092 = vunpack.c.l.b16 %v630
        %v1093 = vunpack.c.h.b16 %v630
        %v1094 = vunpack.c.l.b16 %v631
        %v1095 = vunpack.c.h.b16 %v631
        %v1096 = vunpack.c.l.b16 %v632
        %v1097 = vunpack.c.h.b16 %v632
        %v1098 = vunpack.c.l.b16 %v633
        %v1099 = vunpack.c.h.b16 %v634
        %v1100 = vunpack.c.l.b16 %v635
        %v1101 = vunpack.c.h.b16 %v635
        %v1102 = vunpack.c.l.b16 %v636
        %v1103 = vunpack.c.h.b16 %v636
        %v1104 = vunpack.c.l.b16 %v637
        %v1105 = vunpack.c.h.b16 %v637
        %v1106 = vunpack.c.l.b16 %v638
        %v1107 = vunpack.c.h.b16 %v639
        %v1108 = vunpack.c.l.b16 %v640
        %v1109 = vunpack.c.h.b16 %v640
        %v1110 = vunpack.c.l.b16 %v641
        %v1111 = vunpack.c.h.b16 %v641
        %v1112 = vunpack.c.l.b16 %v642
        %v1113 = vunpack.c.h.b16 %v642
        %v1114 = vunpack.c.l.b16 %v643
        %v1115 = vunpack.c.h.b16 %v644
        %v1116 = vunpack.c.l.b16 %v645
        %v1117 = vunpack.c.h.b16 %v645
        %v1118 = vunpack.c.l.b16 %v646
        %v1119 = vunpack.c.h.b16 %v646
        %v1120 = vunpack.c.l.b16 %v647
        %v1121 = vunpack.c.h.b16 %v647
        %v1122 = vunpack.c.l.b16 %v648
        %v1123 = vunpack.c.h.b16 %v649
        %v1124 = vunpack.c.l.b16 %v650
        %v1125 = vunpack.c.h.b16 %v650
        %v1126 = vunpack.c.l.b16 %v651
        %v1127 = vunpack.c.h.b16 %v651
        %v1128 = vunpack.c.l.b16 %v652
        %v1129 = vunpack.c.h.b16 %v652
        %v1130 = vunpack.c.l.b16 %v653
        %v1131 = vunpack.c.h.b16 %v654
        %v1132 = vunpack.c.l.b16 %v655
        %v1133 = vunpack.c.h.b16 %v655
        %v1134 = vunpack.c.l.b16 %v656
        %v1135 = vunpack.c.h.b16 %v656
        %v1136 = vunpack.c.l.b16 %v657
        %v1137 = vunpack.c.h.b16 %v657
        %v1138 = vunpack.c.l.b16 %v658
        %v1139 = vunpack.c.h.b16 %v659
        %v1140 = vunpack.c.l.b16 %v660
        %v1141 = vunpack.c.h.b16 %v660
        %v1142 = vunpack.c.l.b16 %v661
        %v1143 = vunpack.c.h.b16 %v661
        %v1144 = vunpack.c.l.b16 %v662
        %v1145 = vunpack.c.h.b16 %v662
        %v1146 = vunpack.c.l.b16 %v663
        %v1147 = vunpack.c.h.b16 %v664
        %v1148 = vunpack.c.l.b16 %v665
        %v1149 = vunpack.c.h.b16 %v665
        %v1150 = vunpack.c.l.b16 %v666
        %v1151 = vunpack.c.h.b16 %v666
        %v1152 = vunpack.c.l.b16 %v667
        %v1153 = vunpack.c.h.b16 %v667
        %v1154 = vunpack.c.l.b16 %v668
        %v1155 = vunpack.c.h.b16 %v669
        %v1156 = vunpack.c.l.b16 %v670
        %v1157 = vunpack.c.h.b16 %v670
        %v1158 = vunpack.c.l.b16 %v671
        %v1159 = vunpack.c.h.b16 %v671
        %v1160 = vunpack.c.l.b16 %v672
        %v1161 = vunpack.c.h.b16 %v672
        %v1162 = vunpack.c.l.b16 %v673
        %v1163 = vunpack.c.h.b16 %v674
        %v1164 = vunpack.c.l.b16 %v675
        %v1165 = vunpack.c.h.b16 %v675
        %v1166 = vunpack.c.l.b16 %v676
        %v1167 = vunpack.c.h.b16 %v676
        %v1168 = vunpack.c.l.b16 %v677
        %v1169 = vunpack.c.h.b16 %v677
        %v1170 = vunpack.c.l.b16 %v678
        %v1171 = vunpack.c.h.b16 %v679
        %v1172 = vunpack.c.l.b16 %v680
        %v1173 = vunpack.c.h.b16 %v680
        %v1174 = vunpack.c.l.b16 %v681
        %v1175 = vunpack.c.h.b16 %v681
        %v1176 = vunpack.c.l.b16 %v682
        %v1177 = vunpack.c.h.b16 %v682
        %v1178 = vunpack.c.l.b16 %v683
        %v1179 = vunpack.c.h.b16 %v684
        %v1180 = vunpack.c.l.b16 %v685
        %v1181 = vunpack.c.h.b16 %v685
        %v1182 = vunpack.c.l.b16 %v686
        %v1183 = vunpack.c.h.b16 %v686
        %v1184 = vunpack.c.l.b16 %v687
        %v1185 = vunpack.c.h.b16 %v687
        %v1186 = vunpack.c.l.b16 %v688
        %v1187 = vunpack.c.h.b16 %v689
        %v1188 = vunpack.c.l.b16 %v690
        %v1189 = vunpack.c.h.b16 %v690
        %v1190 = vunpack.c.l.b16 %v691
        %v1191 = vunpack.c.h.b16 %v691
        %v1192 = vunpack.c.l.b16 %v692
        %v1193 = vunpack.c.h.b16 %v692
        %v1194 = vunpack.c.l.b16 %v693
        %v1195 = vunpack.c.h.b16 %v694
        %v1196 = vunpack.c.l.b16 %v695
        %v1197 = vunpack.c.h.b16 %v695
        %v1198 = vunpack.c.l.b16 %v696
        %v1199 = vunpack.c.h.b16 %v696
        %v1200 = vunpack.c.l.b16 %v697
        %v1201 = vunpack.c.h.b16 %v697
        %v1202 = vunpack.c.l.b16 %v698
        %v1203 = vpack.c.b16 %v1083, %v1075
        %v1204 = vpack.c.b16 %v1084, %v1076
        %v1205 = vpack.c.b16 %v1085, %v1077
        %v1206 = vpack.c.b16 %v1086, %v1078
        %v1207 = vpack.c.b16 %v1087, %v1079
        %v1208 = vpack.c.b16 %v1088, %v1080
        %v1209 = vpack.c.b16 %v1089, %v1081
        %v1210 = vpack.c.b16 %v1090, %v1082
        %v1211 = vpack.c.b16 %v1099, %v1091
        %v1212 = vpack.c.b16 %v1100, %v1092
        %v1213 = vpack.c.b16 %v1101, %v1093
        %v1214 = vpack.c.b16 %v1102, %v1094
        %v1215 = vpack.c.b16 %v1103, %v1095
        %v1216 = vpack.c.b16 %v1104, %v1096
        %v1217 = vpack.c.b16 %v1105, %v1097
        %v1218 = vpack.c.b16 %v1106, %v1098
        %v1219 = vpack.c.b16 %v1115, %v1107
        %v1220 = vpack.c.b16 %v1116, %v1108
        %v1221 = vpack.c.b16 %v1117, %v1109
        %v1222 = vpack.c.b16 %v1118, %v1110
        %v1223 = vpack.c.b16 %v1119, %v1111
        %v1224 = vpack.c.b16 %v1120, %v1112
        %v1225 = vpack.c.b16 %v1121, %v1113
        %v1226 = vpack.c.b16 %v1122, %v1114
        %v1227 = vpack.c.b16 %v1131, %v1123
        %v1228 = vpack.c.b16 %v1132, %v1124
        %v1229 = vpack.c.b16 %v1133, %v1125
        %v1230 = vpack.c.b16 %v1134, %v1126
        %v1231 = vpack.c.b16 %v1135, %v1127
        %v1232 = vpack.c.b16 %v1136, %v1128
        %v1233 = vpack.c.b16 %v1137, %v1129
        %v1234 = vpack.c.b16 %v1138, %v1130
        %v1235 = vpack.c.b16 %v1147, %v1139
        %v1236 = vpack.c.b16 %v1148, %v1140
        %v1237 = vpack.c.b16 %v1149, %v1141
        %v1238 = vpack.c.b16 %v1150, %v1142
        %v1239 = vpack.c.b16 %v1151, %v1143
        %v1240 = vpack.c.b16 %v1152, %v1144
        %v1241 = vpack.c.b16 %v1153, %v1145
        %v1242 = vpack.c.b16 %v1154, %v1146
        %v1243 = vpack.c.b16 %v1163, %v1155
        %v1244 = vpack.c.b16 %v1164, %v1156
        %v1245 = vpack.c.b16 %v1165, %v1157
        %v1246 = vpack.c.b16 %v1166, %v1158
        %v1247 = vpack.c.b16 %v1167, %v1159
        %v1248 = vpack.c.b16 %v1168, %v1160
        %v1249 = vpack.c.b16 %v1169, %v1161
        %v1250 = vpack.c.b16 %v1170, %v1162
        %v1251 = vpack.c.b16 %v1179, %v1171
        %v1252 = vpack.c.b16 %v1180, %v1172
        %v1253 = vpack.c.b16 %v1181, %v1173
        %v1254 = vpack.c.b16 %v1182, %v1174
        %v1255 = vpack.c.b16 %v1183, %v1175
        %v1256 = vpack.c.b16 %v1184, %v1176
        %v1257 = vpack.c.b16 %v1185, %v1177
        %v1258 = vpack.c.b16 %v1186, %v1178
        %v1259 = vpack.c.b16 %v1195, %v1187
        %v1260 = vpack.c.b16 %v1196, %v1188
        %v1261 = vpack.c.b16 %v1197, %v1189
        %v1262 = vpack.c.b16 %v1198, %v1190
        %v1263 = vpack.c.b16 %v1199, %v1191
        %v1264 = vpack.c.b16 %v1200, %v1192
        %v1265 = vpack.c.b16 %v1201, %v1193
        %v1266 = vpack.c.b16 %v1202, %v1194
        %1331 = vmatpush.bf16.msra.mxu0 %v1259
        %1332 = vmatpush.bf16.msra.mxu0 %v1251
        %1333 = vmatpush.bf16.msra.mxu0 %v1243
        %1334 = vmatpush.bf16.msra.mxu0 %v1235
        %1335 = vmatpush.bf16.msra.mxu0 %v1227
        %1336 = vmatpush.bf16.msra.mxu0 %v1219
        %1337 = vmatpush.bf16.msra.mxu0 %v1211
        %1338 = vmatpush.bf16.msra.mxu0 %v1203
        %1339 = vmatmul.bf16.gmra.mxu0 %v907
        %v1340 = vpop.f32.mrf.mxu0
        %v1341 = vadd.f32 0.0, %v1340
        %v1342 = vpop.f32.mrf.mxu0
        %v1343 = vadd.f32 0.0, %v1342
        %1344 = vdwg.mxu0
        %1345 = vmatpush.bf16.msra.mxu0 %v1260
        %1346 = vmatpush.bf16.msra.mxu0 %v1252
        %1347 = vmatpush.bf16.msra.mxu0 %v1244
        %1348 = vmatpush.bf16.msra.mxu0 %v1236
        %1349 = vmatpush.bf16.msra.mxu0 %v1228
        %1350 = vmatpush.bf16.msra.mxu0 %v1220
        %1351 = vmatpush.bf16.msra.mxu0 %v1212
        %1352 = vmatpush.bf16.msra.mxu0 %v1204
        %1353 = vmatmul.bf16.gmra.mxu0 %v907
        %v1354 = vpop.f32.mrf.mxu0
        %v1355 = vadd.f32 0.0, %v1354
        %v1356 = vpop.f32.mrf.mxu0
        %v1357 = vadd.f32 0.0, %v1356
        %1358 = vdwg.mxu0
        %1359 = vmatpush.bf16.msra.mxu0 %v1261
        %1360 = vmatpush.bf16.msra.mxu0 %v1253
        %1361 = vmatpush.bf16.msra.mxu0 %v1245
        %1362 = vmatpush.bf16.msra.mxu0 %v1237
        %1363 = vmatpush.bf16.msra.mxu0 %v1229
        %1364 = vmatpush.bf16.msra.mxu0 %v1221
        %1365 = vmatpush.bf16.msra.mxu0 %v1213
        %1366 = vmatpush.bf16.msra.mxu0 %v1205
        %1367 = vmatmul.bf16.gmra.mxu0 %v907
        %v1368 = vpop.f32.mrf.mxu0
        %v1369 = vadd.f32 0.0, %v1368
        %v1370 = vpop.f32.mrf.mxu0
        %v1371 = vadd.f32 0.0, %v1370
        %1372 = vdwg.mxu0
        %1373 = vmatpush.bf16.msra.mxu0 %v1262
        %1374 = vmatpush.bf16.msra.mxu0 %v1254
        %1375 = vmatpush.bf16.msra.mxu0 %v1246
        %1376 = vmatpush.bf16.msra.mxu0 %v1238
        %1377 = vmatpush.bf16.msra.mxu0 %v1230
        %1378 = vmatpush.bf16.msra.mxu0 %v1222
        %1379 = vmatpush.bf16.msra.mxu0 %v1214
        %1380 = vmatpush.bf16.msra.mxu0 %v1206
        %1381 = vmatmul.bf16.gmra.mxu0 %v907
        %v1382 = vpop.f32.mrf.mxu0
        %v1383 = vadd.f32 0.0, %v1382
        %v1384 = vpop.f32.mrf.mxu0
        %v1385 = vadd.f32 0.0, %v1384
        %1386 = vdwg.mxu0
        %1387 = vmatpush.bf16.msra.mxu0 %v1263
        %1388 = vmatpush.bf16.msra.mxu0 %v1255
        %1389 = vmatpush.bf16.msra.mxu0 %v1247
        %1390 = vmatpush.bf16.msra.mxu0 %v1239
        %1391 = vmatpush.bf16.msra.mxu0 %v1231
        %1392 = vmatpush.bf16.msra.mxu0 %v1223
        %1393 = vmatpush.bf16.msra.mxu0 %v1215
        %1394 = vmatpush.bf16.msra.mxu0 %v1207
        %1395 = vmatmul.bf16.gmra.mxu0 %v907
        %v1396 = vpop.f32.mrf.mxu0
        %v1397 = vadd.f32 0.0, %v1396
        %v1398 = vpop.f32.mrf.mxu0
        %v1399 = vadd.f32 0.0, %v1398
        %1400 = vdwg.mxu0
        %1401 = vmatpush.bf16.msra.mxu0 %v1264
        %1402 = vmatpush.bf16.msra.mxu0 %v1256
        %1403 = vmatpush.bf16.msra.mxu0 %v1248
        %1404 = vmatpush.bf16.msra.mxu0 %v1240
        %1405 = vmatpush.bf16.msra.mxu0 %v1232
        %1406 = vmatpush.bf16.msra.mxu0 %v1224
        %1407 = vmatpush.bf16.msra.mxu0 %v1216
        %1408 = vmatpush.bf16.msra.mxu0 %v1208
        %1409 = vmatmul.bf16.gmra.mxu0 %v907
        %v1410 = vpop.f32.mrf.mxu0
        %v1411 = vadd.f32 0.0, %v1410
        %v1412 = vpop.f32.mrf.mxu0
        %v1413 = vadd.f32 0.0, %v1412
        %1414 = vdwg.mxu0
        %1415 = vmatpush.bf16.msra.mxu0 %v1265
        %1416 = vmatpush.bf16.msra.mxu0 %v1257
        %1417 = vmatpush.bf16.msra.mxu0 %v1249
        %1418 = vmatpush.bf16.msra.mxu0 %v1241
        %1419 = vmatpush.bf16.msra.mxu0 %v1233
        %1420 = vmatpush.bf16.msra.mxu0 %v1225
        %1421 = vmatpush.bf16.msra.mxu0 %v1217
        %1422 = vmatpush.bf16.msra.mxu0 %v1209
        %1423 = vmatmul.bf16.gmra.mxu0 %v907
        %v1424 = vpop.f32.mrf.mxu0
        %v1425 = vadd.f32 0.0, %v1424
        %v1426 = vpop.f32.mrf.mxu0
        %v1427 = vadd.f32 0.0, %v1426
        %1428 = vdwg.mxu0
        %1429 = vmatpush.bf16.msra.mxu0 %v1266
        %1430 = vmatpush.bf16.msra.mxu0 %v1258
        %1431 = vmatpush.bf16.msra.mxu0 %v1250
        %1432 = vmatpush.bf16.msra.mxu0 %v1242
        %1433 = vmatpush.bf16.msra.mxu0 %v1234
        %1434 = vmatpush.bf16.msra.mxu0 %v1226
        %1435 = vmatpush.bf16.msra.mxu0 %v1218
        %1436 = vmatpush.bf16.msra.mxu0 %v1210
        %1437 = vmatmul.bf16.gmra.mxu0 %v907
        %v1438 = vpop.f32.mrf.mxu0
        %v1439 = vadd.f32 0.0, %v1438
        %v1440 = vpop.f32.mrf.mxu0
        %v1441 = vadd.f32 0.0, %v1440
        %1442 = vdwg.mxu0
        %v1443 = vpack.c.bf16 %v1008, %v1008
        %v1444 = vpack.c.bf16 %v1343, %v1341
        %v1445 = vpack.c.bf16 %v1399, %v1397
        %v1447 = vsel %vm889, %v1443, 0
        %v1450 = vsel %vm889, %v1444, 0
        %1452 = vmatpush.bf16.xpose.msra.mxu0 0
        %1453 = vmatpush.bf16.xpose.msra.mxu0 0
        %1454 = vmatpush.bf16.xpose.msra.mxu0 0
        %1455 = vmatpush.bf16.xpose.msra.mxu0 0
        %1456 = vmatpush.bf16.xpose.msra.mxu0 0
        %1457 = vmatpush.bf16.xpose.msra.mxu0 0
        %1458 = vmatpush.bf16.xpose.msra.mxu0 0
        %1459 = vmatpush.bf16.xpose.msra.mxu0 %v1450
        %1460 = vmatmul.bf16.gmra.mxu0 %v1447
        %v1461 = vpop.f32.mrf.mxu0
        %v1462 = vadd.f32 0.0, %v1461
        %v1463 = vpop.f32.mrf.mxu0
        %1464 = vdwg.mxu0
        %vm1465 = vcmask 130048
        %v1466 = vsel %vm1465, %v1462, -inf
        %1467 = vmax.xlane.f32.xlu0 %v1466
        %v1468 = vpop.xlane.xlu0 %1467
        %v1469 = vsub.f32 %v1462, %v1468
        %v1470 = vmul.f32 %v1469, 1.442695
        %v1471 = vpow.pop %v1470
        %v1472 = vsel %vm1465, %v1471, 0.0
        %1473 = vadd.xlane.f32.xlu0 %v1472
        %v1474 = vpop.xlane.xlu0 %1473
        %v1475 = vrcp.pop %v1474
        %v1476 = vmul.f32 %v1471, %v1475
        %v1477 = vpack.c.bf16 %v1476, %v1476
        %v1478 = vpack.c.bf16 %v1357, %v1355
        %v1479 = vpack.c.bf16 %v1413, %v1411
        %v1481 = vsel %vm889, %v1478, 0
        %1483 = vmatpush.bf16.xpose.msra.mxu0 0
        %1484 = vmatpush.bf16.xpose.msra.mxu0 0
        %1485 = vmatpush.bf16.xpose.msra.mxu0 0
        %1486 = vmatpush.bf16.xpose.msra.mxu0 0
        %1487 = vmatpush.bf16.xpose.msra.mxu0 0
        %1488 = vmatpush.bf16.xpose.msra.mxu0 0
        %1489 = vmatpush.bf16.xpose.msra.mxu0 0
        %1490 = vmatpush.bf16.xpose.msra.mxu0 %v1481
        %1491 = vmatmul.bf16.gmra.mxu0 %v1447
        %v1492 = vpop.f32.mrf.mxu0
        %v1493 = vadd.f32 0.0, %v1492
        %v1494 = vpop.f32.mrf.mxu0
        %1495 = vdwg.mxu0
        %v1496 = vsel %vm1465, %v1493, -inf
        %1497 = vmax.xlane.f32.xlu0 %v1496
        %v1498 = vpop.xlane.xlu0 %1497
        %v1499 = vsub.f32 %v1493, %v1498
        %v1500 = vmul.f32 %v1499, 1.442695
        %v1501 = vpow.pop %v1500
        %v1502 = vsel %vm1465, %v1501, 0.0
        %1503 = vadd.xlane.f32.xlu0 %v1502
        %v1504 = vpop.xlane.xlu0 %1503
        %v1505 = vrcp.pop %v1504
        %v1506 = vmul.f32 %v1501, %v1505
        %v1507 = vpack.c.bf16 %v1506, %v1506
        %v1509 = vsel %vm1465, %v1507, 0
        %1511 = vmatpush.bf16.msra.mxu0 0
        %1512 = vmatpush.bf16.msra.mxu0 0
        %1513 = vmatpush.bf16.msra.mxu0 0
        %1514 = vmatpush.bf16.msra.mxu0 0
        %1515 = vmatpush.bf16.msra.mxu0 0
        %1516 = vmatpush.bf16.msra.mxu0 0
        %1517 = vmatpush.bf16.msra.mxu0 0
        %1518 = vmatpush.bf16.msra.mxu0 %v1479
        %1519 = vmatmul.bf16.gmra.mxu0 %v1509
        %v1520 = vpop.f32.mrf.mxu0
        %v1521 = vadd.f32 0.0, %v1520
        %v1522 = vpop.f32.mrf.mxu0
        %1523 = vdwg.mxu0
        %v1525 = vsel %vm1465, %v1477, 0
        %1527 = vmatpush.bf16.msra.mxu0 0
        %1528 = vmatpush.bf16.msra.mxu0 0
        %1529 = vmatpush.bf16.msra.mxu0 0
        %1530 = vmatpush.bf16.msra.mxu0 0
        %1531 = vmatpush.bf16.msra.mxu0 0
        %1532 = vmatpush.bf16.msra.mxu0 0
        %1533 = vmatpush.bf16.msra.mxu0 0
        %1534 = vmatpush.bf16.msra.mxu0 %v1445
        %1535 = vmatmul.bf16.gmra.mxu0 %v1525
        %v1536 = vpop.f32.mrf.mxu0
        %v1537 = vadd.f32 %v1521, %v1536
        %v1538 = vpop.f32.mrf.mxu0
        %1539 = vdwg.mxu0
        %v1540 = vpack.c.bf16 %v1371, %v1369
        %v1541 = vpack.c.bf16 %v1427, %v1425
        %v1543 = vsel %vm889, %v1540, 0
        %1545 = vmatpush.bf16.xpose.msra.mxu0 0
        %1546 = vmatpush.bf16.xpose.msra.mxu0 0
        %1547 = vmatpush.bf16.xpose.msra.mxu0 0
        %1548 = vmatpush.bf16.xpose.msra.mxu0 0
        %1549 = vmatpush.bf16.xpose.msra.mxu0 0
        %1550 = vmatpush.bf16.xpose.msra.mxu0 0
        %1551 = vmatpush.bf16.xpose.msra.mxu0 0
        %1552 = vmatpush.bf16.xpose.msra.mxu0 %v1543
        %1553 = vmatmul.bf16.gmra.mxu0 %v1447
        %v1554 = vpop.f32.mrf.mxu0
        %v1555 = vadd.f32 0.0, %v1554
        %v1556 = vpop.f32.mrf.mxu0
        %1557 = vdwg.mxu0
        %v1558 = vsel %vm1465, %v1555, -inf
        %1559 = vmax.xlane.f32.xlu0 %v1558
        %v1560 = vpop.xlane.xlu0 %1559
        %v1561 = vsub.f32 %v1555, %v1560
        %v1562 = vmul.f32 %v1561, 1.442695
        %v1563 = vpow.pop %v1562
        %v1564 = vsel %vm1465, %v1563, 0.0
        %1565 = vadd.xlane.f32.xlu0 %v1564
        %v1566 = vpop.xlane.xlu0 %1565
        %v1567 = vrcp.pop %v1566
        %v1568 = vmul.f32 %v1563, %v1567
        %v1569 = vpack.c.bf16 %v1568, %v1568
        %v1571 = vsel %vm1465, %v1569, 0
        %1573 = vmatpush.bf16.msra.mxu0 0
        %1574 = vmatpush.bf16.msra.mxu0 0
        %1575 = vmatpush.bf16.msra.mxu0 0
        %1576 = vmatpush.bf16.msra.mxu0 0
        %1577 = vmatpush.bf16.msra.mxu0 0
        %1578 = vmatpush.bf16.msra.mxu0 0
        %1579 = vmatpush.bf16.msra.mxu0 0
        %1580 = vmatpush.bf16.msra.mxu0 %v1541
        %1581 = vmatmul.bf16.gmra.mxu0 %v1571
        %v1582 = vpop.f32.mrf.mxu0
        %v1583 = vadd.f32 0.0, %v1582
        %v1584 = vpop.f32.mrf.mxu0
        %1585 = vdwg.mxu0
        %v1586 = vadd.f32 %v1537, %v1583
        %v1587 = vpack.c.bf16 %v1385, %v1383
        %v1588 = vpack.c.bf16 %v1441, %v1439
        %v1590 = vsel %vm889, %v1587, 0
        %1592 = vmatpush.bf16.xpose.msra.mxu0 0
        %1593 = vmatpush.bf16.xpose.msra.mxu0 0
        %1594 = vmatpush.bf16.xpose.msra.mxu0 0
        %1595 = vmatpush.bf16.xpose.msra.mxu0 0
        %1596 = vmatpush.bf16.xpose.msra.mxu0 0
        %1597 = vmatpush.bf16.xpose.msra.mxu0 0
        %1598 = vmatpush.bf16.xpose.msra.mxu0 0
        %1599 = vmatpush.bf16.xpose.msra.mxu0 %v1590
        %1600 = vmatmul.bf16.gmra.mxu0 %v1447
        %v1601 = vpop.f32.mrf.mxu0
        %v1602 = vadd.f32 0.0, %v1601
        %v1603 = vpop.f32.mrf.mxu0
        %1604 = vdwg.mxu0
        %v1605 = vsel %vm1465, %v1602, -inf
        %1606 = vmax.xlane.f32.xlu0 %v1605
        %v1607 = vpop.xlane.xlu0 %1606
        %v1608 = vsub.f32 %v1602, %v1607
        %v1609 = vmul.f32 %v1608, 1.442695
        %v1610 = vpow.pop %v1609
        %v1611 = vsel %vm1465, %v1610, 0.0
        %1612 = vadd.xlane.f32.xlu0 %v1611
        %v1613 = vpop.xlane.xlu0 %1612
        %v1614 = vrcp.pop %v1613
        %v1615 = vmul.f32 %v1610, %v1614
        %v1616 = vpack.c.bf16 %v1615, %v1615
        %v1618 = vsel %vm1465, %v1616, 0
        %1620 = vmatpush.bf16.msra.mxu0 0
        %1621 = vmatpush.bf16.msra.mxu0 0
        %1622 = vmatpush.bf16.msra.mxu0 0
        %1623 = vmatpush.bf16.msra.mxu0 0
        %1624 = vmatpush.bf16.msra.mxu0 0
        %1625 = vmatpush.bf16.msra.mxu0 0
        %1626 = vmatpush.bf16.msra.mxu0 0
        %1627 = vmatpush.bf16.msra.mxu0 %v1588
        %1628 = vmatmul.bf16.gmra.mxu0 %v1618
        %v1629 = vpop.f32.mrf.mxu0
        %v1630 = vadd.f32 0.0, %v1629
        %v1631 = vpop.f32.mrf.mxu0
        %1632 = vdwg.mxu0
        %v1633 = vadd.f32 %v1586, %v1630
        %v1634 = vpack.c.bf16 %v1633, %v1633
        %1636 = vrot.lane.b32.xlu0 %v1443, 64
        %v1637 = vpop.permute.xlu0 %1636
        %1639 = vrot.lane.b32.xlu0 %v1444, 64
        %v1640 = vpop.permute.xlu0 %1639
        %v1642 = vsel %vm889, %v1637, 0
        %v1645 = vsel %vm889, %v1640, 0
        %1647 = vmatpush.bf16.xpose.msra.mxu0 0
        %1648 = vmatpush.bf16.xpose.msra.mxu0 0
        %1649 = vmatpush.bf16.xpose.msra.mxu0 0
        %1650 = vmatpush.bf16.xpose.msra.mxu0 0
        %1651 = vmatpush.bf16.xpose.msra.mxu0 0
        %1652 = vmatpush.bf16.xpose.msra.mxu0 0
        %1653 = vmatpush.bf16.xpose.msra.mxu0 0
        %1654 = vmatpush.bf16.xpose.msra.mxu0 %v1645
        %1655 = vmatmul.bf16.gmra.mxu0 %v1642
        %v1656 = vpop.f32.mrf.mxu0
        %v1657 = vadd.f32 0.0, %v1656
        %v1658 = vpop.f32.mrf.mxu0
        %1659 = vdwg.mxu0
        %v1660 = vsel %vm1465, %v1657, -inf
        %1661 = vmax.xlane.f32.xlu0 %v1660
        %v1662 = vpop.xlane.xlu0 %1661
        %v1663 = vsub.f32 %v1657, %v1662
        %v1664 = vmul.f32 %v1663, 1.442695
        %v1665 = vpow.pop %v1664
        %v1666 = vsel %vm1465, %v1665, 0.0
        %1667 = vadd.xlane.f32.xlu0 %v1666
        %v1668 = vpop.xlane.xlu0 %1667
        %v1669 = vrcp.pop %v1668
        %v1670 = vmul.f32 %v1665, %v1669
        %v1671 = vpack.c.bf16 %v1670, %v1670
        %1673 = vrot.lane.b32.xlu0 %v1478, 64
        %v1674 = vpop.permute.xlu0 %1673
        %v1676 = vsel %vm889, %v1674, 0
        %1678 = vmatpush.bf16.xpose.msra.mxu0 0
        %1679 = vmatpush.bf16.xpose.msra.mxu0 0
        %1680 = vmatpush.bf16.xpose.msra.mxu0 0
        %1681 = vmatpush.bf16.xpose.msra.mxu0 0
        %1682 = vmatpush.bf16.xpose.msra.mxu0 0
        %1683 = vmatpush.bf16.xpose.msra.mxu0 0
        %1684 = vmatpush.bf16.xpose.msra.mxu0 0
        %1685 = vmatpush.bf16.xpose.msra.mxu0 %v1676
        %1686 = vmatmul.bf16.gmra.mxu0 %v1642
        %v1687 = vpop.f32.mrf.mxu0
        %v1688 = vadd.f32 0.0, %v1687
        %v1689 = vpop.f32.mrf.mxu0
        %1690 = vdwg.mxu0
        %v1691 = vsel %vm1465, %v1688, -inf
        %1692 = vmax.xlane.f32.xlu0 %v1691
        %v1693 = vpop.xlane.xlu0 %1692
        %v1694 = vsub.f32 %v1688, %v1693
        %v1695 = vmul.f32 %v1694, 1.442695
        %v1696 = vpow.pop %v1695
        %v1697 = vsel %vm1465, %v1696, 0.0
        %1698 = vadd.xlane.f32.xlu0 %v1697
        %v1699 = vpop.xlane.xlu0 %1698
        %v1700 = vrcp.pop %v1699
        %v1701 = vmul.f32 %v1696, %v1700
        %v1702 = vpack.c.bf16 %v1701, %v1701
        %1704 = vrot.lane.b32.xlu0 %v1479, 64
        %v1705 = vpop.permute.xlu0 %1704
        %v1708 = vsel %vm1465, %v1702, 0
        %1710 = vmatpush.bf16.msra.mxu0 0
        %1711 = vmatpush.bf16.msra.mxu0 0
        %1712 = vmatpush.bf16.msra.mxu0 0
        %1713 = vmatpush.bf16.msra.mxu0 0
        %1714 = vmatpush.bf16.msra.mxu0 0
        %1715 = vmatpush.bf16.msra.mxu0 0
        %1716 = vmatpush.bf16.msra.mxu0 0
        %1717 = vmatpush.bf16.msra.mxu0 %v1705
        %1718 = vmatmul.bf16.gmra.mxu0 %v1708
        %v1719 = vpop.f32.mrf.mxu0
        %v1720 = vadd.f32 0.0, %v1719
        %v1721 = vpop.f32.mrf.mxu0
        %1722 = vdwg.mxu0
        %1724 = vrot.lane.b32.xlu0 %v1445, 64
        %v1725 = vpop.permute.xlu0 %1724
        %v1728 = vsel %vm1465, %v1671, 0
        %1730 = vmatpush.bf16.msra.mxu0 0
        %1731 = vmatpush.bf16.msra.mxu0 0
        %1732 = vmatpush.bf16.msra.mxu0 0
        %1733 = vmatpush.bf16.msra.mxu0 0
        %1734 = vmatpush.bf16.msra.mxu0 0
        %1735 = vmatpush.bf16.msra.mxu0 0
        %1736 = vmatpush.bf16.msra.mxu0 0
        %1737 = vmatpush.bf16.msra.mxu0 %v1725
        %1738 = vmatmul.bf16.gmra.mxu0 %v1728
        %v1739 = vpop.f32.mrf.mxu0
        %v1740 = vadd.f32 %v1720, %v1739
        %v1741 = vpop.f32.mrf.mxu0
        %1742 = vdwg.mxu0
        %1744 = vrot.lane.b32.xlu0 %v1540, 64
        %v1745 = vpop.permute.xlu0 %1744
        %v1747 = vsel %vm889, %v1745, 0
        %1749 = vmatpush.bf16.xpose.msra.mxu0 0
        %1750 = vmatpush.bf16.xpose.msra.mxu0 0
        %1751 = vmatpush.bf16.xpose.msra.mxu0 0
        %1752 = vmatpush.bf16.xpose.msra.mxu0 0
        %1753 = vmatpush.bf16.xpose.msra.mxu0 0
        %1754 = vmatpush.bf16.xpose.msra.mxu0 0
        %1755 = vmatpush.bf16.xpose.msra.mxu0 0
        %1756 = vmatpush.bf16.xpose.msra.mxu0 %v1747
        %1757 = vmatmul.bf16.gmra.mxu0 %v1642
        %v1758 = vpop.f32.mrf.mxu0
        %v1759 = vadd.f32 0.0, %v1758
        %v1760 = vpop.f32.mrf.mxu0
        %1761 = vdwg.mxu0
        %v1762 = vsel %vm1465, %v1759, -inf
        %1763 = vmax.xlane.f32.xlu0 %v1762
        %v1764 = vpop.xlane.xlu0 %1763
        %v1765 = vsub.f32 %v1759, %v1764
        %v1766 = vmul.f32 %v1765, 1.442695
        %v1767 = vpow.pop %v1766
        %v1768 = vsel %vm1465, %v1767, 0.0
        %1769 = vadd.xlane.f32.xlu0 %v1768
        %v1770 = vpop.xlane.xlu0 %1769
        %v1771 = vrcp.pop %v1770
        %v1772 = vmul.f32 %v1767, %v1771
        %v1773 = vpack.c.bf16 %v1772, %v1772
        %1775 = vrot.lane.b32.xlu0 %v1541, 64
        %v1776 = vpop.permute.xlu0 %1775
        %v1779 = vsel %vm1465, %v1773, 0
        %1781 = vmatpush.bf16.msra.mxu0 0
        %1782 = vmatpush.bf16.msra.mxu0 0
        %1783 = vmatpush.bf16.msra.mxu0 0
        %1784 = vmatpush.bf16.msra.mxu0 0
        %1785 = vmatpush.bf16.msra.mxu0 0
        %1786 = vmatpush.bf16.msra.mxu0 0
        %1787 = vmatpush.bf16.msra.mxu0 0
        %1788 = vmatpush.bf16.msra.mxu0 %v1776
        %1789 = vmatmul.bf16.gmra.mxu0 %v1779
        %v1790 = vpop.f32.mrf.mxu0
        %v1791 = vadd.f32 0.0, %v1790
        %v1792 = vpop.f32.mrf.mxu0
        %1793 = vdwg.mxu0
        %v1794 = vadd.f32 %v1740, %v1791
        %1796 = vrot.lane.b32.xlu0 %v1587, 64
        %v1797 = vpop.permute.xlu0 %1796
        %v1799 = vsel %vm889, %v1797, 0
        %1801 = vmatpush.bf16.xpose.msra.mxu0 0
        %1802 = vmatpush.bf16.xpose.msra.mxu0 0
        %1803 = vmatpush.bf16.xpose.msra.mxu0 0
        %1804 = vmatpush.bf16.xpose.msra.mxu0 0
        %1805 = vmatpush.bf16.xpose.msra.mxu0 0
        %1806 = vmatpush.bf16.xpose.msra.mxu0 0
        %1807 = vmatpush.bf16.xpose.msra.mxu0 0
        %1808 = vmatpush.bf16.xpose.msra.mxu0 %v1799
        %1809 = vmatmul.bf16.gmra.mxu0 %v1642
        %v1810 = vpop.f32.mrf.mxu0
        %v1811 = vadd.f32 0.0, %v1810
        %v1812 = vpop.f32.mrf.mxu0
        %1813 = vdwg.mxu0
        %v1814 = vsel %vm1465, %v1811, -inf
        %1815 = vmax.xlane.f32.xlu0 %v1814
        %v1816 = vpop.xlane.xlu0 %1815
        %v1817 = vsub.f32 %v1811, %v1816
        %v1818 = vmul.f32 %v1817, 1.442695
        %v1819 = vpow.pop %v1818
        %v1820 = vsel %vm1465, %v1819, 0.0
        %1821 = vadd.xlane.f32.xlu0 %v1820
        %v1822 = vpop.xlane.xlu0 %1821
        %v1823 = vrcp.pop %v1822
        %v1824 = vmul.f32 %v1819, %v1823
        %v1825 = vpack.c.bf16 %v1824, %v1824
        %1827 = vrot.lane.b32.xlu0 %v1588, 64
        %v1828 = vpop.permute.xlu0 %1827
        %v1831 = vsel %vm1465, %v1825, 0
        %1833 = vmatpush.bf16.msra.mxu0 0
        %1834 = vmatpush.bf16.msra.mxu0 0
        %1835 = vmatpush.bf16.msra.mxu0 0
        %1836 = vmatpush.bf16.msra.mxu0 0
        %1837 = vmatpush.bf16.msra.mxu0 0
        %1838 = vmatpush.bf16.msra.mxu0 0
        %1839 = vmatpush.bf16.msra.mxu0 0
        %1840 = vmatpush.bf16.msra.mxu0 %v1828
        %1841 = vmatmul.bf16.gmra.mxu0 %v1831
        %v1842 = vpop.f32.mrf.mxu0
        %v1843 = vadd.f32 0.0, %v1842
        %v1844 = vpop.f32.mrf.mxu0
        %1845 = vdwg.mxu0
        %v1846 = vadd.f32 %v1794, %v1843
        %v1847 = vpack.c.bf16 %v1846, %v1846
        %v1856 = vunpack.c.l.b16 %v707
        %v1857 = vunpack.c.l.b16 %v708
        %v1858 = vunpack.c.l.b16 %v709
        %v1859 = vunpack.c.l.b16 %v710
        %v1860 = vunpack.c.l.b16 %v711
        %v1861 = vunpack.c.l.b16 %v712
        %v1862 = vunpack.c.l.b16 %v713
        %v1863 = vunpack.c.l.b16 %v714
        %v1864 = vpack.c.b16 %v1857, %v1856
        %v1865 = vpack.c.b16 %v1859, %v1858
        %v1866 = vpack.c.b16 %v1861, %v1860
        %v1867 = vpack.c.b16 %v1863, %v1862
        %v1873 = vsel %vm889, %v1847, 0
        %1875 = vmatpush.bf16.msra.mxu0 0
        %1876 = vmatpush.bf16.msra.mxu0 0
        %1877 = vmatpush.bf16.msra.mxu0 0
        %1878 = vmatpush.bf16.msra.mxu0 0
        %1879 = vmatpush.bf16.msra.mxu0 %v1867
        %1880 = vmatpush.bf16.msra.mxu0 %v1866
        %1881 = vmatpush.bf16.msra.mxu0 %v1865
        %1882 = vmatpush.bf16.msra.mxu0 %v1864
        %1883 = vmatmul.bf16.gmra.mxu0 %v1873
        %v1884 = vpop.f32.mrf.mxu0
        %v1885 = vadd.f32 0.0, %v1884
        %v1886 = vpop.f32.mrf.mxu0
        %1887 = vdwg.mxu0
        %v1896 = vunpack.c.l.b16 %v699
        %v1897 = vunpack.c.l.b16 %v700
        %v1898 = vunpack.c.l.b16 %v701
        %v1899 = vunpack.c.l.b16 %v702
        %v1900 = vunpack.c.l.b16 %v703
        %v1901 = vunpack.c.l.b16 %v704
        %v1902 = vunpack.c.l.b16 %v705
        %v1903 = vunpack.c.l.b16 %v706
        %v1904 = vpack.c.b16 %v1897, %v1896
        %v1905 = vpack.c.b16 %v1899, %v1898
        %v1906 = vpack.c.b16 %v1901, %v1900
        %v1907 = vpack.c.b16 %v1903, %v1902
        %v1913 = vsel %vm889, %v1634, 0
        %1915 = vmatpush.bf16.msra.mxu0 0
        %1916 = vmatpush.bf16.msra.mxu0 0
        %1917 = vmatpush.bf16.msra.mxu0 0
        %1918 = vmatpush.bf16.msra.mxu0 0
        %1919 = vmatpush.bf16.msra.mxu0 %v1907
        %1920 = vmatpush.bf16.msra.mxu0 %v1906
        %1921 = vmatpush.bf16.msra.mxu0 %v1905
        %1922 = vmatpush.bf16.msra.mxu0 %v1904
        %1923 = vmatmul.bf16.gmra.mxu0 %v1913
        %v1924 = vpop.f32.mrf.mxu0
        %v1925 = vadd.f32 %v1885, %v1924
        %v1926 = vpop.f32.mrf.mxu0
        %1927 = vdwg.mxu0
        %v1928 = vadd.f32 %v616, %v1925
        %v1930 = vperm.slane %v715, 0
        %v1932 = vadd.f32 %v1928, %v1930
        %v1933 = vmul.f32 %v1932, %v1932
        %1935 = vrot.lane.b32.xlu0 %v1933, 96
        %v1936 = vpop.permute.xlu0 %1935
        %v1938 = vadd.f32 %v1933, %v1936
        %1939 = vrot.lane.b32.xlu0 %v1933, 64
        %v1940 = vpop.permute.xlu0 %1939
        %v1942 = vadd.f32 %v1938, %v1940
        %1943 = vrot.lane.b32.xlu0 %v1933, 32
        %v1944 = vpop.permute.xlu0 %1943
        %v1946 = vadd.f32 %v1942, %v1944
        %v1947 = vadd.f32 %v1946, 1e-06
        %v1948 = vrsqrt.pop %v1947
        %v1949 = vmul.f32 %v1948, %v1947
        %v1950 = vmul.f32 %v1949, %v1948
        %v1951 = vmul.f32 0.5, %v1950
        %v1952 = vsub.f32 1.5, %v1951
        %v1953 = vmul.f32 %v1948, %v1952
        %vm1954 = vweird.f32 %v1947
        %vm1955 = vweird.f32 %v1948
        %vm1956 = vmor %vm1954, %vm1955
        %v1957 = vsel %vm1956, %v1948, %v1953
        %1959 = vrot.lane.b32.xlu0 %v1957, 32
        %v1960 = vpop.permute.xlu0 %1959
        %1962 = vrot.lane.b32.xlu0 %v1957, 64
        %v1963 = vpop.permute.xlu0 %1962
        %1965 = vrot.lane.b32.xlu0 %v1957, 96
        %v1966 = vpop.permute.xlu0 %1965
        %v1968 = vsel %vm886, %v1957, %v1960
        %v1969 = vsel %vm889, %v1968, %v1963
        %v1970 = vsel %vm892, %v1969, %v1966
        %v1971 = vmul.f32 %v1932, %v1970
        %v1973 = vperm.slane %v716, 0
        %v1975 = vmul.f32 %v1971, %v1973
        %v1977 = vperm.slane %v717, 0
        %v1979 = vadd.f32 %v1975, %v1977
        %v1980 = vpack.c.bf16 %v1979, %v1979
        %v1982 = vperm.slane %v750, 0
        %v1983 = vperm.slane %v750, 1
        %v1984 = vperm.slane %v750, 2
        %v1985 = vperm.slane %v750, 3
        %v2022 = vunpack.c.l.b16 %v718
        %v2023 = vunpack.c.h.b16 %v718
        %v2024 = vunpack.c.l.b16 %v719
        %v2025 = vunpack.c.h.b16 %v719
        %v2026 = vunpack.c.l.b16 %v720
        %v2027 = vunpack.c.h.b16 %v720
        %v2028 = vunpack.c.l.b16 %v721
        %v2029 = vunpack.c.h.b16 %v721
        %v2030 = vunpack.c.l.b16 %v722
        %v2031 = vunpack.c.h.b16 %v722
        %v2032 = vunpack.c.l.b16 %v723
        %v2033 = vunpack.c.h.b16 %v723
        %v2034 = vunpack.c.l.b16 %v724
        %v2035 = vunpack.c.h.b16 %v724
        %v2036 = vunpack.c.l.b16 %v725
        %v2037 = vunpack.c.h.b16 %v725
        %v2038 = vunpack.c.l.b16 %v726
        %v2039 = vunpack.c.h.b16 %v726
        %v2040 = vunpack.c.l.b16 %v727
        %v2041 = vunpack.c.h.b16 %v727
        %v2042 = vunpack.c.l.b16 %v728
        %v2043 = vunpack.c.h.b16 %v728
        %v2044 = vunpack.c.l.b16 %v729
        %v2045 = vunpack.c.h.b16 %v729
        %v2046 = vunpack.c.l.b16 %v730
        %v2047 = vunpack.c.h.b16 %v730
        %v2048 = vunpack.c.l.b16 %v731
        %v2049 = vunpack.c.h.b16 %v731
        %v2050 = vunpack.c.l.b16 %v732
        %v2051 = vunpack.c.h.b16 %v732
        %v2052 = vunpack.c.l.b16 %v733
        %v2053 = vunpack.c.h.b16 %v733
        %v2054 = vunpack.c.l.b16 %v734
        %v2055 = vunpack.c.h.b16 %v734
        %v2056 = vunpack.c.l.b16 %v735
        %v2057 = vunpack.c.h.b16 %v735
        %v2058 = vunpack.c.l.b16 %v736
        %v2059 = vunpack.c.h.b16 %v736
        %v2060 = vunpack.c.l.b16 %v737
        %v2061 = vunpack.c.h.b16 %v737
        %v2062 = vunpack.c.l.b16 %v738
        %v2063 = vunpack.c.h.b16 %v738
        %v2064 = vunpack.c.l.b16 %v739
        %v2065 = vunpack.c.h.b16 %v739
        %v2066 = vunpack.c.l.b16 %v740
        %v2067 = vunpack.c.h.b16 %v740
        %v2068 = vunpack.c.l.b16 %v741
        %v2069 = vunpack.c.h.b16 %v741
        %v2070 = vunpack.c.l.b16 %v742
        %v2071 = vunpack.c.h.b16 %v742
        %v2072 = vunpack.c.l.b16 %v743
        %v2073 = vunpack.c.h.b16 %v743
        %v2074 = vunpack.c.l.b16 %v744
        %v2075 = vunpack.c.h.b16 %v744
        %v2076 = vunpack.c.l.b16 %v745
        %v2077 = vunpack.c.h.b16 %v745
        %v2078 = vunpack.c.l.b16 %v746
        %v2079 = vunpack.c.h.b16 %v746
        %v2080 = vunpack.c.l.b16 %v747
        %v2081 = vunpack.c.h.b16 %v747
        %v2082 = vunpack.c.l.b16 %v748
        %v2083 = vunpack.c.h.b16 %v748
        %v2084 = vunpack.c.l.b16 %v749
        %v2085 = vunpack.c.h.b16 %v749
        %v2086 = vpack.c.b16 %v2026, %v2022
        %v2087 = vpack.c.b16 %v2027, %v2023
        %v2088 = vpack.c.b16 %v2028, %v2024
        %v2089 = vpack.c.b16 %v2029, %v2025
        %v2090 = vpack.c.b16 %v2034, %v2030
        %v2091 = vpack.c.b16 %v2035, %v2031
        %v2092 = vpack.c.b16 %v2036, %v2032
        %v2093 = vpack.c.b16 %v2037, %v2033
        %v2094 = vpack.c.b16 %v2042, %v2038
        %v2095 = vpack.c.b16 %v2043, %v2039
        %v2096 = vpack.c.b16 %v2044, %v2040
        %v2097 = vpack.c.b16 %v2045, %v2041
        %v2098 = vpack.c.b16 %v2050, %v2046
        %v2099 = vpack.c.b16 %v2051, %v2047
        %v2100 = vpack.c.b16 %v2052, %v2048
        %v2101 = vpack.c.b16 %v2053, %v2049
        %v2102 = vpack.c.b16 %v2058, %v2054
        %v2103 = vpack.c.b16 %v2059, %v2055
        %v2104 = vpack.c.b16 %v2060, %v2056
        %v2105 = vpack.c.b16 %v2061, %v2057
        %v2106 = vpack.c.b16 %v2066, %v2062
        %v2107 = vpack.c.b16 %v2067, %v2063
        %v2108 = vpack.c.b16 %v2068, %v2064
        %v2109 = vpack.c.b16 %v2069, %v2065
        %v2110 = vpack.c.b16 %v2074, %v2070
        %v2111 = vpack.c.b16 %v2075, %v2071
        %v2112 = vpack.c.b16 %v2076, %v2072
        %v2113 = vpack.c.b16 %v2077, %v2073
        %v2114 = vpack.c.b16 %v2082, %v2078
        %v2115 = vpack.c.b16 %v2083, %v2079
        %v2116 = vpack.c.b16 %v2084, %v2080
        %v2117 = vpack.c.b16 %v2085, %v2081
        %2150 = vmatpush.bf16.msra.mxu0 %v2114
        %2151 = vmatpush.bf16.msra.mxu0 %v2110
        %2152 = vmatpush.bf16.msra.mxu0 %v2106
        %2153 = vmatpush.bf16.msra.mxu0 %v2102
        %2154 = vmatpush.bf16.msra.mxu0 %v2098
        %2155 = vmatpush.bf16.msra.mxu0 %v2094
        %2156 = vmatpush.bf16.msra.mxu0 %v2090
        %2157 = vmatpush.bf16.msra.mxu0 %v2086
        %2158 = vmatmul.bf16.gmra.mxu0 %v1980
        %v2159 = vpop.f32.mrf.mxu0
        %v2160 = vadd.f32 %v1982, %v2159
        %v2161 = vpop.f32.mrf.mxu0
        %2162 = vdwg.mxu0
        %2163 = vmatpush.bf16.msra.mxu0 %v2115
        %2164 = vmatpush.bf16.msra.mxu0 %v2111
        %2165 = vmatpush.bf16.msra.mxu0 %v2107
        %2166 = vmatpush.bf16.msra.mxu0 %v2103
        %2167 = vmatpush.bf16.msra.mxu0 %v2099
        %2168 = vmatpush.bf16.msra.mxu0 %v2095
        %2169 = vmatpush.bf16.msra.mxu0 %v2091
        %2170 = vmatpush.bf16.msra.mxu0 %v2087
        %2171 = vmatmul.bf16.gmra.mxu0 %v1980
        %v2172 = vpop.f32.mrf.mxu0
        %v2173 = vadd.f32 %v1983, %v2172
        %v2174 = vpop.f32.mrf.mxu0
        %2175 = vdwg.mxu0
        %2176 = vmatpush.bf16.msra.mxu0 %v2116
        %2177 = vmatpush.bf16.msra.mxu0 %v2112
        %2178 = vmatpush.bf16.msra.mxu0 %v2108
        %2179 = vmatpush.bf16.msra.mxu0 %v2104
        %2180 = vmatpush.bf16.msra.mxu0 %v2100
        %2181 = vmatpush.bf16.msra.mxu0 %v2096
        %2182 = vmatpush.bf16.msra.mxu0 %v2092
        %2183 = vmatpush.bf16.msra.mxu0 %v2088
        %2184 = vmatmul.bf16.gmra.mxu0 %v1980
        %v2185 = vpop.f32.mrf.mxu0
        %v2186 = vadd.f32 %v1984, %v2185
        %v2187 = vpop.f32.mrf.mxu0
        %2188 = vdwg.mxu0
        %2189 = vmatpush.bf16.msra.mxu0 %v2117
        %2190 = vmatpush.bf16.msra.mxu0 %v2113
        %2191 = vmatpush.bf16.msra.mxu0 %v2109
        %2192 = vmatpush.bf16.msra.mxu0 %v2105
        %2193 = vmatpush.bf16.msra.mxu0 %v2101
        %2194 = vmatpush.bf16.msra.mxu0 %v2097
        %2195 = vmatpush.bf16.msra.mxu0 %v2093
        %2196 = vmatpush.bf16.msra.mxu0 %v2089
        %2197 = vmatmul.bf16.gmra.mxu0 %v1980
        %v2198 = vpop.f32.mrf.mxu0
        %v2199 = vadd.f32 %v1985, %v2198
        %v2200 = vpop.f32.mrf.mxu0
        %2201 = vdwg.mxu0
        %v2202 = vmul.f32 %v2160, 0.5
        %v2203 = vmul.f32 %v2173, 0.5
        %v2204 = vmul.f32 %v2186, 0.5
        %v2205 = vmul.f32 %v2199, 0.5
        %v2206 = vmul.f32 %v2160, 0.044715
        %v2207 = vmul.f32 %v2173, 0.044715
        %v2208 = vmul.f32 %v2186, 0.044715
        %v2209 = vmul.f32 %v2199, 0.044715
        %v2210 = vmul.f32 %v2206, %v2160
        %v2211 = vmul.f32 %v2207, %v2173
        %v2212 = vmul.f32 %v2208, %v2186
        %v2213 = vmul.f32 %v2209, %v2199
        %v2214 = vmul.f32 %v2210, %v2160
        %v2215 = vmul.f32 %v2211, %v2173
        %v2216 = vmul.f32 %v2212, %v2186
        %v2217 = vmul.f32 %v2213, %v2199
        %v2218 = vadd.f32 %v2160, %v2214
        %v2219 = vadd.f32 %v2173, %v2215
        %v2220 = vadd.f32 %v2186, %v2216
        %v2221 = vadd.f32 %v2199, %v2217
        %v2222 = vmul.f32 %v2218, 0.7978846
        %v2223 = vmul.f32 %v2219, 0.7978846
        %v2224 = vmul.f32 %v2220, 0.7978846
        %v2225 = vmul.f32 %v2221, 0.7978846
        %v2226 = vtanh.pop %v2222
        %v2227 = vtanh.pop %v2223
        %v2228 = vtanh.pop %v2224
        %v2229 = vtanh.pop %v2225
        %v2230 = vadd.f32 %v2226, 1.0
        %v2231 = vadd.f32 %v2227, 1.0
        %v2232 = vadd.f32 %v2228, 1.0
        %v2233 = vadd.f32 %v2229, 1.0
        %v2234 = vmul.f32 %v2202, %v2230
        %v2235 = vmul.f32 %v2203, %v2231
        %v2236 = vmul.f32 %v2204, %v2232
        %v2237 = vmul.f32 %v2205, %v2233
        %v2238 = vpack.c.bf16 %v2234, %v2234
        %v2239 = vpack.c.bf16 %v2235, %v2235
        %v2240 = vpack.c.bf16 %v2236, %v2236
        %v2241 = vpack.c.bf16 %v2237, %v2237
        %v2243 = vperm.slane %v815, 0
        %v2309 = vunpack.c.l.b16 %v751
        %v2310 = vunpack.c.l.b16 %v752
        %v2311 = vunpack.c.l.b16 %v753
        %v2312 = vunpack.c.l.b16 %v754
        %v2313 = vunpack.c.l.b16 %v755
        %v2314 = vunpack.c.l.b16 %v756
        %v2315 = vunpack.c.l.b16 %v757
        %v2316 = vunpack.c.l.b16 %v758
        %v2317 = vunpack.c.l.b16 %v759
        %v2318 = vunpack.c.l.b16 %v760
        %v2319 = vunpack.c.l.b16 %v761
        %v2320 = vunpack.c.l.b16 %v762
        %v2321 = vunpack.c.l.b16 %v763
        %v2322 = vunpack.c.l.b16 %v764
        %v2323 = vunpack.c.l.b16 %v765
        %v2324 = vunpack.c.l.b16 %v766
        %v2325 = vunpack.c.l.b16 %v767
        %v2326 = vunpack.c.l.b16 %v768
        %v2327 = vunpack.c.l.b16 %v769
        %v2328 = vunpack.c.l.b16 %v770
        %v2329 = vunpack.c.l.b16 %v771
        %v2330 = vunpack.c.l.b16 %v772
        %v2331 = vunpack.c.l.b16 %v773
        %v2332 = vunpack.c.l.b16 %v774
        %v2333 = vunpack.c.l.b16 %v775
        %v2334 = vunpack.c.l.b16 %v776
        %v2335 = vunpack.c.l.b16 %v777
        %v2336 = vunpack.c.l.b16 %v778
        %v2337 = vunpack.c.l.b16 %v779
        %v2338 = vunpack.c.l.b16 %v780
        %v2339 = vunpack.c.l.b16 %v781
        %v2340 = vunpack.c.l.b16 %v782
        %v2341 = vunpack.c.l.b16 %v783
        %v2342 = vunpack.c.l.b16 %v784
        %v2343 = vunpack.c.l.b16 %v785
        %v2344 = vunpack.c.l.b16 %v786
        %v2345 = vunpack.c.l.b16 %v787
        %v2346 = vunpack.c.l.b16 %v788
        %v2347 = vunpack.c.l.b16 %v789
        %v2348 = vunpack.c.l.b16 %v790
        %v2349 = vunpack.c.l.b16 %v791
        %v2350 = vunpack.c.l.b16 %v792
        %v2351 = vunpack.c.l.b16 %v793
        %v2352 = vunpack.c.l.b16 %v794
        %v2353 = vunpack.c.l.b16 %v795
        %v2354 = vunpack.c.l.b16 %v796
        %v2355 = vunpack.c.l.b16 %v797
        %v2356 = vunpack.c.l.b16 %v798
        %v2357 = vunpack.c.l.b16 %v799
        %v2358 = vunpack.c.l.b16 %v800
        %v2359 = vunpack.c.l.b16 %v801
        %v2360 = vunpack.c.l.b16 %v802
        %v2361 = vunpack.c.l.b16 %v803
        %v2362 = vunpack.c.l.b16 %v804
        %v2363 = vunpack.c.l.b16 %v805
        %v2364 = vunpack.c.l.b16 %v806
        %v2365 = vunpack.c.l.b16 %v807
        %v2366 = vunpack.c.l.b16 %v808
        %v2367 = vunpack.c.l.b16 %v809
        %v2368 = vunpack.c.l.b16 %v810
        %v2369 = vunpack.c.l.b16 %v811
        %v2370 = vunpack.c.l.b16 %v812
        %v2371 = vunpack.c.l.b16 %v813
        %v2372 = vunpack.c.l.b16 %v814
        %v2373 = vpack.c.b16 %v2310, %v2309
        %v2374 = vpack.c.b16 %v2312, %v2311
        %v2375 = vpack.c.b16 %v2314, %v2313
        %v2376 = vpack.c.b16 %v2316, %v2315
        %v2377 = vpack.c.b16 %v2318, %v2317
        %v2378 = vpack.c.b16 %v2320, %v2319
        %v2379 = vpack.c.b16 %v2322, %v2321
        %v2380 = vpack.c.b16 %v2324, %v2323
        %v2381 = vpack.c.b16 %v2326, %v2325
        %v2382 = vpack.c.b16 %v2328, %v2327
        %v2383 = vpack.c.b16 %v2330, %v2329
        %v2384 = vpack.c.b16 %v2332, %v2331
        %v2385 = vpack.c.b16 %v2334, %v2333
        %v2386 = vpack.c.b16 %v2336, %v2335
        %v2387 = vpack.c.b16 %v2338, %v2337
        %v2388 = vpack.c.b16 %v2340, %v2339
        %v2389 = vpack.c.b16 %v2342, %v2341
        %v2390 = vpack.c.b16 %v2344, %v2343
        %v2391 = vpack.c.b16 %v2346, %v2345
        %v2392 = vpack.c.b16 %v2348, %v2347
        %v2393 = vpack.c.b16 %v2350, %v2349
        %v2394 = vpack.c.b16 %v2352, %v2351
        %v2395 = vpack.c.b16 %v2354, %v2353
        %v2396 = vpack.c.b16 %v2356, %v2355
        %v2397 = vpack.c.b16 %v2358, %v2357
        %v2398 = vpack.c.b16 %v2360, %v2359
        %v2399 = vpack.c.b16 %v2362, %v2361
        %v2400 = vpack.c.b16 %v2364, %v2363
        %v2401 = vpack.c.b16 %v2366, %v2365
        %v2402 = vpack.c.b16 %v2368, %v2367
        %v2403 = vpack.c.b16 %v2370, %v2369
        %v2404 = vpack.c.b16 %v2372, %v2371
        %2437 = vmatpush.bf16.msra.mxu0 %v2380
        %2438 = vmatpush.bf16.msra.mxu0 %v2379
        %2439 = vmatpush.bf16.msra.mxu0 %v2378
        %2440 = vmatpush.bf16.msra.mxu0 %v2377
        %2441 = vmatpush.bf16.msra.mxu0 %v2376
        %2442 = vmatpush.bf16.msra.mxu0 %v2375
        %2443 = vmatpush.bf16.msra.mxu0 %v2374
        %2444 = vmatpush.bf16.msra.mxu0 %v2373
        %2445 = vmatmul.bf16.gmra.mxu0 %v2238
        %v2446 = vpop.f32.mrf.mxu0
        %v2447 = vadd.f32 %v2243, %v2446
        %v2448 = vpop.f32.mrf.mxu0
        %2449 = vdwg.mxu0
        %2450 = vmatpush.bf16.msra.mxu0 %v2388
        %2451 = vmatpush.bf16.msra.mxu0 %v2387
        %2452 = vmatpush.bf16.msra.mxu0 %v2386
        %2453 = vmatpush.bf16.msra.mxu0 %v2385
        %2454 = vmatpush.bf16.msra.mxu0 %v2384
        %2455 = vmatpush.bf16.msra.mxu0 %v2383
        %2456 = vmatpush.bf16.msra.mxu0 %v2382
        %2457 = vmatpush.bf16.msra.mxu0 %v2381
        %2458 = vmatmul.bf16.gmra.mxu0 %v2239
        %v2459 = vpop.f32.mrf.mxu0
        %v2460 = vadd.f32 %v2447, %v2459
        %v2461 = vpop.f32.mrf.mxu0
        %2462 = vdwg.mxu0
        %2463 = vmatpush.bf16.msra.mxu0 %v2396
        %2464 = vmatpush.bf16.msra.mxu0 %v2395
        %2465 = vmatpush.bf16.msra.mxu0 %v2394
        %2466 = vmatpush.bf16.msra.mxu0 %v2393
        %2467 = vmatpush.bf16.msra.mxu0 %v2392
        %2468 = vmatpush.bf16.msra.mxu0 %v2391
        %2469 = vmatpush.bf16.msra.mxu0 %v2390
        %2470 = vmatpush.bf16.msra.mxu0 %v2389
        %2471 = vmatmul.bf16.gmra.mxu0 %v2240
        %v2472 = vpop.f32.mrf.mxu0
        %v2473 = vadd.f32 %v2460, %v2472
        %v2474 = vpop.f32.mrf.mxu0
        %2475 = vdwg.mxu0
        %2476 = vmatpush.bf16.msra.mxu0 %v2404
        %2477 = vmatpush.bf16.msra.mxu0 %v2403
        %2478 = vmatpush.bf16.msra.mxu0 %v2402
        %2479 = vmatpush.bf16.msra.mxu0 %v2401
        %2480 = vmatpush.bf16.msra.mxu0 %v2400
        %2481 = vmatpush.bf16.msra.mxu0 %v2399
        %2482 = vmatpush.bf16.msra.mxu0 %v2398
        %2483 = vmatpush.bf16.msra.mxu0 %v2397
        %2484 = vmatmul.bf16.gmra.mxu0 %v2241
        %v2485 = vpop.f32.mrf.mxu0
        %v2486 = vadd.f32 %v2473, %v2485
        %v2487 = vpop.f32.mrf.mxu0
        %2488 = vdwg.mxu0
        %v2489 = vadd.f32 %v1932, %v2486
        %2490 = vst [vmem:[%s612] sm:$0xff] %v2489
        %s2491 = sand.u32 %s343, 1
        %s2492 = scalar_lea.sflag [#allocation4], %s2491
        %s2493 = sand.u32 %s343, 1
        %s2494 = smul.addr %s2493, 8
        %s2495 = scalar_lea.vmem [#allocation16], %s2494
        // Predicated region
        $region105: #{tpu_custom_call.1} parent=71 // pred_check
          %p2496 = pneg %p353
        $region106: #{tpu_custom_call.1} parent=71 // pred_check_branch
          %2498 = sbr.rel (%p2496) target = $region108
        $region107: #{tpu_custom_call.1} parent=71 // pred_region
          %2500 = vsyncadd %s2492, 0
          %s2501 = smul.addr %s40, 2
          %s2502 = sadd.s32 %s41, %s2501
          %s2503 = smul.addr %s2502, 8
          %s2504 = scalar_lea.hbm %s13, %s2503
          %s2506 = sshll.u32 %s2495, 4
          %s2507 = int_to_ptr.vmem [resolvable:$true] %s2506
          %s2508 = sshll.u32 %s2504, 4
          %s2509 = int_to_ptr.hbm [resolvable:$true] %s2508
          %2511 = dma.vmem_to_hbm [thread:$0]  %s2507, 128, %s2509, %s2492
        $region108: #{tpu_custom_call.1} parent=71 // pred_fallthru
          _
      $region72: #{tpu_custom_call.1} parent=5 // pred_fallthru
        _
      %p2512 = scmp.le.s32.totalorder 2, %s31
      // Predicated region
      $region109: #{tpu_custom_call.1} parent=5 // pred_check
        %p2513 = pneg %p2512
      $region110: #{tpu_custom_call.1} parent=5 // pred_check_branch
        %2515 = sbr.rel (%p2513) target = $region112
      $region111: #{tpu_custom_call.1} parent=5 // pred_region
        %s2516 = ssub.s32 %s31, 2
        // Predicated region
        $region113: #{tpu_custom_call.1} parent=111 // pred_check
          %p2517 = pneg %p359
        $region114: #{tpu_custom_call.1} parent=111 // pred_check_branch
          %2519 = sbr.rel (%p2517) target = $region116
        $region115: #{tpu_custom_call.1} parent=111 // pred_region
          %s2520 = sand.u32 %s344, 1
          %s2521 = scalar_lea.sflag [#allocation4], %s2520
          %s2522 = sand.u32 %s344, 1
          %s2523 = smul.addr %s2522, 8
          %s2524 = scalar_lea.vmem [#allocation16], %s2523
          %2526 = dma.done %s2521, 128
        $region116: #{tpu_custom_call.1} parent=111 // pred_fallthru
          _
      $region112: #{tpu_custom_call.1} parent=5 // pred_fallthru
        _
    $region6: #{tpu_custom_call.1} parent=1 // loop_footer
      %s35 = sadd.s32 1, %s31
    $region7: #{tpu_custom_call.1} parent=1 // loop_footer_branch
      %30 = sbr.rel target = $region3
    $region8: #{tpu_custom_call.1} parent=1 // loop_exit
      _
    %2527 = vsyncpa [#allocation3], 1
    %s2528 = scalar_lea.sflag [#allocation3], 1
    %2529 = vsyncpa %s2528, 1
    %2530 = vsyncpa [#allocation6], 1
    %s2531 = scalar_lea.sflag [#allocation6], 1
    %2532 = vsyncpa %s2531, 1
    %2533 = vsyncpa [#allocation9], 1
    %2534 = vsyncpa [#allocation12], 1
    %2535 = vsyncpa [#allocation15], 1
    %2536 = vsyncpa [#allocation4], 1
    %s2537 = scalar_lea.sflag [#allocation4], 1
    %2538 = vsyncpa %s2537, 1

// kernel: tpu_custom_call.1
$region0: #{tpu_custom_call.1}
  #allocation0 [shape = 'u32[]', space=smem, size = 0x4, offset = 0x4, fixed_abs, tag = 'smem constant byte address 0x4 - core index']
  #allocation1 [shape = 'u32[72,128]{1,0:T(1,128)}', space=vmem, size = 0x9000, scoped, tag = 'internal scratch']
  %s0 = inlined_call_operand.hbm [shape: f32[2,16,128], index: 0, kind: input, shape index: {}]
  %s1 = inlined_call_operand.hbm [shape: f32[2,16,128], index: 1, kind: input, shape index: {}]
  %s2 = inlined_call_operand.vmem [shape: f32[1,128], index: 2, kind: input, shape index: {}]
  %s3 = inlined_call_operand.vmem [shape: f32[1,128], index: 3, kind: input, shape index: {}]
  %s4 = inlined_call_operand.hbm [shape: bf16[128,1152], index: 4, kind: input, shape index: {}]
  %s5 = inlined_call_operand.hbm [shape: bf16[128,128], index: 5, kind: input, shape index: {}]
  %s6 = inlined_call_operand.vmem [shape: f32[1,128], index: 6, kind: input, shape index: {}]
  %s7 = inlined_call_operand.hbm [shape: f32[1,128], index: 7, kind: input, shape index: {}]
  %s8 = inlined_call_operand.hbm [shape: f32[1,128], index: 8, kind: input, shape index: {}]
  %s9 = inlined_call_operand.hbm [shape: bf16[128,512], index: 9, kind: input, shape index: {}]
  %s10 = inlined_call_operand.vmem [shape: f32[1,512], index: 10, kind: input, shape index: {}]
  %s11 = inlined_call_operand.hbm [shape: bf16[512,128], index: 11, kind: input, shape index: {}]
  %s12 = inlined_call_operand.vmem [shape: f32[1,128], index: 12, kind: input, shape index: {}]
  %s13 = inlined_call_operand.hbm [shape: f32[2,16,128], index: 13, kind: output, shape index: {}]
  %s14 = sld [smem:[#allocation0]]
  $region117: #{tpu_custom_call.1} parent=0
    _
  %s16 = ssub.s32 1, %s14
  %s17 = scalar_select 0, %s16, %s14
  $region1: #{tpu_custom_call.1} parent=0
    #allocation2 [shape = 'u8[16384]{0}', space=vmem, size = 0x4000, scoped, tag = 'input window, operand 0']
    #allocation3 [shape = 's32[2]{0}', space=sflag, size = 0x8, scoped, tag = 'scoped memory for tpu_custom_call.1']
    #allocation4 [shape = 's32[2]{0}', space=sflag, size = 0x8, scoped, tag = 'scoped memory for tpu_custom_call.1']
    #allocation5 [shape = 'u8[8192]{0}', space=vmem, size = 0x2000, scoped, tag = 'input window, operand 1']
    #allocation6 [shape = 's32[2]{0}', space=sflag, size = 0x8, scoped, tag = 'scoped memory for tpu_custom_call.1']
    #allocation7 [shape = 'u8[294912]{0}', space=vmem, size = 0x48000, scoped, tag = 'input window, operand 4, single buffered']
    #allocation8 [shape = 'u8[32768]{0}', space=vmem, size = 0x8000, scoped, tag = 'input window, operand 5, single buffered']
    #allocation9 [shape = 's32[1]{0}', space=sflag, size = 0x4, scoped, tag = 'scoped memory for tpu_custom_call.1']
    #allocation10 [shape = 'u8[512]{0}', space=vmem, size = 0x400, scoped, tag = 'input window, operand 7, single buffered']
    #allocation11 [shape = 'u8[512]{0}', space=vmem, size = 0x400, scoped, tag = 'input window, operand 8, single buffered']
    #allocation12 [shape = 's32[1]{0}', space=sflag, size = 0x4, scoped, tag = 'scoped memory for tpu_custom_call.1']
    #allocation13 [shape = 'u8[131072]{0}', space=vmem, size = 0x20000, scoped, tag = 'input window, operand 9, single buffered']
    #allocation14 [shape = 'u8[131072]{0}', space=vmem, size = 0x20000, scoped, tag = 'input window, operand 11, single buffered']
    #allocation15 [shape = 's32[1]{0}', space=sflag, size = 0x4, scoped, tag = 'scoped memory for tpu_custom_call.1']
    #allocation16 [shape = 'u8[8192]{0}', space=vmem, size = 0x2000, scoped, tag = 'output window, operand 0']
    %18 = vsyncpa [#allocation3], 0
    %s19 = scalar_lea.sflag [#allocation3], 1
    %20 = vsyncpa %s19, 0
    %21 = vsyncpa [#allocation6], 0
    %s22 = scalar_lea.sflag [#allocation6], 1
    %23 = vsyncpa %s22, 0
    %24 = vsyncpa [#allocation9], 0
    %25 = vsyncpa [#allocation12], 0
    %26 = vsyncpa [#allocation15], 0
    %27 = vsyncpa [#allocation4], 0
    %s28 = scalar_lea.sflag [#allocation4], 1
    %29 = vsyncpa %s28, 0
    loop: start=0, step=1, limit=6
    $region2: #{tpu_custom_call.1} parent=1 // loop_pre_header
      _
    $region3: #{tpu_custom_call.1} parent=1 // loop_header
      %s31 = sphi 0, %s35
      %p32 = scmp.ge.s32.totalorder %s31, 6
      %s38 = sphi 0, %s50
      %s39 = sphi 0, %s46
      %s40 = sphi 0, %s38
      %s41 = sphi 0, %s39
      %s42 = sphi 0, %s40
      %s43 = sphi 0, %s41
      %s53 = sphi 0, %s55
      %s56 = sphi 0, %s53
      %s57 = sphi 0, %s56
      %s73 = sphi 0, %s57
      %s81 = sphi 0, %s83
      %s84 = sphi 0, %s81
      %s85 = sphi 0, %s84
      %s101 = sphi 0, %s85
      %s105 = sphi 0, %s105
      %s107 = sphi 0, %s105
      %s108 = sphi 0, %s107
      %s122 = sphi 0, %s108
      %s126 = sphi 0, %s126
      %s128 = sphi 0, %s126
      %s129 = sphi 0, %s128
      %s143 = sphi 0, %s129
      %s147 = sphi 0, %s147
      %s149 = sphi 0, %s147
      %s150 = sphi 0, %s149
      %s164 = sphi 0, %s150
      %s168 = sphi 0, %s168
      %s170 = sphi 0, %s168
      %s171 = sphi 0, %s170
      %s185 = sphi 0, %s171
      %s189 = sphi 0, %s189
      %s191 = sphi 0, %s189
      %s192 = sphi 0, %s191
      %s206 = sphi 0, %s192
      %s210 = sphi 0, %s210
      %s212 = sphi 0, %s210
      %s213 = sphi 0, %s212
      %s227 = sphi 0, %s213
      %s231 = sphi 0, %s231
      %s233 = sphi 0, %s231
      %s234 = sphi 0, %s233
      %s248 = sphi 0, %s234
      %s252 = sphi 0, %s252
      %s254 = sphi 0, %s252
      %s255 = sphi 0, %s254
      %s269 = sphi 0, %s255
      %s273 = sphi 0, %s273
      %s275 = sphi 0, %s273
      %s276 = sphi 0, %s275
      %s290 = sphi 0, %s276
      %s294 = sphi 0, %s294
      %s296 = sphi 0, %s294
      %s297 = sphi 0, %s296
      %s311 = sphi 0, %s297
      %s315 = sphi 0, %s315
      %s317 = sphi 0, %s315
      %s318 = sphi 0, %s317
      %s332 = sphi 0, %s318
      %s340 = sphi 0, %s342
      %s343 = sphi 0, %s340
      %s344 = sphi 0, %s343
      %s360 = sphi 0, %s344
    $region4: #{tpu_custom_call.1} parent=1 // loop_header_branch
      %34 = sbr.rel (%p32) target = $region8
    $region5: #{tpu_custom_call.1} parent=1 // loop_body
      %s36 = ssub.s32 %s31, 1
      %s37 = ssub.s32 %s31, 2
      %s44 = sadd.s32 1, %s39
      %p45 = scmp.ge.s32.totalorder %s44, 2
      %s46 = scalar_select %p45, 0, %s44
      %s47 = sadd.s32 1, %s38
      %s48 = scalar_select %p45, %s47, %s38
      %p49 = scmp.ge.s32.totalorder %s48, 2
      %s50 = scalar_select %p49, 0, %s48
      %s51 = ssub.s32 %s38, %s50
      %p52 = scmp.eq.s32.totalorder %s51, 0
      %s54 = sadd.s32 %s53, 1
      %s55 = scalar_select %p52, %s53, %s54
      %p58 = pneg %p52
      %p59 = scmp.eq.s32.totalorder %s31, 3
      %p60 = por %p58, %p59
      %p61 = scmp.ne.s32.totalorder %s53, %s56
      %p62 = scmp.eq.s32.totalorder %s31, 0
      %p63 = por %p61, %p62
      %p64 = scmp.ne.s32.totalorder %s53, %s56
      %p65 = scmp.eq.s32.totalorder %s36, 3
      %p66 = por %p64, %p65
      %p67 = scmp.ne.s32.totalorder %s56, %s57
      %p68 = scmp.eq.s32.totalorder %s36, 0
      %p69 = por %p67, %p68
      %p70 = scmp.ne.s32.totalorder %s56, %s57
      %p71 = scmp.eq.s32.totalorder %s37, 3
      %p72 = por %p70, %p71
      %p74 = scmp.ne.s32.totalorder %s57, %s73
      %p75 = scmp.eq.s32.totalorder %s37, 0
      %p76 = por %p74, %p75
      %s77 = ssub.s32 %s38, %s50
      %s78 = ssub.s32 %s39, %s46
      %s79 = sor.u32 %s77, %s78
      %p80 = scmp.eq.s32.totalorder %s79, 0
      %s82 = sadd.s32 %s81, 1
      %s83 = scalar_select %p80, %s81, %s82
      %p86 = pneg %p80
      %p87 = scmp.eq.s32.totalorder %s31, 3
      %p88 = por %p86, %p87
      %p89 = scmp.ne.s32.totalorder %s81, %s84
      %p90 = scmp.eq.s32.totalorder %s31, 0
      %p91 = por %p89, %p90
      %p92 = scmp.ne.s32.totalorder %s81, %s84
      %p93 = scmp.eq.s32.totalorder %s36, 3
      %p94 = por %p92, %p93
      %p95 = scmp.ne.s32.totalorder %s84, %s85
      %p96 = scmp.eq.s32.totalorder %s36, 0
      %p97 = por %p95, %p96
      %p98 = scmp.ne.s32.totalorder %s84, %s85
      %p99 = scmp.eq.s32.totalorder %s37, 3
      %p100 = por %p98, %p99
      %p102 = scmp.ne.s32.totalorder %s85, %s101
      %p103 = scmp.eq.s32.totalorder %s37, 0
      %p104 = por %p102, %p103
      %s106 = sadd.s32 %s105, 1
      %p109 = scmp.eq.s32.totalorder %s31, 3
      %p110 = scmp.ne.s32.totalorder %s105, %s107
      %p111 = scmp.eq.s32.totalorder %s31, 0
      %p112 = por %p110, %p111
      %p113 = scmp.ne.s32.totalorder %s105, %s107
      %p114 = scmp.eq.s32.totalorder %s36, 3
      %p115 = por %p113, %p114
      %p116 = scmp.ne.s32.totalorder %s107, %s108
      %p117 = scmp.eq.s32.totalorder %s36, 0
      %p118 = por %p116, %p117
      %p119 = scmp.ne.s32.totalorder %s107, %s108
      %p120 = scmp.eq.s32.totalorder %s37, 3
      %p121 = por %p119, %p120
      %p123 = scmp.ne.s32.totalorder %s108, %s122
      %p124 = scmp.eq.s32.totalorder %s37, 0
      %p125 = por %p123, %p124
      %s127 = sadd.s32 %s126, 1
      %p130 = scmp.eq.s32.totalorder %s31, 3
      %p131 = scmp.ne.s32.totalorder %s126, %s128
      %p132 = scmp.eq.s32.totalorder %s31, 0
      %p133 = por %p131, %p132
      %p134 = scmp.ne.s32.totalorder %s126, %s128
      %p135 = scmp.eq.s32.totalorder %s36, 3
      %p136 = por %p134, %p135
      %p137 = scmp.ne.s32.totalorder %s128, %s129
      %p138 = scmp.eq.s32.totalorder %s36, 0
      %p139 = por %p137, %p138
      %p140 = scmp.ne.s32.totalorder %s128, %s129
      %p141 = scmp.eq.s32.totalorder %s37, 3
      %p142 = por %p140, %p141
      %p144 = scmp.ne.s32.totalorder %s129, %s143
      %p145 = scmp.eq.s32.totalorder %s37, 0
      %p146 = por %p144, %p145
      %s148 = sadd.s32 %s147, 1
      %p151 = scmp.eq.s32.totalorder %s31, 3
      %p152 = scmp.ne.s32.totalorder %s147, %s149
      %p153 = scmp.eq.s32.totalorder %s31, 0
      %p154 = por %p152, %p153
      %p155 = scmp.ne.s32.totalorder %s147, %s149
      %p156 = scmp.eq.s32.totalorder %s36, 3
      %p157 = por %p155, %p156
      %p158 = scmp.ne.s32.totalorder %s149, %s150
      %p159 = scmp.eq.s32.totalorder %s36, 0
      %p160 = por %p158, %p159
      %p161 = scmp.ne.s32.totalorder %s149, %s150
      %p162 = scmp.eq.s32.totalorder %s37, 3
      %p163 = por %p161, %p162
      %p165 = scmp.ne.s32.totalorder %s150, %s164
      %p166 = scmp.eq.s32.totalorder %s37, 0
      %p167 = por %p165, %p166
      %s169 = sadd.s32 %s168, 1
      %p172 = scmp.eq.s32.totalorder %s31, 3
      %p173 = scmp.ne.s32.totalorder %s168, %s170
      %p174 = scmp.eq.s32.totalorder %s31, 0
      %p175 = por %p173, %p174
      %p176 = scmp.ne.s32.totalorder %s168, %s170
      %p177 = scmp.eq.s32.totalorder %s36, 3
      %p178 = por %p176, %p177
      %p179 = scmp.ne.s32.totalorder %s170, %s171
      %p180 = scmp.eq.s32.totalorder %s36, 0
      %p181 = por %p179, %p180
      %p182 = scmp.ne.s32.totalorder %s170, %s171
      %p183 = scmp.eq.s32.totalorder %s37, 3
      %p184 = por %p182, %p183
      %p186 = scmp.ne.s32.totalorder %s171, %s185
      %p187 = scmp.eq.s32.totalorder %s37, 0
      %p188 = por %p186, %p187
      %s190 = sadd.s32 %s189, 1
      %p193 = scmp.eq.s32.totalorder %s31, 3
      %p194 = scmp.ne.s32.totalorder %s189, %s191
      %p195 = scmp.eq.s32.totalorder %s31, 0
      %p196 = por %p194, %p195
      %p197 = scmp.ne.s32.totalorder %s189, %s191
      %p198 = scmp.eq.s32.totalorder %s36, 3
      %p199 = por %p197, %p198
      %p200 = scmp.ne.s32.totalorder %s191, %s192
      %p201 = scmp.eq.s32.totalorder %s36, 0
      %p202 = por %p200, %p201
      %p203 = scmp.ne.s32.totalorder %s191, %s192
      %p204 = scmp.eq.s32.totalorder %s37, 3
      %p205 = por %p203, %p204
      %p207 = scmp.ne.s32.totalorder %s192, %s206
      %p208 = scmp.eq.s32.totalorder %s37, 0
      %p209 = por %p207, %p208
      %s211 = sadd.s32 %s210, 1
      %p214 = scmp.eq.s32.totalorder %s31, 3
      %p215 = scmp.ne.s32.totalorder %s210, %s212
      %p216 = scmp.eq.s32.totalorder %s31, 0
      %p217 = por %p215, %p216
      %p218 = scmp.ne.s32.totalorder %s210, %s212
      %p219 = scmp.eq.s32.totalorder %s36, 3
      %p220 = por %p218, %p219
      %p221 = scmp.ne.s32.totalorder %s212, %s213
      %p222 = scmp.eq.s32.totalorder %s36, 0
      %p223 = por %p221, %p222
      %p224 = scmp.ne.s32.totalorder %s212, %s213
      %p225 = scmp.eq.s32.totalorder %s37, 3
      %p226 = por %p224, %p225
      %p228 = scmp.ne.s32.totalorder %s213, %s227
      %p229 = scmp.eq.s32.totalorder %s37, 0
      %p230 = por %p228, %p229
      %s232 = sadd.s32 %s231, 1
      %p235 = scmp.eq.s32.totalorder %s31, 3
      %p236 = scmp.ne.s32.totalorder %s231, %s233
      %p237 = scmp.eq.s32.totalorder %s31, 0
      %p238 = por %p236, %p237
      %p239 = scmp.ne.s32.totalorder %s231, %s233
      %p240 = scmp.eq.s32.totalorder %s36, 3
      %p241 = por %p239, %p240
      %p242 = scmp.ne.s32.totalorder %s233, %s234
      %p243 = scmp.eq.s32.totalorder %s36, 0
      %p244 = por %p242, %p243
      %p245 = scmp.ne.s32.totalorder %s233, %s234
      %p246 = scmp.eq.s32.totalorder %s37, 3
      %p247 = por %p245, %p246
      %p249 = scmp.ne.s32.totalorder %s234, %s248
      %p250 = scmp.eq.s32.totalorder %s37, 0
      %p251 = por %p249, %p250
      %s253 = sadd.s32 %s252, 1
      %p256 = scmp.eq.s32.totalorder %s31, 3
      %p257 = scmp.ne.s32.totalorder %s252, %s254
      %p258 = scmp.eq.s32.totalorder %s31, 0
      %p259 = por %p257, %p258
      %p260 = scmp.ne.s32.totalorder %s252, %s254
      %p261 = scmp.eq.s32.totalorder %s36, 3
      %p262 = por %p260, %p261
      %p263 = scmp.ne.s32.totalorder %s254, %s255
      %p264 = scmp.eq.s32.totalorder %s36, 0
      %p265 = por %p263, %p264
      %p266 = scmp.ne.s32.totalorder %s254, %s255
      %p267 = scmp.eq.s32.totalorder %s37, 3
      %p268 = por %p266, %p267
      %p270 = scmp.ne.s32.totalorder %s255, %s269
      %p271 = scmp.eq.s32.totalorder %s37, 0
      %p272 = por %p270, %p271
      %s274 = sadd.s32 %s273, 1
      %p277 = scmp.eq.s32.totalorder %s31, 3
      %p278 = scmp.ne.s32.totalorder %s273, %s275
      %p279 = scmp.eq.s32.totalorder %s31, 0
      %p280 = por %p278, %p279
      %p281 = scmp.ne.s32.totalorder %s273, %s275
      %p282 = scmp.eq.s32.totalorder %s36, 3
      %p283 = por %p281, %p282
      %p284 = scmp.ne.s32.totalorder %s275, %s276
      %p285 = scmp.eq.s32.totalorder %s36, 0
      %p286 = por %p284, %p285
      %p287 = scmp.ne.s32.totalorder %s275, %s276
      %p288 = scmp.eq.s32.totalorder %s37, 3
      %p289 = por %p287, %p288
      %p291 = scmp.ne.s32.totalorder %s276, %s290
      %p292 = scmp.eq.s32.totalorder %s37, 0
      %p293 = por %p291, %p292
      %s295 = sadd.s32 %s294, 1
      %p298 = scmp.eq.s32.totalorder %s31, 3
      %p299 = scmp.ne.s32.totalorder %s294, %s296
      %p300 = scmp.eq.s32.totalorder %s31, 0
      %p301 = por %p299, %p300
      %p302 = scmp.ne.s32.totalorder %s294, %s296
      %p303 = scmp.eq.s32.totalorder %s36, 3
      %p304 = por %p302, %p303
      %p305 = scmp.ne.s32.totalorder %s296, %s297
      %p306 = scmp.eq.s32.totalorder %s36, 0
      %p307 = por %p305, %p306
      %p308 = scmp.ne.s32.totalorder %s296, %s297
      %p309 = scmp.eq.s32.totalorder %s37, 3
      %p310 = por %p308, %p309
      %p312 = scmp.ne.s32.totalorder %s297, %s311
      %p313 = scmp.eq.s32.totalorder %s37, 0
      %p314 = por %p312, %p313
      %s316 = sadd.s32 %s315, 1
      %p319 = scmp.eq.s32.totalorder %s31, 3
      %p320 = scmp.ne.s32.totalorder %s315, %s317
      %p321 = scmp.eq.s32.totalorder %s31, 0
      %p322 = por %p320, %p321
      %p323 = scmp.ne.s32.totalorder %s315, %s317
      %p324 = scmp.eq.s32.totalorder %s36, 3
      %p325 = por %p323, %p324
      %p326 = scmp.ne.s32.totalorder %s317, %s318
      %p327 = scmp.eq.s32.totalorder %s36, 0
      %p328 = por %p326, %p327
      %p329 = scmp.ne.s32.totalorder %s317, %s318
      %p330 = scmp.eq.s32.totalorder %s37, 3
      %p331 = por %p329, %p330
      %p333 = scmp.ne.s32.totalorder %s318, %s332
      %p334 = scmp.eq.s32.totalorder %s37, 0
      %p335 = por %p333, %p334
      %s336 = ssub.s32 %s38, %s50
      %s337 = ssub.s32 %s39, %s46
      %s338 = sor.u32 %s336, %s337
      %p339 = scmp.eq.s32.totalorder %s338, 0
      %s341 = sadd.s32 %s340, 1
      %s342 = scalar_select %p339, %s340, %s341
      %p345 = pneg %p339
      %p346 = scmp.eq.s32.totalorder %s31, 3
      %p347 = por %p345, %p346
      %p348 = scmp.ne.s32.totalorder %s340, %s343
      %p349 = scmp.eq.s32.totalorder %s31, 0
      %p350 = por %p348, %p349
      %p351 = scmp.ne.s32.totalorder %s340, %s343
      %p352 = scmp.eq.s32.totalorder %s36, 3
      %p353 = por %p351, %p352
      %p354 = scmp.ne.s32.totalorder %s343, %s344
      %p355 = scmp.eq.s32.totalorder %s36, 0
      %p356 = por %p354, %p355
      %p357 = scmp.ne.s32.totalorder %s343, %s344
      %p358 = scmp.eq.s32.totalorder %s37, 3
      %p359 = por %p357, %p358
      %p361 = scmp.ne.s32.totalorder %s344, %s360
      %p362 = scmp.eq.s32.totalorder %s37, 0
      %p363 = por %p361, %p362
      %p364 = scmp.le.s32.totalorder 1, %s31
      %p365 = scmp.lt.s32.totalorder %s31, 5
      %p366 = pnand %p364, %p365
      %p367 = pneg %p366
      // Predicated region
      $region9: #{tpu_custom_call.1} parent=5 // pred_check
        _
      $region10: #{tpu_custom_call.1} parent=5 // pred_check_branch
        %369 = sbr.rel (%p366) target = $region12
      $region11: #{tpu_custom_call.1} parent=5 // pred_region
        %s370 = ssub.s32 %s31, 1
        // Predicated region
        $region13: #{tpu_custom_call.1} parent=11 // pred_check
          %p371 = pneg %p118
        $region14: #{tpu_custom_call.1} parent=11 // pred_check_branch
          %373 = sbr.rel (%p371) target = $region16
        $region15: #{tpu_custom_call.1} parent=11 // pred_region
          _
        $region16: #{tpu_custom_call.1} parent=11 // pred_fallthru
          _
        // Predicated region
        $region17: #{tpu_custom_call.1} parent=11 // pred_check
          %p374 = pneg %p139
        $region18: #{tpu_custom_call.1} parent=11 // pred_check_branch
          %376 = sbr.rel (%p374) target = $region20
        $region19: #{tpu_custom_call.1} parent=11 // pred_region
          _
        $region20: #{tpu_custom_call.1} parent=11 // pred_fallthru
          _
        // Predicated region
        $region21: #{tpu_custom_call.1} parent=11 // pred_check
          %p377 = pneg %p160
        $region22: #{tpu_custom_call.1} parent=11 // pred_check_branch
          %379 = sbr.rel (%p377) target = $region24
        $region23: #{tpu_custom_call.1} parent=11 // pred_region
          %381 = vsyncadd [#allocation6], 0
          %s382 = sshll.u32 %s4, 4
          %s383 = int_to_ptr.hbm [resolvable:$true] %s382
          %s384 = sshll.u32 [#allocation7], 4
          %s385 = int_to_ptr.vmem [resolvable:$true] %s384
          %390 = dma.hbm_to_vmem [thread:$0]  %s383, 9216, %s385, [#allocation6], 576, 576, 36
        $region24: #{tpu_custom_call.1} parent=11 // pred_fallthru
          _
        // Predicated region
        $region25: #{tpu_custom_call.1} parent=11 // pred_check
          %p391 = pneg %p181
        $region26: #{tpu_custom_call.1} parent=11 // pred_check_branch
          %393 = sbr.rel (%p391) target = $region28
        $region27: #{tpu_custom_call.1} parent=11 // pred_region
          %395 = vsyncadd [#allocation9], 0
          %s396 = sshll.u32 %s5, 4
          %s397 = int_to_ptr.hbm [resolvable:$true] %s396
          %s398 = sshll.u32 [#allocation8], 4
          %s399 = int_to_ptr.vmem [resolvable:$true] %s398
          %404 = dma.hbm_to_vmem [thread:$0]  %s397, 1024, %s399, [#allocation9], 64, 64, 4
        $region28: #{tpu_custom_call.1} parent=11 // pred_fallthru
          _
        // Predicated region
        $region29: #{tpu_custom_call.1} parent=11 // pred_check
          %p405 = pneg %p202
        $region30: #{tpu_custom_call.1} parent=11 // pred_check_branch
          %407 = sbr.rel (%p405) target = $region32
        $region31: #{tpu_custom_call.1} parent=11 // pred_region
          _
        $region32: #{tpu_custom_call.1} parent=11 // pred_fallthru
          _
        // Predicated region
        $region33: #{tpu_custom_call.1} parent=11 // pred_check
          %p408 = pneg %p223
        $region34: #{tpu_custom_call.1} parent=11 // pred_check_branch
          %410 = sbr.rel (%p408) target = $region36
        $region35: #{tpu_custom_call.1} parent=11 // pred_region
          %412 = vsyncadd [#allocation9], 0
          %s414 = sshll.u32 %s7, 4
          %s415 = int_to_ptr.hbm [resolvable:$true] %s414
          %s416 = sshll.u32 [#allocation10], 4
          %s417 = int_to_ptr.vmem [resolvable:$true] %s416
          %419 = dma.hbm_to_vmem [thread:$0]  %s415, 16, %s417, [#allocation9]
        $region36: #{tpu_custom_call.1} parent=11 // pred_fallthru
          _
        // Predicated region
        $region37: #{tpu_custom_call.1} parent=11 // pred_check
          %p420 = pneg %p244
        $region38: #{tpu_custom_call.1} parent=11 // pred_check_branch
          %422 = sbr.rel (%p420) target = $region40
        $region39: #{tpu_custom_call.1} parent=11 // pred_region
          %424 = vsyncadd [#allocation12], 0
          %s426 = sshll.u32 %s8, 4
          %s427 = int_to_ptr.hbm [resolvable:$true] %s426
          %s428 = sshll.u32 [#allocation11], 4
          %s429 = int_to_ptr.vmem [resolvable:$true] %s428
          %431 = dma.hbm_to_vmem [thread:$0]  %s427, 16, %s429, [#allocation12]
        $region40: #{tpu_custom_call.1} parent=11 // pred_fallthru
          _
        // Predicated region
        $region41: #{tpu_custom_call.1} parent=11 // pred_check
          %p432 = pneg %p265
        $region42: #{tpu_custom_call.1} parent=11 // pred_check_branch
          %434 = sbr.rel (%p432) target = $region44
        $region43: #{tpu_custom_call.1} parent=11 // pred_region
          %436 = vsyncadd [#allocation12], 0
          %s437 = sshll.u32 %s9, 4
          %s438 = int_to_ptr.hbm [resolvable:$true] %s437
          %s439 = sshll.u32 [#allocation13], 4
          %s440 = int_to_ptr.vmem [resolvable:$true] %s439
          %445 = dma.hbm_to_vmem [thread:$0]  %s438, 4096, %s440, [#allocation12], 256, 256, 16
        $region44: #{tpu_custom_call.1} parent=11 // pred_fallthru
          _
        // Predicated region
        $region45: #{tpu_custom_call.1} parent=11 // pred_check
          %p446 = pneg %p286
        $region46: #{tpu_custom_call.1} parent=11 // pred_check_branch
          %448 = sbr.rel (%p446) target = $region48
        $region47: #{tpu_custom_call.1} parent=11 // pred_region
          _
        $region48: #{tpu_custom_call.1} parent=11 // pred_fallthru
          _
        // Predicated region
        $region49: #{tpu_custom_call.1} parent=11 // pred_check
          %p449 = pneg %p307
        $region50: #{tpu_custom_call.1} parent=11 // pred_check_branch
          %451 = sbr.rel (%p449) target = $region52
        $region51: #{tpu_custom_call.1} parent=11 // pred_region
          %453 = vsyncadd [#allocation15], 0
          %s454 = sshll.u32 %s11, 4
          %s455 = int_to_ptr.hbm [resolvable:$true] %s454
          %s456 = sshll.u32 [#allocation14], 4
          %s457 = int_to_ptr.vmem [resolvable:$true] %s456
          %462 = dma.hbm_to_vmem [thread:$0]  %s455, 4096, %s457, [#allocation15], 64, 64, 4
        $region52: #{tpu_custom_call.1} parent=11 // pred_fallthru
          _
        // Predicated region
        $region53: #{tpu_custom_call.1} parent=11 // pred_check
          %p463 = pneg %p328
        $region54: #{tpu_custom_call.1} parent=11 // pred_check_branch
          %465 = sbr.rel (%p463) target = $region56
        $region55: #{tpu_custom_call.1} parent=11 // pred_region
          _
        $region56: #{tpu_custom_call.1} parent=11 // pred_fallthru
          _
      $region12: #{tpu_custom_call.1} parent=5 // pred_fallthru
        _
      %p466 = scmp.lt.s32.totalorder %s31, 4
      // Predicated region
      $region57: #{tpu_custom_call.1} parent=5 // pred_check
        %p467 = pneg %p466
      $region58: #{tpu_custom_call.1} parent=5 // pred_check_branch
        %469 = sbr.rel (%p467) target = $region60
      $region59: #{tpu_custom_call.1} parent=5 // pred_region
        // Predicated region
        $region61: #{tpu_custom_call.1} parent=59 // pred_check
          %p470 = pneg %p63
        $region62: #{tpu_custom_call.1} parent=59 // pred_check_branch
          %472 = sbr.rel (%p470) target = $region64
        $region63: #{tpu_custom_call.1} parent=59 // pred_region
          %s473 = sand.u32 %s53, 1
          %s474 = scalar_lea.sflag [#allocation3], %s473
          %s475 = sand.u32 %s53, 1
          %s476 = smul.addr %s475, 16
          %s477 = scalar_lea.vmem [#allocation2], %s476
          %479 = vsyncadd %s474, 0
          %s480 = smul.addr %s38, 2
          %s481 = smul.addr %s480, 8
          %s482 = scalar_lea.hbm %s0, %s481
          %s483 = sshll.u32 %s482, 4
          %s484 = int_to_ptr.hbm [resolvable:$true] %s483
          %s485 = sshll.u32 %s477, 4
          %s486 = int_to_ptr.vmem [resolvable:$true] %s485
          %491 = dma.hbm_to_vmem [thread:$0]  %s484, 256, %s486, %s474, 128, 128, 8
        $region64: #{tpu_custom_call.1} parent=59 // pred_fallthru
          _
        // Predicated region
        $region65: #{tpu_custom_call.1} parent=59 // pred_check
          %p492 = pneg %p91
        $region66: #{tpu_custom_call.1} parent=59 // pred_check_branch
          %494 = sbr.rel (%p492) target = $region68
        $region67: #{tpu_custom_call.1} parent=59 // pred_region
          %s495 = sand.u32 %s31, 1
          %s496 = scalar_lea.sflag [#allocation6], %s495
          %s497 = sand.u32 %s81, 1
          %s498 = smul.addr %s497, 8
          %s499 = scalar_lea.vmem [#allocation5], %s498
          %501 = vsyncadd %s496, 0
          %s502 = smul.addr %s38, 2
          %s503 = sadd.s32 %s39, %s502
          %s504 = smul.addr %s503, 8
          %s505 = scalar_lea.hbm %s1, %s504
          %s507 = sshll.u32 %s505, 4
          %s508 = int_to_ptr.hbm [resolvable:$true] %s507
          %s509 = sshll.u32 %s499, 4
          %s510 = int_to_ptr.vmem [resolvable:$true] %s509
          %512 = dma.hbm_to_vmem [thread:$0]  %s508, 128, %s510, %s496
        $region68: #{tpu_custom_call.1} parent=59 // pred_fallthru
          _
      $region60: #{tpu_custom_call.1} parent=5 // pred_fallthru
        _
      %p513 = scmp.le.s32.totalorder 1, %s31
      %p514 = scmp.lt.s32.totalorder %s31, 5
      %p515 = pnand %p513, %p514
      %p516 = pneg %p515
      // Predicated region
      $region69: #{tpu_custom_call.1} parent=5 // pred_check
        _
      $region70: #{tpu_custom_call.1} parent=5 // pred_check_branch
        %518 = sbr.rel (%p515) target = $region72
      $region71: #{tpu_custom_call.1} parent=5 // pred_region
        %s519 = ssub.s32 %s31, 1
        %s520 = sand.u32 %s56, 1
        %s521 = scalar_lea.sflag [#allocation3], %s520
        %s522 = sand.u32 %s56, 1
        %s523 = smul.addr %s522, 16
        %s524 = scalar_lea.vmem [#allocation2], %s523
        // Predicated region
        $region73: #{tpu_custom_call.1} parent=71 // pred_check
          %p525 = pneg %p69
        $region74: #{tpu_custom_call.1} parent=71 // pred_check_branch
          %527 = sbr.rel (%p525) target = $region76
        $region75: #{tpu_custom_call.1} parent=71 // pred_region
          %529 = dma.done %s521, 256
        $region76: #{tpu_custom_call.1} parent=71 // pred_fallthru
          _
        %s530 = sand.u32 %s36, 1
        %s531 = scalar_lea.sflag [#allocation6], %s530
        %s532 = sand.u32 %s84, 1
        %s533 = smul.addr %s532, 8
        %s534 = scalar_lea.vmem [#allocation5], %s533
        // Predicated region
        $region77: #{tpu_custom_call.1} parent=71 // pred_check
          %p535 = pneg %p97
        $region78: #{tpu_custom_call.1} parent=71 // pred_check_branch
          %537 = sbr.rel (%p535) target = $region80
        $region79: #{tpu_custom_call.1} parent=71 // pred_region
          %539 = dma.done %s531, 128
        $region80: #{tpu_custom_call.1} parent=71 // pred_fallthru
          _
        // Predicated region
        $region81: #{tpu_custom_call.1} parent=71 // pred_check
          %p540 = pneg %p160
        $region82: #{tpu_custom_call.1} parent=71 // pred_check_branch
          %542 = sbr.rel (%p540) target = $region84
        $region83: #{tpu_custom_call.1} parent=71 // pred_region
          %544 = dma.done [#allocation6], 9216
        $region84: #{tpu_custom_call.1} parent=71 // pred_fallthru
          _
        // Predicated region
        $region85: #{tpu_custom_call.1} parent=71 // pred_check
          %p545 = pneg %p181
        $region86: #{tpu_custom_call.1} parent=71 // pred_check_branch
          %547 = sbr.rel (%p545) target = $region88
        $region87: #{tpu_custom_call.1} parent=71 // pred_region
          %549 = dma.done [#allocation9], 1024
        $region88: #{tpu_custom_call.1} parent=71 // pred_fallthru
          _
        // Predicated region
        $region89: #{tpu_custom_call.1} parent=71 // pred_check
          %p550 = pneg %p223
        $region90: #{tpu_custom_call.1} parent=71 // pred_check_branch
          %552 = sbr.rel (%p550) target = $region92
        $region91: #{tpu_custom_call.1} parent=71 // pred_region
          %554 = dma.done [#allocation9], 16
        $region92: #{tpu_custom_call.1} parent=71 // pred_fallthru
          _
        // Predicated region
        $region93: #{tpu_custom_call.1} parent=71 // pred_check
          %p555 = pneg %p244
        $region94: #{tpu_custom_call.1} parent=71 // pred_check_branch
          %557 = sbr.rel (%p555) target = $region96
        $region95: #{tpu_custom_call.1} parent=71 // pred_region
          %559 = dma.done [#allocation12], 16
        $region96: #{tpu_custom_call.1} parent=71 // pred_fallthru
          _
        // Predicated region
        $region97: #{tpu_custom_call.1} parent=71 // pred_check
          %p560 = pneg %p265
        $region98: #{tpu_custom_call.1} parent=71 // pred_check_branch
          %562 = sbr.rel (%p560) target = $region100
        $region99: #{tpu_custom_call.1} parent=71 // pred_region
          %564 = dma.done [#allocation12], 4096
        $region100: #{tpu_custom_call.1} parent=71 // pred_fallthru
          _
        // Predicated region
        $region101: #{tpu_custom_call.1} parent=71 // pred_check
          %p565 = pneg %p307
        $region102: #{tpu_custom_call.1} parent=71 // pred_check_branch
          %567 = sbr.rel (%p565) target = $region104
        $region103: #{tpu_custom_call.1} parent=71 // pred_region
          %569 = dma.done [#allocation15], 4096
        $region104: #{tpu_custom_call.1} parent=71 // pred_fallthru
          _
        %s570 = sand.u32 %s56, 1
        %s571 = scalar_lea.sflag [#allocation3], %s570
        %s572 = sand.u32 %s56, 1
        %s573 = smul.addr %s572, 16
        %s574 = scalar_lea.vmem [#allocation2], %s573
        %p575 = pneg %p69
        %p576 = pneg %p66
        %s577 = sand.u32 %s36, 1
        %s578 = scalar_lea.sflag [#allocation6], %s577
        %s579 = sand.u32 %s84, 1
        %s580 = smul.addr %s579, 8
        %s581 = scalar_lea.vmem [#allocation5], %s580
        %p582 = pneg %p97
        %p583 = pneg %p94
        %p584 = pneg %p118
        %p585 = pneg %p115
        %p586 = pneg %p139
        %p587 = pneg %p136
        %p588 = pneg %p160
        %p589 = pneg %p157
        %p590 = pneg %p181
        %p591 = pneg %p178
        %p592 = pneg %p202
        %p593 = pneg %p199
        %p594 = pneg %p223
        %p595 = pneg %p220
        %p596 = pneg %p244
        %p597 = pneg %p241
        %p598 = pneg %p265
        %p599 = pneg %p262
        %p600 = pneg %p286
        %p601 = pneg %p283
        %p602 = pneg %p307
        %p603 = pneg %p304
        %p604 = pneg %p328
        %p605 = pneg %p325
        %p606 = pneg %p356
        %p607 = pneg %p353
        %s608 = sand.u32 %s343, 1
        %s609 = scalar_lea.sflag [#allocation4], %s608
        %s610 = sand.u32 %s343, 1
        %s611 = smul.addr %s610, 8
        %s612 = scalar_lea.vmem [#allocation16], %s611
        %v614 = vld [vmem:[%s524] sm:$0xff]
        %v615 = vld [vmem:[%s524 + $0x8] sm:$0xff]
        %v616 = vld [vmem:[%s534] sm:$0xff]
        %v617 = vld [vmem:[%s2] sm:$0x1]
        %v618 = vld [vmem:[%s3] sm:$0x1]
        %v619 = vld [vmem:[#allocation7] sm:$0xff]
        %v620 = vld [vmem:[#allocation7 + $0x8] sm:$0xff]
        %v621 = vld [vmem:[#allocation7 + $0x10] sm:$0xff]
        %v622 = vld [vmem:[#allocation7 + $0x18] sm:$0xff]
        %v623 = vld [vmem:[#allocation7 + $0x20] sm:$0xf]
        %v624 = vld [vmem:[#allocation7 + $0x24] sm:$0xff]
        %v625 = vld [vmem:[#allocation7 + $0x2c] sm:$0xff]
        %v626 = vld [vmem:[#allocation7 + $0x34] sm:$0xff]
        %v627 = vld [vmem:[#allocation7 + $0x3c] sm:$0xff]
        %v628 = vld [vmem:[#allocation7 + $0x44] sm:$0xf]
        %v629 = vld [vmem:[#allocation7 + $0x48] sm:$0xff]
        %v630 = vld [vmem:[#allocation7 + $0x50] sm:$0xff]
        %v631 = vld [vmem:[#allocation7 + $0x58] sm:$0xff]
        %v632 = vld [vmem:[#allocation7 + $0x60] sm:$0xff]
        %v633 = vld [vmem:[#allocation7 + $0x68] sm:$0xf]
        %v634 = vld [vmem:[#allocation7 + $0x6c] sm:$0xff]
        %v635 = vld [vmem:[#allocation7 + $0x74] sm:$0xff]
        %v636 = vld [vmem:[#allocation7 + $0x7c] sm:$0xff]
        %v637 = vld [vmem:[#allocation7 + $0x84] sm:$0xff]
        %v638 = vld [vmem:[#allocation7 + $0x8c] sm:$0xf]
        %v639 = vld [vmem:[#allocation7 + $0x90] sm:$0xff]
        %v640 = vld [vmem:[#allocation7 + $0x98] sm:$0xff]
        %v641 = vld [vmem:[#allocation7 + $0xa0] sm:$0xff]
        %v642 = vld [vmem:[#allocation7 + $0xa8] sm:$0xff]
        %v643 = vld [vmem:[#allocation7 + $0xb0] sm:$0xf]
        %v644 = vld [vmem:[#allocation7 + $0xb4] sm:$0xff]
        %v645 = vld [vmem:[#allocation7 + $0xbc] sm:$0xff]
        %v646 = vld [vmem:[#allocation7 + $0xc4] sm:$0xff]
        %v647 = vld [vmem:[#allocation7 + $0xcc] sm:$0xff]
        %v648 = vld [vmem:[#allocation7 + $0xd4] sm:$0xf]
        %v649 = vld [vmem:[#allocation7 + $0xd8] sm:$0xff]
        %v650 = vld [vmem:[#allocation7 + $0xe0] sm:$0xff]
        %v651 = vld [vmem:[#allocation7 + $0xe8] sm:$0xff]
        %v652 = vld [vmem:[#allocation7 + $0xf0] sm:$0xff]
        %v653 = vld [vmem:[#allocation7 + $0xf8] sm:$0xf]
        %v654 = vld [vmem:[#allocation7 + $0xfc] sm:$0xff]
        %v655 = vld [vmem:[#allocation7 + $0x104] sm:$0xff]
        %v656 = vld [vmem:[#allocation7 + $0x10c] sm:$0xff]
        %v657 = vld [vmem:[#allocation7 + $0x114] sm:$0xff]
        %v658 = vld [vmem:[#allocation7 + $0x11c] sm:$0xf]
        %v659 = vld [vmem:[#allocation7 + $0x120] sm:$0xff]
        %v660 = vld [vmem:[#allocation7 + $0x128] sm:$0xff]
        %v661 = vld [vmem:[#allocation7 + $0x130] sm:$0xff]
        %v662 = vld [vmem:[#allocation7 + $0x138] sm:$0xff]
        %v663 = vld [vmem:[#allocation7 + $0x140] sm:$0xf]
        %v664 = vld [vmem:[#allocation7 + $0x144] sm:$0xff]
        %v665 = vld [vmem:[#allocation7 + $0x14c] sm:$0xff]
        %v666 = vld [vmem:[#allocation7 + $0x154] sm:$0xff]
        %v667 = vld [vmem:[#allocation7 + $0x15c] sm:$0xff]
        %v668 = vld [vmem:[#allocation7 + $0x164] sm:$0xf]
        %v669 = vld [vmem:[#allocation7 + $0x168] sm:$0xff]
        %v670 = vld [vmem:[#allocation7 + $0x170] sm:$0xff]
        %v671 = vld [vmem:[#allocation7 + $0x178] sm:$0xff]
        %v672 = vld [vmem:[#allocation7 + $0x180] sm:$0xff]
        %v673 = vld [vmem:[#allocation7 + $0x188] sm:$0xf]
        %v674 = vld [vmem:[#allocation7 + $0x18c] sm:$0xff]
        %v675 = vld [vmem:[#allocation7 + $0x194] sm:$0xff]
        %v676 = vld [vmem:[#allocation7 + $0x19c] sm:$0xff]
        %v677 = vld [vmem:[#allocation7 + $0x1a4] sm:$0xff]
        %v678 = vld [vmem:[#allocation7 + $0x1ac] sm:$0xf]
        %v679 = vld [vmem:[#allocation7 + $0x1b0] sm:$0xff]
        %v680 = vld [vmem:[#allocation7 + $0x1b8] sm:$0xff]
        %v681 = vld [vmem:[#allocation7 + $0x1c0] sm:$0xff]
        %v682 = vld [vmem:[#allocation7 + $0x1c8] sm:$0xff]
        %v683 = vld [vmem:[#allocation7 + $0x1d0] sm:$0xf]
        %v684 = vld [vmem:[#allocation7 + $0x1d4] sm:$0xff]
        %v685 = vld [vmem:[#allocation7 + $0x1dc] sm:$0xff]
        %v686 = vld [vmem:[#allocation7 + $0x1e4] sm:$0xff]
        %v687 = vld [vmem:[#allocation7 + $0x1ec] sm:$0xff]
        %v688 = vld [vmem:[#allocation7 + $0x1f4] sm:$0xf]
        %v689 = vld [vmem:[#allocation7 + $0x1f8] sm:$0xff]
        %v690 = vld [vmem:[#allocation7 + $0x200] sm:$0xff]
        %v691 = vld [vmem:[#allocation7 + $0x208] sm:$0xff]
        %v692 = vld [vmem:[#allocation7 + $0x210] sm:$0xff]
        %v693 = vld [vmem:[#allocation7 + $0x218] sm:$0xf]
        %v694 = vld [vmem:[#allocation7 + $0x21c] sm:$0xff]
        %v695 = vld [vmem:[#allocation7 + $0x224] sm:$0xff]
        %v696 = vld [vmem:[#allocation7 + $0x22c] sm:$0xff]
        %v697 = vld [vmem:[#allocation7 + $0x234] sm:$0xff]
        %v698 = vld [vmem:[#allocation7 + $0x23c] sm:$0xf]
        %v699 = vld [vmem:[#allocation8] sm:$0xf]
        %v700 = vld [vmem:[#allocation8 + $0x4] sm:$0xf]
        %v701 = vld [vmem:[#allocation8 + $0x8] sm:$0xf]
        %v702 = vld [vmem:[#allocation8 + $0xc] sm:$0xf]
        %v703 = vld [vmem:[#allocation8 + $0x10] sm:$0xf]
        %v704 = vld [vmem:[#allocation8 + $0x14] sm:$0xf]
        %v705 = vld [vmem:[#allocation8 + $0x18] sm:$0xf]
        %v706 = vld [vmem:[#allocation8 + $0x1c] sm:$0xf]
        %v707 = vld [vmem:[#allocation8 + $0x20] sm:$0xf]
        %v708 = vld [vmem:[#allocation8 + $0x24] sm:$0xf]
        %v709 = vld [vmem:[#allocation8 + $0x28] sm:$0xf]
        %v710 = vld [vmem:[#allocation8 + $0x2c] sm:$0xf]
        %v711 = vld [vmem:[#allocation8 + $0x30] sm:$0xf]
        %v712 = vld [vmem:[#allocation8 + $0x34] sm:$0xf]
        %v713 = vld [vmem:[#allocation8 + $0x38] sm:$0xf]
        %v714 = vld [vmem:[#allocation8 + $0x3c] sm:$0xf]
        %v715 = vld [vmem:[%s6] sm:$0x1]
        %v716 = vld [vmem:[#allocation10] sm:$0x1]
        %v717 = vld [vmem:[#allocation11] sm:$0x1]
        %v718 = vld [vmem:[#allocation13] sm:$0xff]
        %v719 = vld [vmem:[#allocation13 + $0x8] sm:$0xff]
        %v720 = vld [vmem:[#allocation13 + $0x10] sm:$0xff]
        %v721 = vld [vmem:[#allocation13 + $0x18] sm:$0xff]
        %v722 = vld [vmem:[#allocation13 + $0x20] sm:$0xff]
        %v723 = vld [vmem:[#allocation13 + $0x28] sm:$0xff]
        %v724 = vld [vmem:[#allocation13 + $0x30] sm:$0xff]
        %v725 = vld [vmem:[#allocation13 + $0x38] sm:$0xff]
        %v726 = vld [vmem:[#allocation13 + $0x40] sm:$0xff]
        %v727 = vld [vmem:[#allocation13 + $0x48] sm:$0xff]
        %v728 = vld [vmem:[#allocation13 + $0x50] sm:$0xff]
        %v729 = vld [vmem:[#allocation13 + $0x58] sm:$0xff]
        %v730 = vld [vmem:[#allocation13 + $0x60] sm:$0xff]
        %v731 = vld [vmem:[#allocation13 + $0x68] sm:$0xff]
        %v732 = vld [vmem:[#allocation13 + $0x70] sm:$0xff]
        %v733 = vld [vmem:[#allocation13 + $0x78] sm:$0xff]
        %v734 = vld [vmem:[#allocation13 + $0x80] sm:$0xff]
        %v735 = vld [vmem:[#allocation13 + $0x88] sm:$0xff]
        %v736 = vld [vmem:[#allocation13 + $0x90] sm:$0xff]
        %v737 = vld [vmem:[#allocation13 + $0x98] sm:$0xff]
        %v738 = vld [vmem:[#allocation13 + $0xa0] sm:$0xff]
        %v739 = vld [vmem:[#allocation13 + $0xa8] sm:$0xff]
        %v740 = vld [vmem:[#allocation13 + $0xb0] sm:$0xff]
        %v741 = vld [vmem:[#allocation13 + $0xb8] sm:$0xff]
        %v742 = vld [vmem:[#allocation13 + $0xc0] sm:$0xff]
        %v743 = vld [vmem:[#allocation13 + $0xc8] sm:$0xff]
        %v744 = vld [vmem:[#allocation13 + $0xd0] sm:$0xff]
        %v745 = vld [vmem:[#allocation13 + $0xd8] sm:$0xff]
        %v746 = vld [vmem:[#allocation13 + $0xe0] sm:$0xff]
        %v747 = vld [vmem:[#allocation13 + $0xe8] sm:$0xff]
        %v748 = vld [vmem:[#allocation13 + $0xf0] sm:$0xff]
        %v749 = vld [vmem:[#allocation13 + $0xf8] sm:$0xff]
        %v750 = vld [vmem:[%s10] sm:$0xf]
        %v751 = vld [vmem:[#allocation14] sm:$0xf]
        %v752 = vld [vmem:[#allocation14 + $0x4] sm:$0xf]
        %v753 = vld [vmem:[#allocation14 + $0x8] sm:$0xf]
        %v754 = vld [vmem:[#allocation14 + $0xc] sm:$0xf]
        %v755 = vld [vmem:[#allocation14 + $0x10] sm:$0xf]
        %v756 = vld [vmem:[#allocation14 + $0x14] sm:$0xf]
        %v757 = vld [vmem:[#allocation14 + $0x18] sm:$0xf]
        %v758 = vld [vmem:[#allocation14 + $0x1c] sm:$0xf]
        %v759 = vld [vmem:[#allocation14 + $0x20] sm:$0xf]
        %v760 = vld [vmem:[#allocation14 + $0x24] sm:$0xf]
        %v761 = vld [vmem:[#allocation14 + $0x28] sm:$0xf]
        %v762 = vld [vmem:[#allocation14 + $0x2c] sm:$0xf]
        %v763 = vld [vmem:[#allocation14 + $0x30] sm:$0xf]
        %v764 = vld [vmem:[#allocation14 + $0x34] sm:$0xf]
        %v765 = vld [vmem:[#allocation14 + $0x38] sm:$0xf]
        %v766 = vld [vmem:[#allocation14 + $0x3c] sm:$0xf]
        %v767 = vld [vmem:[#allocation14 + $0x40] sm:$0xf]
        %v768 = vld [vmem:[#allocation14 + $0x44] sm:$0xf]
        %v769 = vld [vmem:[#allocation14 + $0x48] sm:$0xf]
        %v770 = vld [vmem:[#allocation14 + $0x4c] sm:$0xf]
        %v771 = vld [vmem:[#allocation14 + $0x50] sm:$0xf]
        %v772 = vld [vmem:[#allocation14 + $0x54] sm:$0xf]
        %v773 = vld [vmem:[#allocation14 + $0x58] sm:$0xf]
        %v774 = vld [vmem:[#allocation14 + $0x5c] sm:$0xf]
        %v775 = vld [vmem:[#allocation14 + $0x60] sm:$0xf]
        %v776 = vld [vmem:[#allocation14 + $0x64] sm:$0xf]
        %v777 = vld [vmem:[#allocation14 + $0x68] sm:$0xf]
        %v778 = vld [vmem:[#allocation14 + $0x6c] sm:$0xf]
        %v779 = vld [vmem:[#allocation14 + $0x70] sm:$0xf]
        %v780 = vld [vmem:[#allocation14 + $0x74] sm:$0xf]
        %v781 = vld [vmem:[#allocation14 + $0x78] sm:$0xf]
        %v782 = vld [vmem:[#allocation14 + $0x7c] sm:$0xf]
        %v783 = vld [vmem:[#allocation14 + $0x80] sm:$0xf]
        %v784 = vld [vmem:[#allocation14 + $0x84] sm:$0xf]
        %v785 = vld [vmem:[#allocation14 + $0x88] sm:$0xf]
        %v786 = vld [vmem:[#allocation14 + $0x8c] sm:$0xf]
        %v787 = vld [vmem:[#allocation14 + $0x90] sm:$0xf]
        %v788 = vld [vmem:[#allocation14 + $0x94] sm:$0xf]
        %v789 = vld [vmem:[#allocation14 + $0x98] sm:$0xf]
        %v790 = vld [vmem:[#allocation14 + $0x9c] sm:$0xf]
        %v791 = vld [vmem:[#allocation14 + $0xa0] sm:$0xf]
        %v792 = vld [vmem:[#allocation14 + $0xa4] sm:$0xf]
        %v793 = vld [vmem:[#allocation14 + $0xa8] sm:$0xf]
        %v794 = vld [vmem:[#allocation14 + $0xac] sm:$0xf]
        %v795 = vld [vmem:[#allocation14 + $0xb0] sm:$0xf]
        %v796 = vld [vmem:[#allocation14 + $0xb4] sm:$0xf]
        %v797 = vld [vmem:[#allocation14 + $0xb8] sm:$0xf]
        %v798 = vld [vmem:[#allocation14 + $0xbc] sm:$0xf]
        %v799 = vld [vmem:[#allocation14 + $0xc0] sm:$0xf]
        %v800 = vld [vmem:[#allocation14 + $0xc4] sm:$0xf]
        %v801 = vld [vmem:[#allocation14 + $0xc8] sm:$0xf]
        %v802 = vld [vmem:[#allocation14 + $0xcc] sm:$0xf]
        %v803 = vld [vmem:[#allocation14 + $0xd0] sm:$0xf]
        %v804 = vld [vmem:[#allocation14 + $0xd4] sm:$0xf]
        %v805 = vld [vmem:[#allocation14 + $0xd8] sm:$0xf]
        %v806 = vld [vmem:[#allocation14 + $0xdc] sm:$0xf]
        %v807 = vld [vmem:[#allocation14 + $0xe0] sm:$0xf]
        %v808 = vld [vmem:[#allocation14 + $0xe4] sm:$0xf]
        %v809 = vld [vmem:[#allocation14 + $0xe8] sm:$0xf]
        %v810 = vld [vmem:[#allocation14 + $0xec] sm:$0xf]
        %v811 = vld [vmem:[#allocation14 + $0xf0] sm:$0xf]
        %v812 = vld [vmem:[#allocation14 + $0xf4] sm:$0xf]
        %v813 = vld [vmem:[#allocation14 + $0xf8] sm:$0xf]
        %v814 = vld [vmem:[#allocation14 + $0xfc] sm:$0xf]
        %v815 = vld [vmem:[%s12] sm:$0x1]
        %v816 = vmul.f32 %v614, %v614
        %v817 = vmul.f32 %v615, %v615
        %820 = vrot.lane.b32.xlu0 %v816, 96
        %v821 = vpop.permute.xlu0 %820
        %822 = vrot.lane.b32.xlu0 %v817, 96
        %v823 = vpop.permute.xlu0 %822
        %v826 = vadd.f32 %v816, %v821
        %v827 = vadd.f32 %v817, %v823
        %828 = vrot.lane.b32.xlu0 %v816, 64
        %v829 = vpop.permute.xlu0 %828
        %830 = vrot.lane.b32.xlu0 %v817, 64
        %v831 = vpop.permute.xlu0 %830
        %v834 = vadd.f32 %v826, %v829
        %v835 = vadd.f32 %v827, %v831
        %836 = vrot.lane.b32.xlu0 %v816, 32
        %v837 = vpop.permute.xlu0 %836
        %838 = vrot.lane.b32.xlu0 %v817, 32
        %v839 = vpop.permute.xlu0 %838
        %v842 = vadd.f32 %v834, %v837
        %v843 = vadd.f32 %v835, %v839
        %v844 = vadd.f32 %v842, 1e-06
        %v845 = vadd.f32 %v843, 1e-06
        %v846 = vrsqrt.pop %v844
        %v847 = vmul.f32 %v846, %v844
        %v848 = vmul.f32 %v847, %v846
        %v849 = vmul.f32 0.5, %v848
        %v850 = vsub.f32 1.5, %v849
        %v851 = vmul.f32 %v846, %v850
        %vm852 = vweird.f32 %v844
        %vm853 = vweird.f32 %v846
        %vm854 = vmor %vm852, %vm853
        %v855 = vsel %vm854, %v846, %v851
        %v856 = vrsqrt.pop %v845
        %v857 = vmul.f32 %v856, %v845
        %v858 = vmul.f32 %v857, %v856
        %v859 = vmul.f32 0.5, %v858
        %v860 = vsub.f32 1.5, %v859
        %v861 = vmul.f32 %v856, %v860
        %vm862 = vweird.f32 %v845
        %vm863 = vweird.f32 %v856
        %vm864 = vmor %vm862, %vm863
        %v865 = vsel %vm864, %v856, %v861
        %868 = vrot.lane.b32.xlu0 %v855, 32
        %v869 = vpop.permute.xlu0 %868
        %870 = vrot.lane.b32.xlu0 %v865, 32
        %v871 = vpop.permute.xlu0 %870
        %874 = vrot.lane.b32.xlu0 %v855, 64
        %v875 = vpop.permute.xlu0 %874
        %876 = vrot.lane.b32.xlu0 %v865, 64
        %v877 = vpop.permute.xlu0 %876
        %880 = vrot.lane.b32.xlu0 %v855, 96
        %v881 = vpop.permute.xlu0 %880
        %882 = vrot.lane.b32.xlu0 %v865, 96
        %v883 = vpop.permute.xlu0 %882
        %vm886 = vcmask 261120
        %v887 = vsel %vm886, %v855, %v869
        %v888 = vsel %vm886, %v865, %v871
        %vm889 = vcmask 523264
        %v890 = vsel %vm889, %v887, %v875
        %v891 = vsel %vm889, %v888, %v877
        %vm892 = vcmask 785408
        %v893 = vsel %vm892, %v890, %v881
        %v894 = vsel %vm892, %v891, %v883
        %v895 = vmul.f32 %v614, %v893
        %v896 = vmul.f32 %v615, %v894
        %v898 = vperm.slane %v617, 0
        %v900 = vmul.f32 %v895, %v898
        %v901 = vmul.f32 %v896, %v898
        %v903 = vperm.slane %v618, 0
        %v905 = vadd.f32 %v900, %v903
        %v906 = vadd.f32 %v901, %v903
        %v907 = vpack.c.bf16 %v906, %v905
        %v908 = vmul.f32 %v616, %v616
        %910 = vrot.lane.b32.xlu0 %v908, 96
        %v911 = vpop.permute.xlu0 %910
        %v913 = vadd.f32 %v908, %v911
        %914 = vrot.lane.b32.xlu0 %v908, 64
        %v915 = vpop.permute.xlu0 %914
        %v917 = vadd.f32 %v913, %v915
        %918 = vrot.lane.b32.xlu0 %v908, 32
        %v919 = vpop.permute.xlu0 %918
        %v921 = vadd.f32 %v917, %v919
        %v922 = vadd.f32 %v921, 1e-06
        %v923 = vrsqrt.pop %v922
        %v924 = vmul.f32 %v923, %v922
        %v925 = vmul.f32 %v924, %v923
        %v926 = vmul.f32 0.5, %v925
        %v927 = vsub.f32 1.5, %v926
        %v928 = vmul.f32 %v923, %v927
        %vm929 = vweird.f32 %v922
        %vm930 = vweird.f32 %v923
        %vm931 = vmor %vm929, %vm930
        %v932 = vsel %vm931, %v923, %v928
        %934 = vrot.lane.b32.xlu0 %v932, 32
        %v935 = vpop.permute.xlu0 %934
        %937 = vrot.lane.b32.xlu0 %v932, 64
        %v938 = vpop.permute.xlu0 %937
        %940 = vrot.lane.b32.xlu0 %v932, 96
        %v941 = vpop.permute.xlu0 %940
        %v943 = vsel %vm886, %v932, %v935
        %v944 = vsel %vm889, %v943, %v938
        %v945 = vsel %vm892, %v944, %v941
        %v946 = vmul.f32 %v616, %v945
        %v947 = vmul.f32 %v946, %v898
        %v948 = vadd.f32 %v947, %v903
        %v949 = vpack.c.bf16 %v948, %v948
        %v966 = vunpack.c.l.b16 %v619
        %v967 = vunpack.c.l.b16 %v624
        %v968 = vunpack.c.l.b16 %v629
        %v969 = vunpack.c.l.b16 %v634
        %v970 = vunpack.c.l.b16 %v639
        %v971 = vunpack.c.l.b16 %v644
        %v972 = vunpack.c.l.b16 %v649
        %v973 = vunpack.c.l.b16 %v654
        %v974 = vunpack.c.l.b16 %v659
        %v975 = vunpack.c.l.b16 %v664
        %v976 = vunpack.c.l.b16 %v669
        %v977 = vunpack.c.l.b16 %v674
        %v978 = vunpack.c.l.b16 %v679
        %v979 = vunpack.c.l.b16 %v684
        %v980 = vunpack.c.l.b16 %v689
        %v981 = vunpack.c.l.b16 %v694
        %v982 = vpack.c.b16 %v967, %v966
        %v983 = vpack.c.b16 %v969, %v968
        %v984 = vpack.c.b16 %v971, %v970
        %v985 = vpack.c.b16 %v973, %v972
        %v986 = vpack.c.b16 %v975, %v974
        %v987 = vpack.c.b16 %v977, %v976
        %v988 = vpack.c.b16 %v979, %v978
        %v989 = vpack.c.b16 %v981, %v980
        %998 = vmatpush.bf16.msra.mxu0 %v989
        %999 = vmatpush.bf16.msra.mxu0 %v988
        %1000 = vmatpush.bf16.msra.mxu0 %v987
        %1001 = vmatpush.bf16.msra.mxu0 %v986
        %1002 = vmatpush.bf16.msra.mxu0 %v985
        %1003 = vmatpush.bf16.msra.mxu0 %v984
        %1004 = vmatpush.bf16.msra.mxu0 %v983
        %1005 = vmatpush.bf16.msra.mxu0 %v982
        %1006 = vmatmul.bf16.gmra.mxu0 %v949
        %v1007 = vpop.f32.mrf.mxu0
        %v1008 = vadd.f32 0.0, %v1007
        %v1009 = vpop.f32.mrf.mxu0
        %1010 = vdwg.mxu0
        %v1075 = vunpack.c.h.b16 %v619
        %v1076 = vunpack.c.l.b16 %v620
        %v1077 = vunpack.c.h.b16 %v620
        %v1078 = vunpack.c.l.b16 %v621
        %v1079 = vunpack.c.h.b16 %v621
        %v1080 = vunpack.c.l.b16 %v622
        %v1081 = vunpack.c.h.b16 %v622
        %v1082 = vunpack.c.l.b16 %v623
        %v1083 = vunpack.c.h.b16 %v624
        %v1084 = vunpack.c.l.b16 %v625
        %v1085 = vunpack.c.h.b16 %v625
        %v1086 = vunpack.c.l.b16 %v626
        %v1087 = vunpack.c.h.b16 %v626
        %v1088 = vunpack.c.l.b16 %v627
        %v1089 = vunpack.c.h.b16 %v627
        %v1090 = vunpack.c.l.b16 %v628
        %v1091 = vunpack.c.h.b16 %v629
        %v1092 = vunpack.c.l.b16 %v630
        %v1093 = vunpack.c.h.b16 %v630
        %v1094 = vunpack.c.l.b16 %v631
        %v1095 = vunpack.c.h.b16 %v631
        %v1096 = vunpack.c.l.b16 %v632
        %v1097 = vunpack.c.h.b16 %v632
        %v1098 = vunpack.c.l.b16 %v633
        %v1099 = vunpack.c.h.b16 %v634
        %v1100 = vunpack.c.l.b16 %v635
        %v1101 = vunpack.c.h.b16 %v635
        %v1102 = vunpack.c.l.b16 %v636
        %v1103 = vunpack.c.h.b16 %v636
        %v1104 = vunpack.c.l.b16 %v637
        %v1105 = vunpack.c.h.b16 %v637
        %v1106 = vunpack.c.l.b16 %v638
        %v1107 = vunpack.c.h.b16 %v639
        %v1108 = vunpack.c.l.b16 %v640
        %v1109 = vunpack.c.h.b16 %v640
        %v1110 = vunpack.c.l.b16 %v641
        %v1111 = vunpack.c.h.b16 %v641
        %v1112 = vunpack.c.l.b16 %v642
        %v1113 = vunpack.c.h.b16 %v642
        %v1114 = vunpack.c.l.b16 %v643
        %v1115 = vunpack.c.h.b16 %v644
        %v1116 = vunpack.c.l.b16 %v645
        %v1117 = vunpack.c.h.b16 %v645
        %v1118 = vunpack.c.l.b16 %v646
        %v1119 = vunpack.c.h.b16 %v646
        %v1120 = vunpack.c.l.b16 %v647
        %v1121 = vunpack.c.h.b16 %v647
        %v1122 = vunpack.c.l.b16 %v648
        %v1123 = vunpack.c.h.b16 %v649
        %v1124 = vunpack.c.l.b16 %v650
        %v1125 = vunpack.c.h.b16 %v650
        %v1126 = vunpack.c.l.b16 %v651
        %v1127 = vunpack.c.h.b16 %v651
        %v1128 = vunpack.c.l.b16 %v652
        %v1129 = vunpack.c.h.b16 %v652
        %v1130 = vunpack.c.l.b16 %v653
        %v1131 = vunpack.c.h.b16 %v654
        %v1132 = vunpack.c.l.b16 %v655
        %v1133 = vunpack.c.h.b16 %v655
        %v1134 = vunpack.c.l.b16 %v656
        %v1135 = vunpack.c.h.b16 %v656
        %v1136 = vunpack.c.l.b16 %v657
        %v1137 = vunpack.c.h.b16 %v657
        %v1138 = vunpack.c.l.b16 %v658
        %v1139 = vunpack.c.h.b16 %v659
        %v1140 = vunpack.c.l.b16 %v660
        %v1141 = vunpack.c.h.b16 %v660
        %v1142 = vunpack.c.l.b16 %v661
        %v1143 = vunpack.c.h.b16 %v661
        %v1144 = vunpack.c.l.b16 %v662
        %v1145 = vunpack.c.h.b16 %v662
        %v1146 = vunpack.c.l.b16 %v663
        %v1147 = vunpack.c.h.b16 %v664
        %v1148 = vunpack.c.l.b16 %v665
        %v1149 = vunpack.c.h.b16 %v665
        %v1150 = vunpack.c.l.b16 %v666
        %v1151 = vunpack.c.h.b16 %v666
        %v1152 = vunpack.c.l.b16 %v667
        %v1153 = vunpack.c.h.b16 %v667
        %v1154 = vunpack.c.l.b16 %v668
        %v1155 = vunpack.c.h.b16 %v669
        %v1156 = vunpack.c.l.b16 %v670
        %v1157 = vunpack.c.h.b16 %v670
        %v1158 = vunpack.c.l.b16 %v671
        %v1159 = vunpack.c.h.b16 %v671
        %v1160 = vunpack.c.l.b16 %v672
        %v1161 = vunpack.c.h.b16 %v672
        %v1162 = vunpack.c.l.b16 %v673
        %v1163 = vunpack.c.h.b16 %v674
        %v1164 = vunpack.c.l.b16 %v675
        %v1165 = vunpack.c.h.b16 %v675
        %v1166 = vunpack.c.l.b16 %v676
        %v1167 = vunpack.c.h.b16 %v676
        %v1168 = vunpack.c.l.b16 %v677
        %v1169 = vunpack.c.h.b16 %v677
        %v1170 = vunpack.c.l.b16 %v678
        %v1171 = vunpack.c.h.b16 %v679
        %v1172 = vunpack.c.l.b16 %v680
        %v1173 = vunpack.c.h.b16 %v680
        %v1174 = vunpack.c.l.b16 %v681
        %v1175 = vunpack.c.h.b16 %v681
        %v1176 = vunpack.c.l.b16 %v682
        %v1177 = vunpack.c.h.b16 %v682
        %v1178 = vunpack.c.l.b16 %v683
        %v1179 = vunpack.c.h.b16 %v684
        %v1180 = vunpack.c.l.b16 %v685
        %v1181 = vunpack.c.h.b16 %v685
        %v1182 = vunpack.c.l.b16 %v686
        %v1183 = vunpack.c.h.b16 %v686
        %v1184 = vunpack.c.l.b16 %v687
        %v1185 = vunpack.c.h.b16 %v687
        %v1186 = vunpack.c.l.b16 %v688
        %v1187 = vunpack.c.h.b16 %v689
        %v1188 = vunpack.c.l.b16 %v690
        %v1189 = vunpack.c.h.b16 %v690
        %v1190 = vunpack.c.l.b16 %v691
        %v1191 = vunpack.c.h.b16 %v691
        %v1192 = vunpack.c.l.b16 %v692
        %v1193 = vunpack.c.h.b16 %v692
        %v1194 = vunpack.c.l.b16 %v693
        %v1195 = vunpack.c.h.b16 %v694
        %v1196 = vunpack.c.l.b16 %v695
        %v1197 = vunpack.c.h.b16 %v695
        %v1198 = vunpack.c.l.b16 %v696
        %v1199 = vunpack.c.h.b16 %v696
        %v1200 = vunpack.c.l.b16 %v697
        %v1201 = vunpack.c.h.b16 %v697
        %v1202 = vunpack.c.l.b16 %v698
        %v1203 = vpack.c.b16 %v1083, %v1075
        %v1204 = vpack.c.b16 %v1084, %v1076
        %v1205 = vpack.c.b16 %v1085, %v1077
        %v1206 = vpack.c.b16 %v1086, %v1078
        %v1207 = vpack.c.b16 %v1087, %v1079
        %v1208 = vpack.c.b16 %v1088, %v1080
        %v1209 = vpack.c.b16 %v1089, %v1081
        %v1210 = vpack.c.b16 %v1090, %v1082
        %v1211 = vpack.c.b16 %v1099, %v1091
        %v1212 = vpack.c.b16 %v1100, %v1092
        %v1213 = vpack.c.b16 %v1101, %v1093
        %v1214 = vpack.c.b16 %v1102, %v1094
        %v1215 = vpack.c.b16 %v1103, %v1095
        %v1216 = vpack.c.b16 %v1104, %v1096
        %v1217 = vpack.c.b16 %v1105, %v1097
        %v1218 = vpack.c.b16 %v1106, %v1098
        %v1219 = vpack.c.b16 %v1115, %v1107
        %v1220 = vpack.c.b16 %v1116, %v1108
        %v1221 = vpack.c.b16 %v1117, %v1109
        %v1222 = vpack.c.b16 %v1118, %v1110
        %v1223 = vpack.c.b16 %v1119, %v1111
        %v1224 = vpack.c.b16 %v1120, %v1112
        %v1225 = vpack.c.b16 %v1121, %v1113
        %v1226 = vpack.c.b16 %v1122, %v1114
        %v1227 = vpack.c.b16 %v1131, %v1123
        %v1228 = vpack.c.b16 %v1132, %v1124
        %v1229 = vpack.c.b16 %v1133, %v1125
        %v1230 = vpack.c.b16 %v1134, %v1126
        %v1231 = vpack.c.b16 %v1135, %v1127
        %v1232 = vpack.c.b16 %v1136, %v1128
        %v1233 = vpack.c.b16 %v1137, %v1129
        %v1234 = vpack.c.b16 %v1138, %v1130
        %v1235 = vpack.c.b16 %v1147, %v1139
        %v1236 = vpack.c.b16 %v1148, %v1140
        %v1237 = vpack.c.b16 %v1149, %v1141
        %v1238 = vpack.c.b16 %v1150, %v1142
        %v1239 = vpack.c.b16 %v1151, %v1143
        %v1240 = vpack.c.b16 %v1152, %v1144
        %v1241 = vpack.c.b16 %v1153, %v1145
        %v1242 = vpack.c.b16 %v1154, %v1146
        %v1243 = vpack.c.b16 %v1163, %v1155
        %v1244 = vpack.c.b16 %v1164, %v1156
        %v1245 = vpack.c.b16 %v1165, %v1157
        %v1246 = vpack.c.b16 %v1166, %v1158
        %v1247 = vpack.c.b16 %v1167, %v1159
        %v1248 = vpack.c.b16 %v1168, %v1160
        %v1249 = vpack.c.b16 %v1169, %v1161
        %v1250 = vpack.c.b16 %v1170, %v1162
        %v1251 = vpack.c.b16 %v1179, %v1171
        %v1252 = vpack.c.b16 %v1180, %v1172
        %v1253 = vpack.c.b16 %v1181, %v1173
        %v1254 = vpack.c.b16 %v1182, %v1174
        %v1255 = vpack.c.b16 %v1183, %v1175
        %v1256 = vpack.c.b16 %v1184, %v1176
        %v1257 = vpack.c.b16 %v1185, %v1177
        %v1258 = vpack.c.b16 %v1186, %v1178
        %v1259 = vpack.c.b16 %v1195, %v1187
        %v1260 = vpack.c.b16 %v1196, %v1188
        %v1261 = vpack.c.b16 %v1197, %v1189
        %v1262 = vpack.c.b16 %v1198, %v1190
        %v1263 = vpack.c.b16 %v1199, %v1191
        %v1264 = vpack.c.b16 %v1200, %v1192
        %v1265 = vpack.c.b16 %v1201, %v1193
        %v1266 = vpack.c.b16 %v1202, %v1194
        %1331 = vmatpush.bf16.msra.mxu0 %v1259
        %1332 = vmatpush.bf16.msra.mxu0 %v1251
        %1333 = vmatpush.bf16.msra.mxu0 %v1243
        %1334 = vmatpush.bf16.msra.mxu0 %v1235
        %1335 = vmatpush.bf16.msra.mxu0 %v1227
        %1336 = vmatpush.bf16.msra.mxu0 %v1219
        %1337 = vmatpush.bf16.msra.mxu0 %v1211
        %1338 = vmatpush.bf16.msra.mxu0 %v1203
        %1339 = vmatmul.bf16.gmra.mxu0 %v907
        %v1340 = vpop.f32.mrf.mxu0
        %v1341 = vadd.f32 0.0, %v1340
        %v1342 = vpop.f32.mrf.mxu0
        %v1343 = vadd.f32 0.0, %v1342
        %1344 = vdwg.mxu0
        %1345 = vmatpush.bf16.msra.mxu0 %v1260
        %1346 = vmatpush.bf16.msra.mxu0 %v1252
        %1347 = vmatpush.bf16.msra.mxu0 %v1244
        %1348 = vmatpush.bf16.msra.mxu0 %v1236
        %1349 = vmatpush.bf16.msra.mxu0 %v1228
        %1350 = vmatpush.bf16.msra.mxu0 %v1220
        %1351 = vmatpush.bf16.msra.mxu0 %v1212
        %1352 = vmatpush.bf16.msra.mxu0 %v1204
        %1353 = vmatmul.bf16.gmra.mxu0 %v907
        %v1354 = vpop.f32.mrf.mxu0
        %v1355 = vadd.f32 0.0, %v1354
        %v1356 = vpop.f32.mrf.mxu0
        %v1357 = vadd.f32 0.0, %v1356
        %1358 = vdwg.mxu0
        %1359 = vmatpush.bf16.msra.mxu0 %v1261
        %1360 = vmatpush.bf16.msra.mxu0 %v1253
        %1361 = vmatpush.bf16.msra.mxu0 %v1245
        %1362 = vmatpush.bf16.msra.mxu0 %v1237
        %1363 = vmatpush.bf16.msra.mxu0 %v1229
        %1364 = vmatpush.bf16.msra.mxu0 %v1221
        %1365 = vmatpush.bf16.msra.mxu0 %v1213
        %1366 = vmatpush.bf16.msra.mxu0 %v1205
        %1367 = vmatmul.bf16.gmra.mxu0 %v907
        %v1368 = vpop.f32.mrf.mxu0
        %v1369 = vadd.f32 0.0, %v1368
        %v1370 = vpop.f32.mrf.mxu0
        %v1371 = vadd.f32 0.0, %v1370
        %1372 = vdwg.mxu0
        %1373 = vmatpush.bf16.msra.mxu0 %v1262
        %1374 = vmatpush.bf16.msra.mxu0 %v1254
        %1375 = vmatpush.bf16.msra.mxu0 %v1246
        %1376 = vmatpush.bf16.msra.mxu0 %v1238
        %1377 = vmatpush.bf16.msra.mxu0 %v1230
        %1378 = vmatpush.bf16.msra.mxu0 %v1222
        %1379 = vmatpush.bf16.msra.mxu0 %v1214
        %1380 = vmatpush.bf16.msra.mxu0 %v1206
        %1381 = vmatmul.bf16.gmra.mxu0 %v907
        %v1382 = vpop.f32.mrf.mxu0
        %v1383 = vadd.f32 0.0, %v1382
        %v1384 = vpop.f32.mrf.mxu0
        %v1385 = vadd.f32 0.0, %v1384
        %1386 = vdwg.mxu0
        %1387 = vmatpush.bf16.msra.mxu0 %v1263
        %1388 = vmatpush.bf16.msra.mxu0 %v1255
        %1389 = vmatpush.bf16.msra.mxu0 %v1247
        %1390 = vmatpush.bf16.msra.mxu0 %v1239
        %1391 = vmatpush.bf16.msra.mxu0 %v1231
        %1392 = vmatpush.bf16.msra.mxu0 %v1223
        %1393 = vmatpush.bf16.msra.mxu0 %v1215
        %1394 = vmatpush.bf16.msra.mxu0 %v1207
        %1395 = vmatmul.bf16.gmra.mxu0 %v907
        %v1396 = vpop.f32.mrf.mxu0
        %v1397 = vadd.f32 0.0, %v1396
        %v1398 = vpop.f32.mrf.mxu0
        %v1399 = vadd.f32 0.0, %v1398
        %1400 = vdwg.mxu0
        %1401 = vmatpush.bf16.msra.mxu0 %v1264
        %1402 = vmatpush.bf16.msra.mxu0 %v1256
        %1403 = vmatpush.bf16.msra.mxu0 %v1248
        %1404 = vmatpush.bf16.msra.mxu0 %v1240
        %1405 = vmatpush.bf16.msra.mxu0 %v1232
        %1406 = vmatpush.bf16.msra.mxu0 %v1224
        %1407 = vmatpush.bf16.msra.mxu0 %v1216
        %1408 = vmatpush.bf16.msra.mxu0 %v1208
        %1409 = vmatmul.bf16.gmra.mxu0 %v907
        %v1410 = vpop.f32.mrf.mxu0
        %v1411 = vadd.f32 0.0, %v1410
        %v1412 = vpop.f32.mrf.mxu0
        %v1413 = vadd.f32 0.0, %v1412
        %1414 = vdwg.mxu0
        %1415 = vmatpush.bf16.msra.mxu0 %v1265
        %1416 = vmatpush.bf16.msra.mxu0 %v1257
        %1417 = vmatpush.bf16.msra.mxu0 %v1249
        %1418 = vmatpush.bf16.msra.mxu0 %v1241
        %1419 = vmatpush.bf16.msra.mxu0 %v1233
        %1420 = vmatpush.bf16.msra.mxu0 %v1225
        %1421 = vmatpush.bf16.msra.mxu0 %v1217
        %1422 = vmatpush.bf16.msra.mxu0 %v1209
        %1423 = vmatmul.bf16.gmra.mxu0 %v907
        %v1424 = vpop.f32.mrf.mxu0
        %v1425 = vadd.f32 0.0, %v1424
        %v1426 = vpop.f32.mrf.mxu0
        %v1427 = vadd.f32 0.0, %v1426
        %1428 = vdwg.mxu0
        %1429 = vmatpush.bf16.msra.mxu0 %v1266
        %1430 = vmatpush.bf16.msra.mxu0 %v1258
        %1431 = vmatpush.bf16.msra.mxu0 %v1250
        %1432 = vmatpush.bf16.msra.mxu0 %v1242
        %1433 = vmatpush.bf16.msra.mxu0 %v1234
        %1434 = vmatpush.bf16.msra.mxu0 %v1226
        %1435 = vmatpush.bf16.msra.mxu0 %v1218
        %1436 = vmatpush.bf16.msra.mxu0 %v1210
        %1437 = vmatmul.bf16.gmra.mxu0 %v907
        %v1438 = vpop.f32.mrf.mxu0
        %v1439 = vadd.f32 0.0, %v1438
        %v1440 = vpop.f32.mrf.mxu0
        %v1441 = vadd.f32 0.0, %v1440
        %1442 = vdwg.mxu0
        %v1443 = vpack.c.bf16 %v1008, %v1008
        %v1444 = vpack.c.bf16 %v1343, %v1341
        %v1445 = vpack.c.bf16 %v1399, %v1397
        %v1447 = vsel %vm889, %v1443, 0
        %v1450 = vsel %vm889, %v1444, 0
        %1452 = vmatpush.bf16.xpose.msra.mxu0 0
        %1453 = vmatpush.bf16.xpose.msra.mxu0 0
        %1454 = vmatpush.bf16.xpose.msra.mxu0 0
        %1455 = vmatpush.bf16.xpose.msra.mxu0 0
        %1456 = vmatpush.bf16.xpose.msra.mxu0 0
        %1457 = vmatpush.bf16.xpose.msra.mxu0 0
        %1458 = vmatpush.bf16.xpose.msra.mxu0 0
        %1459 = vmatpush.bf16.xpose.msra.mxu0 %v1450
        %1460 = vmatmul.bf16.gmra.mxu0 %v1447
        %v1461 = vpop.f32.mrf.mxu0
        %v1462 = vadd.f32 0.0, %v1461
        %v1463 = vpop.f32.mrf.mxu0
        %1464 = vdwg.mxu0
        %vm1465 = vcmask 130048
        %v1466 = vsel %vm1465, %v1462, -inf
        %1467 = vmax.xlane.f32.xlu0 %v1466
        %v1468 = vpop.xlane.xlu0 %1467
        %v1469 = vsub.f32 %v1462, %v1468
        %v1470 = vmul.f32 %v1469, 1.442695
        %v1471 = vpow.pop %v1470
        %v1472 = vsel %vm1465, %v1471, 0.0
        %1473 = vadd.xlane.f32.xlu0 %v1472
        %v1474 = vpop.xlane.xlu0 %1473
        %v1475 = vrcp.pop %v1474
        %v1476 = vmul.f32 %v1471, %v1475
        %v1477 = vpack.c.bf16 %v1476, %v1476
        %v1478 = vpack.c.bf16 %v1357, %v1355
        %v1479 = vpack.c.bf16 %v1413, %v1411
        %v1481 = vsel %vm889, %v1478, 0
        %1483 = vmatpush.bf16.xpose.msra.mxu0 0
        %1484 = vmatpush.bf16.xpose.msra.mxu0 0
        %1485 = vmatpush.bf16.xpose.msra.mxu0 0
        %1486 = vmatpush.bf16.xpose.msra.mxu0 0
        %1487 = vmatpush.bf16.xpose.msra.mxu0 0
        %1488 = vmatpush.bf16.xpose.msra.mxu0 0
        %1489 = vmatpush.bf16.xpose.msra.mxu0 0
        %1490 = vmatpush.bf16.xpose.msra.mxu0 %v1481
        %1491 = vmatmul.bf16.gmra.mxu0 %v1447
        %v1492 = vpop.f32.mrf.mxu0
        %v1493 = vadd.f32 0.0, %v1492
        %v1494 = vpop.f32.mrf.mxu0
        %1495 = vdwg.mxu0
        %v1496 = vsel %vm1465, %v1493, -inf
        %1497 = vmax.xlane.f32.xlu0 %v1496
        %v1498 = vpop.xlane.xlu0 %1497
        %v1499 = vsub.f32 %v1493, %v1498
        %v1500 = vmul.f32 %v1499, 1.442695
        %v1501 = vpow.pop %v1500
        %v1502 = vsel %vm1465, %v1501, 0.0
        %1503 = vadd.xlane.f32.xlu0 %v1502
        %v1504 = vpop.xlane.xlu0 %1503
        %v1505 = vrcp.pop %v1504
        %v1506 = vmul.f32 %v1501, %v1505
        %v1507 = vpack.c.bf16 %v1506, %v1506
        %v1509 = vsel %vm1465, %v1507, 0
        %1511 = vmatpush.bf16.msra.mxu0 0
        %1512 = vmatpush.bf16.msra.mxu0 0
        %1513 = vmatpush.bf16.msra.mxu0 0
        %1514 = vmatpush.bf16.msra.mxu0 0
        %1515 = vmatpush.bf16.msra.mxu0 0
        %1516 = vmatpush.bf16.msra.mxu0 0
        %1517 = vmatpush.bf16.msra.mxu0 0
        %1518 = vmatpush.bf16.msra.mxu0 %v1479
        %1519 = vmatmul.bf16.gmra.mxu0 %v1509
        %v1520 = vpop.f32.mrf.mxu0
        %v1521 = vadd.f32 0.0, %v1520
        %v1522 = vpop.f32.mrf.mxu0
        %1523 = vdwg.mxu0
        %v1525 = vsel %vm1465, %v1477, 0
        %1527 = vmatpush.bf16.msra.mxu0 0
        %1528 = vmatpush.bf16.msra.mxu0 0
        %1529 = vmatpush.bf16.msra.mxu0 0
        %1530 = vmatpush.bf16.msra.mxu0 0
        %1531 = vmatpush.bf16.msra.mxu0 0
        %1532 = vmatpush.bf16.msra.mxu0 0
        %1533 = vmatpush.bf16.msra.mxu0 0
        %1534 = vmatpush.bf16.msra.mxu0 %v1445
        %1535 = vmatmul.bf16.gmra.mxu0 %v1525
        %v1536 = vpop.f32.mrf.mxu0
        %v1537 = vadd.f32 %v1521, %v1536
        %v1538 = vpop.f32.mrf.mxu0
        %1539 = vdwg.mxu0
        %v1540 = vpack.c.bf16 %v1371, %v1369
        %v1541 = vpack.c.bf16 %v1427, %v1425
        %v1543 = vsel %vm889, %v1540, 0
        %1545 = vmatpush.bf16.xpose.msra.mxu0 0
        %1546 = vmatpush.bf16.xpose.msra.mxu0 0
        %1547 = vmatpush.bf16.xpose.msra.mxu0 0
        %1548 = vmatpush.bf16.xpose.msra.mxu0 0
        %1549 = vmatpush.bf16.xpose.msra.mxu0 0
        %1550 = vmatpush.bf16.xpose.msra.mxu0 0
        %1551 = vmatpush.bf16.xpose.msra.mxu0 0
        %1552 = vmatpush.bf16.xpose.msra.mxu0 %v1543
        %1553 = vmatmul.bf16.gmra.mxu0 %v1447
        %v1554 = vpop.f32.mrf.mxu0
        %v1555 = vadd.f32 0.0, %v1554
        %v1556 = vpop.f32.mrf.mxu0
        %1557 = vdwg.mxu0
        %v1558 = vsel %vm1465, %v1555, -inf
        %1559 = vmax.xlane.f32.xlu0 %v1558
        %v1560 = vpop.xlane.xlu0 %1559
        %v1561 = vsub.f32 %v1555, %v1560
        %v1562 = vmul.f32 %v1561, 1.442695
        %v1563 = vpow.pop %v1562
        %v1564 = vsel %vm1465, %v1563, 0.0
        %1565 = vadd.xlane.f32.xlu0 %v1564
        %v1566 = vpop.xlane.xlu0 %1565
        %v1567 = vrcp.pop %v1566
        %v1568 = vmul.f32 %v1563, %v1567
        %v1569 = vpack.c.bf16 %v1568, %v1568
        %v1571 = vsel %vm1465, %v1569, 0
        %1573 = vmatpush.bf16.msra.mxu0 0
        %1574 = vmatpush.bf16.msra.mxu0 0
        %1575 = vmatpush.bf16.msra.mxu0 0
        %1576 = vmatpush.bf16.msra.mxu0 0
        %1577 = vmatpush.bf16.msra.mxu0 0
        %1578 = vmatpush.bf16.msra.mxu0 0
        %1579 = vmatpush.bf16.msra.mxu0 0
        %1580 = vmatpush.bf16.msra.mxu0 %v1541
        %1581 = vmatmul.bf16.gmra.mxu0 %v1571
        %v1582 = vpop.f32.mrf.mxu0
        %v1583 = vadd.f32 0.0, %v1582
        %v1584 = vpop.f32.mrf.mxu0
        %1585 = vdwg.mxu0
        %v1586 = vadd.f32 %v1537, %v1583
        %v1587 = vpack.c.bf16 %v1385, %v1383
        %v1588 = vpack.c.bf16 %v1441, %v1439
        %v1590 = vsel %vm889, %v1587, 0
        %1592 = vmatpush.bf16.xpose.msra.mxu0 0
        %1593 = vmatpush.bf16.xpose.msra.mxu0 0
        %1594 = vmatpush.bf16.xpose.msra.mxu0 0
        %1595 = vmatpush.bf16.xpose.msra.mxu0 0
        %1596 = vmatpush.bf16.xpose.msra.mxu0 0
        %1597 = vmatpush.bf16.xpose.msra.mxu0 0
        %1598 = vmatpush.bf16.xpose.msra.mxu0 0
        %1599 = vmatpush.bf16.xpose.msra.mxu0 %v1590
        %1600 = vmatmul.bf16.gmra.mxu0 %v1447
        %v1601 = vpop.f32.mrf.mxu0
        %v1602 = vadd.f32 0.0, %v1601
        %v1603 = vpop.f32.mrf.mxu0
        %1604 = vdwg.mxu0
        %v1605 = vsel %vm1465, %v1602, -inf
        %1606 = vmax.xlane.f32.xlu0 %v1605
        %v1607 = vpop.xlane.xlu0 %1606
        %v1608 = vsub.f32 %v1602, %v1607
        %v1609 = vmul.f32 %v1608, 1.442695
        %v1610 = vpow.pop %v1609
        %v1611 = vsel %vm1465, %v1610, 0.0
        %1612 = vadd.xlane.f32.xlu0 %v1611
        %v1613 = vpop.xlane.xlu0 %1612
        %v1614 = vrcp.pop %v1613
        %v1615 = vmul.f32 %v1610, %v1614
        %v1616 = vpack.c.bf16 %v1615, %v1615
        %v1618 = vsel %vm1465, %v1616, 0
        %1620 = vmatpush.bf16.msra.mxu0 0
        %1621 = vmatpush.bf16.msra.mxu0 0
        %1622 = vmatpush.bf16.msra.mxu0 0
        %1623 = vmatpush.bf16.msra.mxu0 0
        %1624 = vmatpush.bf16.msra.mxu0 0
        %1625 = vmatpush.bf16.msra.mxu0 0
        %1626 = vmatpush.bf16.msra.mxu0 0
        %1627 = vmatpush.bf16.msra.mxu0 %v1588
        %1628 = vmatmul.bf16.gmra.mxu0 %v1618
        %v1629 = vpop.f32.mrf.mxu0
        %v1630 = vadd.f32 0.0, %v1629
        %v1631 = vpop.f32.mrf.mxu0
        %1632 = vdwg.mxu0
        %v1633 = vadd.f32 %v1586, %v1630
        %v1634 = vpack.c.bf16 %v1633, %v1633
        %1636 = vrot.lane.b32.xlu0 %v1443, 64
        %v1637 = vpop.permute.xlu0 %1636
        %1639 = vrot.lane.b32.xlu0 %v1444, 64
        %v1640 = vpop.permute.xlu0 %1639
        %v1642 = vsel %vm889, %v1637, 0
        %v1645 = vsel %vm889, %v1640, 0
        %1647 = vmatpush.bf16.xpose.msra.mxu0 0
        %1648 = vmatpush.bf16.xpose.msra.mxu0 0
        %1649 = vmatpush.bf16.xpose.msra.mxu0 0
        %1650 = vmatpush.bf16.xpose.msra.mxu0 0
        %1651 = vmatpush.bf16.xpose.msra.mxu0 0
        %1652 = vmatpush.bf16.xpose.msra.mxu0 0
        %1653 = vmatpush.bf16.xpose.msra.mxu0 0
        %1654 = vmatpush.bf16.xpose.msra.mxu0 %v1645
        %1655 = vmatmul.bf16.gmra.mxu0 %v1642
        %v1656 = vpop.f32.mrf.mxu0
        %v1657 = vadd.f32 0.0, %v1656
        %v1658 = vpop.f32.mrf.mxu0
        %1659 = vdwg.mxu0
        %v1660 = vsel %vm1465, %v1657, -inf
        %1661 = vmax.xlane.f32.xlu0 %v1660
        %v1662 = vpop.xlane.xlu0 %1661
        %v1663 = vsub.f32 %v1657, %v1662
        %v1664 = vmul.f32 %v1663, 1.442695
        %v1665 = vpow.pop %v1664
        %v1666 = vsel %vm1465, %v1665, 0.0
        %1667 = vadd.xlane.f32.xlu0 %v1666
        %v1668 = vpop.xlane.xlu0 %1667
        %v1669 = vrcp.pop %v1668
        %v1670 = vmul.f32 %v1665, %v1669
        %v1671 = vpack.c.bf16 %v1670, %v1670
        %1673 = vrot.lane.b32.xlu0 %v1478, 64
        %v1674 = vpop.permute.xlu0 %1673
        %v1676 = vsel %vm889, %v1674, 0
        %1678 = vmatpush.bf16.xpose.msra.mxu0 0
        %1679 = vmatpush.bf16.xpose.msra.mxu0 0
        %1680 = vmatpush.bf16.xpose.msra.mxu0 0
        %1681 = vmatpush.bf16.xpose.msra.mxu0 0
        %1682 = vmatpush.bf16.xpose.msra.mxu0 0
        %1683 = vmatpush.bf16.xpose.msra.mxu0 0
        %1684 = vmatpush.bf16.xpose.msra.mxu0 0
        %1685 = vmatpush.bf16.xpose.msra.mxu0 %v1676
        %1686 = vmatmul.bf16.gmra.mxu0 %v1642
        %v1687 = vpop.f32.mrf.mxu0
        %v1688 = vadd.f32 0.0, %v1687
        %v1689 = vpop.f32.mrf.mxu0
        %1690 = vdwg.mxu0
        %v1691 = vsel %vm1465, %v1688, -inf
        %1692 = vmax.xlane.f32.xlu0 %v1691
        %v1693 = vpop.xlane.xlu0 %1692
        %v1694 = vsub.f32 %v1688, %v1693
        %v1695 = vmul.f32 %v1694, 1.442695
        %v1696 = vpow.pop %v1695
        %v1697 = vsel %vm1465, %v1696, 0.0
        %1698 = vadd.xlane.f32.xlu0 %v1697
        %v1699 = vpop.xlane.xlu0 %1698
        %v1700 = vrcp.pop %v1699
        %v1701 = vmul.f32 %v1696, %v1700
        %v1702 = vpack.c.bf16 %v1701, %v1701
        %1704 = vrot.lane.b32.xlu0 %v1479, 64
        %v1705 = vpop.permute.xlu0 %1704
        %v1708 = vsel %vm1465, %v1702, 0
        %1710 = vmatpush.bf16.msra.mxu0 0
        %1711 = vmatpush.bf16.msra.mxu0 0
        %1712 = vmatpush.bf16.msra.mxu0 0
        %1713 = vmatpush.bf16.msra.mxu0 0
        %1714 = vmatpush.bf16.msra.mxu0 0
        %1715 = vmatpush.bf16.msra.mxu0 0
        %1716 = vmatpush.bf16.msra.mxu0 0
        %1717 = vmatpush.bf16.msra.mxu0 %v1705
        %1718 = vmatmul.bf16.gmra.mxu0 %v1708
        %v1719 = vpop.f32.mrf.mxu0
        %v1720 = vadd.f32 0.0, %v1719
        %v1721 = vpop.f32.mrf.mxu0
        %1722 = vdwg.mxu0
        %1724 = vrot.lane.b32.xlu0 %v1445, 64
        %v1725 = vpop.permute.xlu0 %1724
        %v1728 = vsel %vm1465, %v1671, 0
        %1730 = vmatpush.bf16.msra.mxu0 0
        %1731 = vmatpush.bf16.msra.mxu0 0
        %1732 = vmatpush.bf16.msra.mxu0 0
        %1733 = vmatpush.bf16.msra.mxu0 0
        %1734 = vmatpush.bf16.msra.mxu0 0
        %1735 = vmatpush.bf16.msra.mxu0 0
        %1736 = vmatpush.bf16.msra.mxu0 0
        %1737 = vmatpush.bf16.msra.mxu0 %v1725
        %1738 = vmatmul.bf16.gmra.mxu0 %v1728
        %v1739 = vpop.f32.mrf.mxu0
        %v1740 = vadd.f32 %v1720, %v1739
        %v1741 = vpop.f32.mrf.mxu0
        %1742 = vdwg.mxu0
        %1744 = vrot.lane.b32.xlu0 %v1540, 64
        %v1745 = vpop.permute.xlu0 %1744
        %v1747 = vsel %vm889, %v1745, 0
        %1749 = vmatpush.bf16.xpose.msra.mxu0 0
        %1750 = vmatpush.bf16.xpose.msra.mxu0 0
        %1751 = vmatpush.bf16.xpose.msra.mxu0 0
        %1752 = vmatpush.bf16.xpose.msra.mxu0 0
        %1753 = vmatpush.bf16.xpose.msra.mxu0 0
        %1754 = vmatpush.bf16.xpose.msra.mxu0 0
        %1755 = vmatpush.bf16.xpose.msra.mxu0 0
        %1756 = vmatpush.bf16.xpose.msra.mxu0 %v1747
        %1757 = vmatmul.bf16.gmra.mxu0 %v1642
        %v1758 = vpop.f32.mrf.mxu0
        %v1759 = vadd.f32 0.0, %v1758
        %v1760 = vpop.f32.mrf.mxu0
        %1761 = vdwg.mxu0
        %v1762 = vsel %vm1465, %v1759, -inf
        %1763 = vmax.xlane.f32.xlu0 %v1762
        %v1764 = vpop.xlane.xlu0 %1763
        %v1765 = vsub.f32 %v1759, %v1764
        %v1766 = vmul.f32 %v1765, 1.442695
        %v1767 = vpow.pop %v1766
        %v1768 = vsel %vm1465, %v1767, 0.0
        %1769 = vadd.xlane.f32.xlu0 %v1768
        %v1770 = vpop.xlane.xlu0 %1769
        %v1771 = vrcp.pop %v1770
        %v1772 = vmul.f32 %v1767, %v1771
        %v1773 = vpack.c.bf16 %v1772, %v1772
        %1775 = vrot.lane.b32.xlu0 %v1541, 64
        %v1776 = vpop.permute.xlu0 %1775
        %v1779 = vsel %vm1465, %v1773, 0
        %1781 = vmatpush.bf16.msra.mxu0 0
        %1782 = vmatpush.bf16.msra.mxu0 0
        %1783 = vmatpush.bf16.msra.mxu0 0
        %1784 = vmatpush.bf16.msra.mxu0 0
        %1785 = vmatpush.bf16.msra.mxu0 0
        %1786 = vmatpush.bf16.msra.mxu0 0
        %1787 = vmatpush.bf16.msra.mxu0 0
        %1788 = vmatpush.bf16.msra.mxu0 %v1776
        %1789 = vmatmul.bf16.gmra.mxu0 %v1779
        %v1790 = vpop.f32.mrf.mxu0
        %v1791 = vadd.f32 0.0, %v1790
        %v1792 = vpop.f32.mrf.mxu0
        %1793 = vdwg.mxu0
        %v1794 = vadd.f32 %v1740, %v1791
        %1796 = vrot.lane.b32.xlu0 %v1587, 64
        %v1797 = vpop.permute.xlu0 %1796
        %v1799 = vsel %vm889, %v1797, 0
        %1801 = vmatpush.bf16.xpose.msra.mxu0 0
        %1802 = vmatpush.bf16.xpose.msra.mxu0 0
        %1803 = vmatpush.bf16.xpose.msra.mxu0 0
        %1804 = vmatpush.bf16.xpose.msra.mxu0 0
        %1805 = vmatpush.bf16.xpose.msra.mxu0 0
        %1806 = vmatpush.bf16.xpose.msra.mxu0 0
        %1807 = vmatpush.bf16.xpose.msra.mxu0 0
        %1808 = vmatpush.bf16.xpose.msra.mxu0 %v1799
        %1809 = vmatmul.bf16.gmra.mxu0 %v1642
        %v1810 = vpop.f32.mrf.mxu0
        %v1811 = vadd.f32 0.0, %v1810
        %v1812 = vpop.f32.mrf.mxu0
        %1813 = vdwg.mxu0
        %v1814 = vsel %vm1465, %v1811, -inf
        %1815 = vmax.xlane.f32.xlu0 %v1814
        %v1816 = vpop.xlane.xlu0 %1815
        %v1817 = vsub.f32 %v1811, %v1816
        %v1818 = vmul.f32 %v1817, 1.442695
        %v1819 = vpow.pop %v1818
        %v1820 = vsel %vm1465, %v1819, 0.0
        %1821 = vadd.xlane.f32.xlu0 %v1820
        %v1822 = vpop.xlane.xlu0 %1821
        %v1823 = vrcp.pop %v1822
        %v1824 = vmul.f32 %v1819, %v1823
        %v1825 = vpack.c.bf16 %v1824, %v1824
        %1827 = vrot.lane.b32.xlu0 %v1588, 64
        %v1828 = vpop.permute.xlu0 %1827
        %v1831 = vsel %vm1465, %v1825, 0
        %1833 = vmatpush.bf16.msra.mxu0 0
        %1834 = vmatpush.bf16.msra.mxu0 0
        %1835 = vmatpush.bf16.msra.mxu0 0
        %1836 = vmatpush.bf16.msra.mxu0 0
        %1837 = vmatpush.bf16.msra.mxu0 0
        %1838 = vmatpush.bf16.msra.mxu0 0
        %1839 = vmatpush.bf16.msra.mxu0 0
        %1840 = vmatpush.bf16.msra.mxu0 %v1828
        %1841 = vmatmul.bf16.gmra.mxu0 %v1831
        %v1842 = vpop.f32.mrf.mxu0
        %v1843 = vadd.f32 0.0, %v1842
        %v1844 = vpop.f32.mrf.mxu0
        %1845 = vdwg.mxu0
        %v1846 = vadd.f32 %v1794, %v1843
        %v1847 = vpack.c.bf16 %v1846, %v1846
        %v1856 = vunpack.c.l.b16 %v707
        %v1857 = vunpack.c.l.b16 %v708
        %v1858 = vunpack.c.l.b16 %v709
        %v1859 = vunpack.c.l.b16 %v710
        %v1860 = vunpack.c.l.b16 %v711
        %v1861 = vunpack.c.l.b16 %v712
        %v1862 = vunpack.c.l.b16 %v713
        %v1863 = vunpack.c.l.b16 %v714
        %v1864 = vpack.c.b16 %v1857, %v1856
        %v1865 = vpack.c.b16 %v1859, %v1858
        %v1866 = vpack.c.b16 %v1861, %v1860
        %v1867 = vpack.c.b16 %v1863, %v1862
        %v1873 = vsel %vm889, %v1847, 0
        %1875 = vmatpush.bf16.msra.mxu0 0
        %1876 = vmatpush.bf16.msra.mxu0 0
        %1877 = vmatpush.bf16.msra.mxu0 0
        %1878 = vmatpush.bf16.msra.mxu0 0
        %1879 = vmatpush.bf16.msra.mxu0 %v1867
        %1880 = vmatpush.bf16.msra.mxu0 %v1866
        %1881 = vmatpush.bf16.msra.mxu0 %v1865
        %1882 = vmatpush.bf16.msra.mxu0 %v1864
        %1883 = vmatmul.bf16.gmra.mxu0 %v1873
        %v1884 = vpop.f32.mrf.mxu0
        %v1885 = vadd.f32 0.0, %v1884
        %v1886 = vpop.f32.mrf.mxu0
        %1887 = vdwg.mxu0
        %v1896 = vunpack.c.l.b16 %v699
        %v1897 = vunpack.c.l.b16 %v700
        %v1898 = vunpack.c.l.b16 %v701
        %v1899 = vunpack.c.l.b16 %v702
        %v1900 = vunpack.c.l.b16 %v703
        %v1901 = vunpack.c.l.b16 %v704
        %v1902 = vunpack.c.l.b16 %v705
        %v1903 = vunpack.c.l.b16 %v706
        %v1904 = vpack.c.b16 %v1897, %v1896
        %v1905 = vpack.c.b16 %v1899, %v1898
        %v1906 = vpack.c.b16 %v1901, %v1900
        %v1907 = vpack.c.b16 %v1903, %v1902
        %v1913 = vsel %vm889, %v1634, 0
        %1915 = vmatpush.bf16.msra.mxu0 0
        %1916 = vmatpush.bf16.msra.mxu0 0
        %1917 = vmatpush.bf16.msra.mxu0 0
        %1918 = vmatpush.bf16.msra.mxu0 0
        %1919 = vmatpush.bf16.msra.mxu0 %v1907
        %1920 = vmatpush.bf16.msra.mxu0 %v1906
        %1921 = vmatpush.bf16.msra.mxu0 %v1905
        %1922 = vmatpush.bf16.msra.mxu0 %v1904
        %1923 = vmatmul.bf16.gmra.mxu0 %v1913
        %v1924 = vpop.f32.mrf.mxu0
        %v1925 = vadd.f32 %v1885, %v1924
        %v1926 = vpop.f32.mrf.mxu0
        %1927 = vdwg.mxu0
        %v1928 = vadd.f32 %v616, %v1925
        %v1930 = vperm.slane %v715, 0
        %v1932 = vadd.f32 %v1928, %v1930
        %v1933 = vmul.f32 %v1932, %v1932
        %1935 = vrot.lane.b32.xlu0 %v1933, 96
        %v1936 = vpop.permute.xlu0 %1935
        %v1938 = vadd.f32 %v1933, %v1936
        %1939 = vrot.lane.b32.xlu0 %v1933, 64
        %v1940 = vpop.permute.xlu0 %1939
        %v1942 = vadd.f32 %v1938, %v1940
        %1943 = vrot.lane.b32.xlu0 %v1933, 32
        %v1944 = vpop.permute.xlu0 %1943
        %v1946 = vadd.f32 %v1942, %v1944
        %v1947 = vadd.f32 %v1946, 1e-06
        %v1948 = vrsqrt.pop %v1947
        %v1949 = vmul.f32 %v1948, %v1947
        %v1950 = vmul.f32 %v1949, %v1948
        %v1951 = vmul.f32 0.5, %v1950
        %v1952 = vsub.f32 1.5, %v1951
        %v1953 = vmul.f32 %v1948, %v1952
        %vm1954 = vweird.f32 %v1947
        %vm1955 = vweird.f32 %v1948
        %vm1956 = vmor %vm1954, %vm1955
        %v1957 = vsel %vm1956, %v1948, %v1953
        %1959 = vrot.lane.b32.xlu0 %v1957, 32
        %v1960 = vpop.permute.xlu0 %1959
        %1962 = vrot.lane.b32.xlu0 %v1957, 64
        %v1963 = vpop.permute.xlu0 %1962
        %1965 = vrot.lane.b32.xlu0 %v1957, 96
        %v1966 = vpop.permute.xlu0 %1965
        %v1968 = vsel %vm886, %v1957, %v1960
        %v1969 = vsel %vm889, %v1968, %v1963
        %v1970 = vsel %vm892, %v1969, %v1966
        %v1971 = vmul.f32 %v1932, %v1970
        %v1973 = vperm.slane %v716, 0
        %v1975 = vmul.f32 %v1971, %v1973
        %v1977 = vperm.slane %v717, 0
        %v1979 = vadd.f32 %v1975, %v1977
        %v1980 = vpack.c.bf16 %v1979, %v1979
        %v1982 = vperm.slane %v750, 0
        %v1983 = vperm.slane %v750, 1
        %v1984 = vperm.slane %v750, 2
        %v1985 = vperm.slane %v750, 3
        %v2022 = vunpack.c.l.b16 %v718
        %v2023 = vunpack.c.h.b16 %v718
        %v2024 = vunpack.c.l.b16 %v719
        %v2025 = vunpack.c.h.b16 %v719
        %v2026 = vunpack.c.l.b16 %v720
        %v2027 = vunpack.c.h.b16 %v720
        %v2028 = vunpack.c.l.b16 %v721
        %v2029 = vunpack.c.h.b16 %v721
        %v2030 = vunpack.c.l.b16 %v722
        %v2031 = vunpack.c.h.b16 %v722
        %v2032 = vunpack.c.l.b16 %v723
        %v2033 = vunpack.c.h.b16 %v723
        %v2034 = vunpack.c.l.b16 %v724
        %v2035 = vunpack.c.h.b16 %v724
        %v2036 = vunpack.c.l.b16 %v725
        %v2037 = vunpack.c.h.b16 %v725
        %v2038 = vunpack.c.l.b16 %v726
        %v2039 = vunpack.c.h.b16 %v726
        %v2040 = vunpack.c.l.b16 %v727
        %v2041 = vunpack.c.h.b16 %v727
        %v2042 = vunpack.c.l.b16 %v728
        %v2043 = vunpack.c.h.b16 %v728
        %v2044 = vunpack.c.l.b16 %v729
        %v2045 = vunpack.c.h.b16 %v729
        %v2046 = vunpack.c.l.b16 %v730
        %v2047 = vunpack.c.h.b16 %v730
        %v2048 = vunpack.c.l.b16 %v731
        %v2049 = vunpack.c.h.b16 %v731
        %v2050 = vunpack.c.l.b16 %v732
        %v2051 = vunpack.c.h.b16 %v732
        %v2052 = vunpack.c.l.b16 %v733
        %v2053 = vunpack.c.h.b16 %v733
        %v2054 = vunpack.c.l.b16 %v734
        %v2055 = vunpack.c.h.b16 %v734
        %v2056 = vunpack.c.l.b16 %v735
        %v2057 = vunpack.c.h.b16 %v735
        %v2058 = vunpack.c.l.b16 %v736
        %v2059 = vunpack.c.h.b16 %v736
        %v2060 = vunpack.c.l.b16 %v737
        %v2061 = vunpack.c.h.b16 %v737
        %v2062 = vunpack.c.l.b16 %v738
        %v2063 = vunpack.c.h.b16 %v738
        %v2064 = vunpack.c.l.b16 %v739
        %v2065 = vunpack.c.h.b16 %v739
        %v2066 = vunpack.c.l.b16 %v740
        %v2067 = vunpack.c.h.b16 %v740
        %v2068 = vunpack.c.l.b16 %v741
        %v2069 = vunpack.c.h.b16 %v741
        %v2070 = vunpack.c.l.b16 %v742
        %v2071 = vunpack.c.h.b16 %v742
        %v2072 = vunpack.c.l.b16 %v743
        %v2073 = vunpack.c.h.b16 %v743
        %v2074 = vunpack.c.l.b16 %v744
        %v2075 = vunpack.c.h.b16 %v744
        %v2076 = vunpack.c.l.b16 %v745
        %v2077 = vunpack.c.h.b16 %v745
        %v2078 = vunpack.c.l.b16 %v746
        %v2079 = vunpack.c.h.b16 %v746
        %v2080 = vunpack.c.l.b16 %v747
        %v2081 = vunpack.c.h.b16 %v747
        %v2082 = vunpack.c.l.b16 %v748
        %v2083 = vunpack.c.h.b16 %v748
        %v2084 = vunpack.c.l.b16 %v749
        %v2085 = vunpack.c.h.b16 %v749
        %v2086 = vpack.c.b16 %v2026, %v2022
        %v2087 = vpack.c.b16 %v2027, %v2023
        %v2088 = vpack.c.b16 %v2028, %v2024
        %v2089 = vpack.c.b16 %v2029, %v2025
        %v2090 = vpack.c.b16 %v2034, %v2030
        %v2091 = vpack.c.b16 %v2035, %v2031
        %v2092 = vpack.c.b16 %v2036, %v2032
        %v2093 = vpack.c.b16 %v2037, %v2033
        %v2094 = vpack.c.b16 %v2042, %v2038
        %v2095 = vpack.c.b16 %v2043, %v2039
        %v2096 = vpack.c.b16 %v2044, %v2040
        %v2097 = vpack.c.b16 %v2045, %v2041
        %v2098 = vpack.c.b16 %v2050, %v2046
        %v2099 = vpack.c.b16 %v2051, %v2047
        %v2100 = vpack.c.b16 %v2052, %v2048
        %v2101 = vpack.c.b16 %v2053, %v2049
        %v2102 = vpack.c.b16 %v2058, %v2054
        %v2103 = vpack.c.b16 %v2059, %v2055
        %v2104 = vpack.c.b16 %v2060, %v2056
        %v2105 = vpack.c.b16 %v2061, %v2057
        %v2106 = vpack.c.b16 %v2066, %v2062
        %v2107 = vpack.c.b16 %v2067, %v2063
        %v2108 = vpack.c.b16 %v2068, %v2064
        %v2109 = vpack.c.b16 %v2069, %v2065
        %v2110 = vpack.c.b16 %v2074, %v2070
        %v2111 = vpack.c.b16 %v2075, %v2071
        %v2112 = vpack.c.b16 %v2076, %v2072
        %v2113 = vpack.c.b16 %v2077, %v2073
        %v2114 = vpack.c.b16 %v2082, %v2078
        %v2115 = vpack.c.b16 %v2083, %v2079
        %v2116 = vpack.c.b16 %v2084, %v2080
        %v2117 = vpack.c.b16 %v2085, %v2081
        %2150 = vmatpush.bf16.msra.mxu0 %v2114
        %2151 = vmatpush.bf16.msra.mxu0 %v2110
        %2152 = vmatpush.bf16.msra.mxu0 %v2106
        %2153 = vmatpush.bf16.msra.mxu0 %v2102
        %2154 = vmatpush.bf16.msra.mxu0 %v2098
        %2155 = vmatpush.bf16.msra.mxu0 %v2094
        %2156 = vmatpush.bf16.msra.mxu0 %v2090
        %2157 = vmatpush.bf16.msra.mxu0 %v2086
        %2158 = vmatmul.bf16.gmra.mxu0 %v1980
        %v2159 = vpop.f32.mrf.mxu0
        %v2160 = vadd.f32 %v1982, %v2159
        %v2161 = vpop.f32.mrf.mxu0
        %2162 = vdwg.mxu0
        %2163 = vmatpush.bf16.msra.mxu0 %v2115
        %2164 = vmatpush.bf16.msra.mxu0 %v2111
        %2165 = vmatpush.bf16.msra.mxu0 %v2107
        %2166 = vmatpush.bf16.msra.mxu0 %v2103
        %2167 = vmatpush.bf16.msra.mxu0 %v2099
        %2168 = vmatpush.bf16.msra.mxu0 %v2095
        %2169 = vmatpush.bf16.msra.mxu0 %v2091
        %2170 = vmatpush.bf16.msra.mxu0 %v2087
        %2171 = vmatmul.bf16.gmra.mxu0 %v1980
        %v2172 = vpop.f32.mrf.mxu0
        %v2173 = vadd.f32 %v1983, %v2172
        %v2174 = vpop.f32.mrf.mxu0
        %2175 = vdwg.mxu0
        %2176 = vmatpush.bf16.msra.mxu0 %v2116
        %2177 = vmatpush.bf16.msra.mxu0 %v2112
        %2178 = vmatpush.bf16.msra.mxu0 %v2108
        %2179 = vmatpush.bf16.msra.mxu0 %v2104
        %2180 = vmatpush.bf16.msra.mxu0 %v2100
        %2181 = vmatpush.bf16.msra.mxu0 %v2096
        %2182 = vmatpush.bf16.msra.mxu0 %v2092
        %2183 = vmatpush.bf16.msra.mxu0 %v2088
        %2184 = vmatmul.bf16.gmra.mxu0 %v1980
        %v2185 = vpop.f32.mrf.mxu0
        %v2186 = vadd.f32 %v1984, %v2185
        %v2187 = vpop.f32.mrf.mxu0
        %2188 = vdwg.mxu0
        %2189 = vmatpush.bf16.msra.mxu0 %v2117
        %2190 = vmatpush.bf16.msra.mxu0 %v2113
        %2191 = vmatpush.bf16.msra.mxu0 %v2109
        %2192 = vmatpush.bf16.msra.mxu0 %v2105
        %2193 = vmatpush.bf16.msra.mxu0 %v2101
        %2194 = vmatpush.bf16.msra.mxu0 %v2097
        %2195 = vmatpush.bf16.msra.mxu0 %v2093
        %2196 = vmatpush.bf16.msra.mxu0 %v2089
        %2197 = vmatmul.bf16.gmra.mxu0 %v1980
        %v2198 = vpop.f32.mrf.mxu0
        %v2199 = vadd.f32 %v1985, %v2198
        %v2200 = vpop.f32.mrf.mxu0
        %2201 = vdwg.mxu0
        %v2202 = vmul.f32 %v2160, 0.5
        %v2203 = vmul.f32 %v2173, 0.5
        %v2204 = vmul.f32 %v2186, 0.5
        %v2205 = vmul.f32 %v2199, 0.5
        %v2206 = vmul.f32 %v2160, 0.044715
        %v2207 = vmul.f32 %v2173, 0.044715
        %v2208 = vmul.f32 %v2186, 0.044715
        %v2209 = vmul.f32 %v2199, 0.044715
        %v2210 = vmul.f32 %v2206, %v2160
        %v2211 = vmul.f32 %v2207, %v2173
        %v2212 = vmul.f32 %v2208, %v2186
        %v2213 = vmul.f32 %v2209, %v2199
        %v2214 = vmul.f32 %v2210, %v2160
        %v2215 = vmul.f32 %v2211, %v2173
        %v2216 = vmul.f32 %v2212, %v2186
        %v2217 = vmul.f32 %v2213, %v2199
        %v2218 = vadd.f32 %v2160, %v2214
        %v2219 = vadd.f32 %v2173, %v2215
        %v2220 = vadd.f32 %v2186, %v2216
        %v2221 = vadd.f32 %v2199, %v2217
        %v2222 = vmul.f32 %v2218, 0.7978846
        %v2223 = vmul.f32 %v2219, 0.7978846
        %v2224 = vmul.f32 %v2220, 0.7978846
        %v2225 = vmul.f32 %v2221, 0.7978846
        %v2226 = vtanh.pop %v2222
        %v2227 = vtanh.pop %v2223
        %v2228 = vtanh.pop %v2224
        %v2229 = vtanh.pop %v2225
        %v2230 = vadd.f32 %v2226, 1.0
        %v2231 = vadd.f32 %v2227, 1.0
        %v2232 = vadd.f32 %v2228, 1.0
        %v2233 = vadd.f32 %v2229, 1.0
        %v2234 = vmul.f32 %v2202, %v2230
        %v2235 = vmul.f32 %v2203, %v2231
        %v2236 = vmul.f32 %v2204, %v2232
        %v2237 = vmul.f32 %v2205, %v2233
        %v2238 = vpack.c.bf16 %v2234, %v2234
        %v2239 = vpack.c.bf16 %v2235, %v2235
        %v2240 = vpack.c.bf16 %v2236, %v2236
        %v2241 = vpack.c.bf16 %v2237, %v2237
        %v2243 = vperm.slane %v815, 0
        %v2309 = vunpack.c.l.b16 %v751
        %v2310 = vunpack.c.l.b16 %v752
        %v2311 = vunpack.c.l.b16 %v753
        %v2312 = vunpack.c.l.b16 %v754
        %v2313 = vunpack.c.l.b16 %v755
        %v2314 = vunpack.c.l.b16 %v756
        %v2315 = vunpack.c.l.b16 %v757
        %v2316 = vunpack.c.l.b16 %v758
        %v2317 = vunpack.c.l.b16 %v759
        %v2318 = vunpack.c.l.b16 %v760
        %v2319 = vunpack.c.l.b16 %v761
        %v2320 = vunpack.c.l.b16 %v762
        %v2321 = vunpack.c.l.b16 %v763
        %v2322 = vunpack.c.l.b16 %v764
        %v2323 = vunpack.c.l.b16 %v765
        %v2324 = vunpack.c.l.b16 %v766
        %v2325 = vunpack.c.l.b16 %v767
        %v2326 = vunpack.c.l.b16 %v768
        %v2327 = vunpack.c.l.b16 %v769
        %v2328 = vunpack.c.l.b16 %v770
        %v2329 = vunpack.c.l.b16 %v771
        %v2330 = vunpack.c.l.b16 %v772
        %v2331 = vunpack.c.l.b16 %v773
        %v2332 = vunpack.c.l.b16 %v774
        %v2333 = vunpack.c.l.b16 %v775
        %v2334 = vunpack.c.l.b16 %v776
        %v2335 = vunpack.c.l.b16 %v777
        %v2336 = vunpack.c.l.b16 %v778
        %v2337 = vunpack.c.l.b16 %v779
        %v2338 = vunpack.c.l.b16 %v780
        %v2339 = vunpack.c.l.b16 %v781
        %v2340 = vunpack.c.l.b16 %v782
        %v2341 = vunpack.c.l.b16 %v783
        %v2342 = vunpack.c.l.b16 %v784
        %v2343 = vunpack.c.l.b16 %v785
        %v2344 = vunpack.c.l.b16 %v786
        %v2345 = vunpack.c.l.b16 %v787
        %v2346 = vunpack.c.l.b16 %v788
        %v2347 = vunpack.c.l.b16 %v789
        %v2348 = vunpack.c.l.b16 %v790
        %v2349 = vunpack.c.l.b16 %v791
        %v2350 = vunpack.c.l.b16 %v792
        %v2351 = vunpack.c.l.b16 %v793
        %v2352 = vunpack.c.l.b16 %v794
        %v2353 = vunpack.c.l.b16 %v795
        %v2354 = vunpack.c.l.b16 %v796
        %v2355 = vunpack.c.l.b16 %v797
        %v2356 = vunpack.c.l.b16 %v798
        %v2357 = vunpack.c.l.b16 %v799
        %v2358 = vunpack.c.l.b16 %v800
        %v2359 = vunpack.c.l.b16 %v801
        %v2360 = vunpack.c.l.b16 %v802
        %v2361 = vunpack.c.l.b16 %v803
        %v2362 = vunpack.c.l.b16 %v804
        %v2363 = vunpack.c.l.b16 %v805
        %v2364 = vunpack.c.l.b16 %v806
        %v2365 = vunpack.c.l.b16 %v807
        %v2366 = vunpack.c.l.b16 %v808
        %v2367 = vunpack.c.l.b16 %v809
        %v2368 = vunpack.c.l.b16 %v810
        %v2369 = vunpack.c.l.b16 %v811
        %v2370 = vunpack.c.l.b16 %v812
        %v2371 = vunpack.c.l.b16 %v813
        %v2372 = vunpack.c.l.b16 %v814
        %v2373 = vpack.c.b16 %v2310, %v2309
        %v2374 = vpack.c.b16 %v2312, %v2311
        %v2375 = vpack.c.b16 %v2314, %v2313
        %v2376 = vpack.c.b16 %v2316, %v2315
        %v2377 = vpack.c.b16 %v2318, %v2317
        %v2378 = vpack.c.b16 %v2320, %v2319
        %v2379 = vpack.c.b16 %v2322, %v2321
        %v2380 = vpack.c.b16 %v2324, %v2323
        %v2381 = vpack.c.b16 %v2326, %v2325
        %v2382 = vpack.c.b16 %v2328, %v2327
        %v2383 = vpack.c.b16 %v2330, %v2329
        %v2384 = vpack.c.b16 %v2332, %v2331
        %v2385 = vpack.c.b16 %v2334, %v2333
        %v2386 = vpack.c.b16 %v2336, %v2335
        %v2387 = vpack.c.b16 %v2338, %v2337
        %v2388 = vpack.c.b16 %v2340, %v2339
        %v2389 = vpack.c.b16 %v2342, %v2341
        %v2390 = vpack.c.b16 %v2344, %v2343
        %v2391 = vpack.c.b16 %v2346, %v2345
        %v2392 = vpack.c.b16 %v2348, %v2347
        %v2393 = vpack.c.b16 %v2350, %v2349
        %v2394 = vpack.c.b16 %v2352, %v2351
        %v2395 = vpack.c.b16 %v2354, %v2353
        %v2396 = vpack.c.b16 %v2356, %v2355
        %v2397 = vpack.c.b16 %v2358, %v2357
        %v2398 = vpack.c.b16 %v2360, %v2359
        %v2399 = vpack.c.b16 %v2362, %v2361
        %v2400 = vpack.c.b16 %v2364, %v2363
        %v2401 = vpack.c.b16 %v2366, %v2365
        %v2402 = vpack.c.b16 %v2368, %v2367
        %v2403 = vpack.c.b16 %v2370, %v2369
        %v2404 = vpack.c.b16 %v2372, %v2371
        %2437 = vmatpush.bf16.msra.mxu0 %v2380
        %2438 = vmatpush.bf16.msra.mxu0 %v2379
        %2439 = vmatpush.bf16.msra.mxu0 %v2378
        %2440 = vmatpush.bf16.msra.mxu0 %v2377
        %2441 = vmatpush.bf16.msra.mxu0 %v2376
        %2442 = vmatpush.bf16.msra.mxu0 %v2375
        %2443 = vmatpush.bf16.msra.mxu0 %v2374
        %2444 = vmatpush.bf16.msra.mxu0 %v2373
        %2445 = vmatmul.bf16.gmra.mxu0 %v2238
        %v2446 = vpop.f32.mrf.mxu0
        %v2447 = vadd.f32 %v2243, %v2446
        %v2448 = vpop.f32.mrf.mxu0
        %2449 = vdwg.mxu0
        %2450 = vmatpush.bf16.msra.mxu0 %v2388
        %2451 = vmatpush.bf16.msra.mxu0 %v2387
        %2452 = vmatpush.bf16.msra.mxu0 %v2386
        %2453 = vmatpush.bf16.msra.mxu0 %v2385
        %2454 = vmatpush.bf16.msra.mxu0 %v2384
        %2455 = vmatpush.bf16.msra.mxu0 %v2383
        %2456 = vmatpush.bf16.msra.mxu0 %v2382
        %2457 = vmatpush.bf16.msra.mxu0 %v2381
        %2458 = vmatmul.bf16.gmra.mxu0 %v2239
        %v2459 = vpop.f32.mrf.mxu0
        %v2460 = vadd.f32 %v2447, %v2459
        %v2461 = vpop.f32.mrf.mxu0
        %2462 = vdwg.mxu0
        %2463 = vmatpush.bf16.msra.mxu0 %v2396
        %2464 = vmatpush.bf16.msra.mxu0 %v2395
        %2465 = vmatpush.bf16.msra.mxu0 %v2394
        %2466 = vmatpush.bf16.msra.mxu0 %v2393
        %2467 = vmatpush.bf16.msra.mxu0 %v2392
        %2468 = vmatpush.bf16.msra.mxu0 %v2391
        %2469 = vmatpush.bf16.msra.mxu0 %v2390
        %2470 = vmatpush.bf16.msra.mxu0 %v2389
        %2471 = vmatmul.bf16.gmra.mxu0 %v2240
        %v2472 = vpop.f32.mrf.mxu0
        %v2473 = vadd.f32 %v2460, %v2472
        %v2474 = vpop.f32.mrf.mxu0
        %2475 = vdwg.mxu0
        %2476 = vmatpush.bf16.msra.mxu0 %v2404
        %2477 = vmatpush.bf16.msra.mxu0 %v2403
        %2478 = vmatpush.bf16.msra.mxu0 %v2402
        %2479 = vmatpush.bf16.msra.mxu0 %v2401
        %2480 = vmatpush.bf16.msra.mxu0 %v2400
        %2481 = vmatpush.bf16.msra.mxu0 %v2399
        %2482 = vmatpush.bf16.msra.mxu0 %v2398
        %2483 = vmatpush.bf16.msra.mxu0 %v2397
        %2484 = vmatmul.bf16.gmra.mxu0 %v2241
        %v2485 = vpop.f32.mrf.mxu0
        %v2486 = vadd.f32 %v2473, %v2485
        %v2487 = vpop.f32.mrf.mxu0
        %2488 = vdwg.mxu0
        %v2489 = vadd.f32 %v1932, %v2486
        %2490 = vst [vmem:[%s612] sm:$0xff] %v2489
        %s2491 = sand.u32 %s343, 1
        %s2492 = scalar_lea.sflag [#allocation4], %s2491
        %s2493 = sand.u32 %s343, 1
        %s2494 = smul.addr %s2493, 8
        %s2495 = scalar_lea.vmem [#allocation16], %s2494
        // Predicated region
        $region105: #{tpu_custom_call.1} parent=71 // pred_check
          %p2496 = pneg %p353
        $region106: #{tpu_custom_call.1} parent=71 // pred_check_branch
          %2498 = sbr.rel (%p2496) target = $region108
        $region107: #{tpu_custom_call.1} parent=71 // pred_region
          %2500 = vsyncadd %s2492, 0
          %s2501 = smul.addr %s40, 2
          %s2502 = sadd.s32 %s41, %s2501
          %s2503 = smul.addr %s2502, 8
          %s2504 = scalar_lea.hbm %s13, %s2503
          %s2506 = sshll.u32 %s2495, 4
          %s2507 = int_to_ptr.vmem [resolvable:$true] %s2506
          %s2508 = sshll.u32 %s2504, 4
          %s2509 = int_to_ptr.hbm [resolvable:$true] %s2508
          %2511 = dma.vmem_to_hbm [thread:$0]  %s2507, 128, %s2509, %s2492
        $region108: #{tpu_custom_call.1} parent=71 // pred_fallthru
          _
      $region72: #{tpu_custom_call.1} parent=5 // pred_fallthru
        _
      %p2512 = scmp.le.s32.totalorder 2, %s31
      // Predicated region
      $region109: #{tpu_custom_call.1} parent=5 // pred_check
        %p2513 = pneg %p2512
      $region110: #{tpu_custom_call.1} parent=5 // pred_check_branch
        %2515 = sbr.rel (%p2513) target = $region112
      $region111: #{tpu_custom_call.1} parent=5 // pred_region
        %s2516 = ssub.s32 %s31, 2
        // Predicated region
        $region113: #{tpu_custom_call.1} parent=111 // pred_check
          %p2517 = pneg %p359
        $region114: #{tpu_custom_call.1} parent=111 // pred_check_branch
          %2519 = sbr.rel (%p2517) target = $region116
        $region115: #{tpu_custom_call.1} parent=111 // pred_region
          %s2520 = sand.u32 %s344, 1
          %s2521 = scalar_lea.sflag [#allocation4], %s2520
          %s2522 = sand.u32 %s344, 1
          %s2523 = smul.addr %s2522, 8
          %s2524 = scalar_lea.vmem [#allocation16], %s2523
          %2526 = dma.done %s2521, 128
        $region116: #{tpu_custom_call.1} parent=111 // pred_fallthru
          _
      $region112: #{tpu_custom_call.1} parent=5 // pred_fallthru
        _
    $region6: #{tpu_custom_call.1} parent=1 // loop_footer
      %s35 = sadd.s32 1, %s31
    $region7: #{tpu_custom_call.1} parent=1 // loop_footer_branch
      %30 = sbr.rel target = $region3
    $region8: #{tpu_custom_call.1} parent=1 // loop_exit
      _
    %2527 = vsyncpa [#allocation3], 1
    %s2528 = scalar_lea.sflag [#allocation3], 1
    %2529 = vsyncpa %s2528, 1
    %2530 = vsyncpa [#allocation6], 1
    %s2531 = scalar_lea.sflag [#allocation6], 1
    %2532 = vsyncpa %s2531, 1
    %2533 = vsyncpa [#allocation9], 1
    %2534 = vsyncpa [#allocation12], 1
    %2535 = vsyncpa [#allocation15], 1
    %2536 = vsyncpa [#allocation4], 1
    %s2537 = scalar_lea.sflag [#allocation4], 1
    %2538 = vsyncpa %s2537, 1

</llo_original>
